<compile_context>
chip_gen: v6e
topology: v6e:2x2x1
jax: 0.10.0
libtpu: 0.0.40
codegen_flags: <defaults>
</compile_context>

<pallas_src>
import math
import functools

import jax
import jax.numpy as jnp
from jax.experimental import pallas as pl
from jax.experimental.pallas import tpu as pltpu


# ----------------------------------------------------------------------------
# tiling helper: largest tile <= pref that divides `dim` and respects the TPU
# (sublane=8 / lane=128) alignment; falls back to the full dimension.
# ----------------------------------------------------------------------------
def _pick_tile(dim, pref, align):
    if dim <= pref:
        return dim
    t = (pref // align) * align
    while t >= align:
        if dim % t == 0:
            return t
        t -= align
    return dim


# ----------------------------------------------------------------------------
# tiled linear:  out = x @ W + b
#   x bf16 (M, K), W bf16 (K, N), b f32 (N,)  ->  out bf16 (default) or f32
# ----------------------------------------------------------------------------
def _linear_kernel_bf16(x_ref, w_ref, b_ref, o_ref, acc_ref):
    @pl.when(pl.program_id(2) == 0)
    def _():
        acc_ref[...] = jnp.zeros_like(acc_ref)

    acc_ref[...] += jnp.dot(x_ref[...], w_ref[...],
                            preferred_element_type=jnp.float32)

    @pl.when(pl.program_id(2) == pl.num_programs(2) - 1)
    def _():
        o_ref[...] = (acc_ref[...] + b_ref[...]).astype(o_ref.dtype)


def _linear_kernel_f32(x_ref, w_ref, b_ref, o_ref):
    # f32 output: accumulate directly into the resident output block (no scratch).
    @pl.when(pl.program_id(2) == 0)
    def _():
        o_ref[...] = jnp.zeros_like(o_ref)

    o_ref[...] += jnp.dot(x_ref[...], w_ref[...],
                          preferred_element_type=jnp.float32)

    @pl.when(pl.program_id(2) == pl.num_programs(2) - 1)
    def _():
        o_ref[...] = o_ref[...] + b_ref[...]


def linear(x2d, w, b, *, out_dtype=jnp.bfloat16, tm=256, tn=256, tk=512):
    """x2d: (M, K) bf16, w: (K, N) bf16, b: (N,) f32 -> (M, N) out_dtype."""
    M, K = x2d.shape
    N = w.shape[1]
    tm = _pick_tile(M, tm, 8)
    tn = _pick_tile(N, tn, 128)
    tk = _pick_tile(K, tk, 128)
    grid = (M // tm, N // tn, K // tk)
    if out_dtype == jnp.float32:
        kernel, scratch = _linear_kernel_f32, []
    else:
        kernel, scratch = _linear_kernel_bf16, [pltpu.VMEM((tm, tn), jnp.float32)]
    return pl.pallas_call(
        kernel,
        grid=grid,
        in_specs=[
            pl.BlockSpec((tm, tk), lambda i, j, k: (i, k)),
            pl.BlockSpec((tk, tn), lambda i, j, k: (k, j)),
            pl.BlockSpec((1, tn), lambda i, j, k: (0, j)),
        ],
        out_specs=pl.BlockSpec((tm, tn), lambda i, j, k: (i, j)),
        out_shape=jax.ShapeDtypeStruct((M, N), out_dtype),
        scratch_shapes=scratch,
        compiler_params=pltpu.CompilerParams(
            dimension_semantics=("parallel", "parallel", "arbitrary")),
    )(x2d, w, b.reshape(1, N))


# ----------------------------------------------------------------------------
# fused FFN sublayer:  LN(relu(x @ W1 + b1) @ W2 + b2 + x)
# grid = (M tiles, F tiles); F axis is a reduction ("arbitrary") with an f32
# (tm, D) accumulator; residual-add + LayerNorm fused into the epilogue.
# ----------------------------------------------------------------------------
def _ffn_kernel(x_ref, w1_ref, b1_ref, w2_ref, b2_ref, g_ref, bln_ref,
                o_ref, acc_ref):
    f = pl.program_id(1)

    @pl.when(f == 0)
    def _():
        acc_ref[...] = jnp.zeros_like(acc_ref)

    h = jnp.dot(x_ref[...], w1_ref[...], preferred_element_type=jnp.float32)
    h = jnp.maximum(h + b1_ref[...], 0.0)
    acc_ref[...] += jnp.dot(h.astype(jnp.bfloat16), w2_ref[...],
                            preferred_element_type=jnp.float32)

    @pl.when(f == pl.num_programs(1) - 1)
    def _():
        y = acc_ref[...] + b2_ref[...] + x_ref[...].astype(jnp.float32)  # residual
        mu = jnp.mean(y, axis=-1, keepdims=True)
        var = jnp.mean((y - mu) ** 2, axis=-1, keepdims=True)
        y = (y - mu) * jax.lax.rsqrt(var + 1e-5)
        o_ref[...] = (y * g_ref[...] + bln_ref[...]).astype(o_ref.dtype)


def ffn_block(x, p, ln_g, ln_b, *, tm=256, tf=512):
    B, T, D = x.shape
    M = B * T
    F = p["w1"].shape[1]
    tm = _pick_tile(M, tm, 8)
    tf = _pick_tile(F, tf, 128)
    out = pl.pallas_call(
        _ffn_kernel,
        grid=(M // tm, F // tf),
        in_specs=[
            pl.BlockSpec((tm, D), lambda i, f: (i, 0)),
            pl.BlockSpec((D, tf), lambda i, f: (0, f)),
            pl.BlockSpec((1, tf), lambda i, f: (0, f)),
            pl.BlockSpec((tf, D), lambda i, f: (f, 0)),
            pl.BlockSpec((1, D), lambda i, f: (0, 0)),
            pl.BlockSpec((1, D), lambda i, f: (0, 0)),
            pl.BlockSpec((1, D), lambda i, f: (0, 0)),
        ],
        out_specs=pl.BlockSpec((tm, D), lambda i, f: (i, 0)),
        out_shape=jax.ShapeDtypeStruct((M, D), jnp.bfloat16),
        scratch_shapes=[pltpu.VMEM((tm, D), jnp.float32)],
        compiler_params=pltpu.CompilerParams(
            dimension_semantics=("parallel", "arbitrary")),
    )(x.reshape(M, D), p["w1"], p["b1"].reshape(1, F), p["w2"],
      p["b2"].reshape(1, D), ln_g.reshape(1, D), ln_b.reshape(1, D))
    return out.reshape(B, T, D)


# ----------------------------------------------------------------------------
# fused attention sublayer:  LN(softmax(qk^T/sqrt(dk) + mask) v @ Wo + bo + resid)
# grid = (B, H); per-head context staged in VMEM scratch; on the last head a
# single full-K (D) output-projection matmul + residual + LayerNorm epilogue.
# ----------------------------------------------------------------------------
def _attn_kernel(q_ref, k_ref, v_ref, bias_ref, resid_ref, wo_ref, bo_ref,
                 g_ref, bln_ref, o_ref, ctx_ref, *, scale, causal, nhead):
    h = pl.program_id(1)

    q = q_ref[0, 0]                                    # (Tq, dk) bf16
    k = k_ref[0, 0]                                    # (Tk, dk) bf16
    v = v_ref[0, 0]                                    # (Tk, dk) bf16

    s = jax.lax.dot_general(q, k, (((1,), (1,)), ((), ())),
                            preferred_element_type=jnp.float32)      # (Tq, Tk)
    s = s * scale + bias_ref[0]                        # additive key-padding bias
    if causal:
        rows = jax.lax.broadcasted_iota(jnp.int32, s.shape, 0)
        cols = jax.lax.broadcasted_iota(jnp.int32, s.shape, 1)
        s = jnp.where(cols <= rows, s, -1e9)
    s = s - jnp.max(s, axis=-1, keepdims=True)
    p = jnp.exp(s)
    p = p * pl.reciprocal(jnp.sum(p, axis=-1, keepdims=True), approx=True)
    ctx_ref[h] = jnp.dot(p.astype(jnp.bfloat16), v,
                         preferred_element_type=jnp.float32).astype(jnp.bfloat16)

    @pl.when(h == nhead - 1)
    def _():
        # Concatenate per-head contexts -> (Tq, D), one full-K output projection.
        ctx = jnp.concatenate([ctx_ref[i] for i in range(nhead)], axis=-1)
        y = jnp.dot(ctx, wo_ref[...], preferred_element_type=jnp.float32)
        y = y + bo_ref[...] + resid_ref[0].astype(jnp.float32)
        mu = jnp.mean(y, axis=-1, keepdims=True)
        var = jnp.mean((y - mu) ** 2, axis=-1, keepdims=True)
        y = (y - mu) * jax.lax.rsqrt(var + 1e-5)
        o_ref[0] = (y * g_ref[...] + bln_ref[...]).astype(o_ref.dtype)


def attention(q, k, v, kp_bias, resid, wo, bo, ln_g, ln_b, *, causal):
    """q: (B,H,Tq,dk) bf16, k/v: (B,H,Tk,dk) bf16, kp_bias: (B,1,Tk) f32,
    resid: (B,Tq,D) bf16, wo: (D,D) bf16 -> post-LN sublayer output (B,Tq,D) bf16."""
    B, H, Tq, dk = q.shape
    Tk = k.shape[2]
    D = H * dk
    kernel = functools.partial(_attn_kernel, scale=1.0 / math.sqrt(dk),
                               causal=causal, nhead=H)
    # TODO(synk): for long sequences switch to flash-style KV tiling (online
    # softmax over Tk tiles) so the (Tq, Tk) score tile stays VMEM-bounded.
    return pl.pallas_call(
        kernel,
        grid=(B, H),
        in_specs=[
            pl.BlockSpec((1, 1, Tq, dk), lambda b, h: (b, h, 0, 0)),
            pl.BlockSpec((1, 1, Tk, dk), lambda b, h: (b, h, 0, 0)),
            pl.BlockSpec((1, 1, Tk, dk), lambda b, h: (b, h, 0, 0)),
            pl.BlockSpec((1, 1, Tk), lambda b, h: (b, 0, 0)),
            pl.BlockSpec((1, Tq, D), lambda b, h: (b, 0, 0)),
            pl.BlockSpec((D, D), lambda b, h: (0, 0)),
            pl.BlockSpec((1, D), lambda b, h: (0, 0)),
            pl.BlockSpec((1, D), lambda b, h: (0, 0)),
            pl.BlockSpec((1, D), lambda b, h: (0, 0)),
        ],
        out_specs=pl.BlockSpec((1, Tq, D), lambda b, h: (b, 0, 0)),
        out_shape=jax.ShapeDtypeStruct((B, Tq, D), jnp.bfloat16),
        scratch_shapes=[pltpu.VMEM((H, Tq, dk), jnp.bfloat16)],
        compiler_params=pltpu.CompilerParams(
            dimension_semantics=("parallel", "arbitrary")),
    )(q, k, v, kp_bias, resid, wo, bo.reshape(1, D),
      ln_g.reshape(1, D), ln_b.reshape(1, D))


# ----------------------------------------------------------------------------
# model glue (plain JAX around the Pallas kernels)
# ----------------------------------------------------------------------------
def self_attn_block(x, kp_bias, p, ln_g, ln_b, nhead, *, causal):
    B, T, D = x.shape
    dk = D // nhead
    qkv = linear(x.reshape(B * T, D), p["wqkv"], p["bqkv"])        # fused QKV, bf16
    qkv = qkv.reshape(B, T, 3, nhead, dk)
    qkv = jnp.transpose(qkv, (2, 0, 3, 1, 4))                      # (3, B, H, T, dk)
    return attention(qkv[0], qkv[1], qkv[2], kp_bias, x,
                     p["wo"], p["bo"], ln_g, ln_b, causal=causal)


def cross_attn_block(y, enc_out, kp_bias, p, ln_g, ln_b, nhead):
    B, Tq, D = y.shape
    Tk = enc_out.shape[1]
    dk = D // nhead
    q = linear(y.reshape(B * Tq, D), p["wq"], p["bq"])
    q = jnp.transpose(q.reshape(B, Tq, nhead, dk), (0, 2, 1, 3))   # (B, H, Tq, dk)
    kv = linear(enc_out.reshape(B * Tk, D), p["wkv"], p["bkv"])    # fused KV
    kv = jnp.transpose(kv.reshape(B, Tk, 2, nhead, dk), (2, 0, 3, 1, 4))
    return attention(q, kv[0], kv[1], kp_bias, y,
                     p["wo"], p["bo"], ln_g, ln_b, causal=False)


def encoder_layer(x, src_bias, p, nhead):
    x = self_attn_block(x, src_bias, p["self_attn"], p["ln1_g"], p["ln1_b"],
                        nhead, causal=False)
    x = ffn_block(x, p["ffn"], p["ln2_g"], p["ln2_b"])
    return x


def decoder_layer(y, enc_out, src_bias, tgt_bias, p, nhead):
    y = self_attn_block(y, tgt_bias, p["self_attn"], p["ln1_g"], p["ln1_b"],
                        nhead, causal=True)
    y = cross_attn_block(y, enc_out, src_bias, p["cross_attn"],
                         p["ln2_g"], p["ln2_b"], nhead)
    y = ffn_block(y, p["ffn"], p["ln3_g"], p["ln3_b"])
    return y


def sinusoidal_pe(max_len, d_model):
    pos = jnp.arange(max_len, dtype=jnp.float32)[:, None]
    div = jnp.exp(jnp.arange(0, d_model, 2, dtype=jnp.float32)
                  * (-math.log(10000.0) / d_model))
    pe = jnp.zeros((max_len, d_model), jnp.float32)
    pe = pe.at[:, 0::2].set(jnp.sin(pos * div))
    pe = pe.at[:, 1::2].set(jnp.cos(pos * div))
    return pe


def transformer_forward(params, src, tgt, *, nhead, d_model):
    B, S = src.shape
    T = tgt.shape[1]
    scale = math.sqrt(d_model)

    # compact additive key-padding biases (0 keep / -1e9 mask); the causal part
    # of the decoder self-attention mask is built inside the attention kernel.
    src_bias = jnp.where(src != 0, 0.0, -1e9).astype(jnp.float32)[:, None, :]  # (B,1,S)
    tgt_bias = jnp.where(tgt != 0, 0.0, -1e9).astype(jnp.float32)[:, None, :]  # (B,1,T)

    pe = params["pe"]
    # TODO(synk): embedding gather + PE add stay in plain JAX (XLA gather);
    # dropout layers are identity here (inference / eval mode).
    x = (jnp.take(params["in_emb"], src, axis=0) * scale
         + pe[None, :S, :]).astype(jnp.bfloat16)
    y = (jnp.take(params["out_emb"], tgt, axis=0) * scale
         + pe[None, :T, :]).astype(jnp.bfloat16)

    for lp in params["encoder"]:
        x = encoder_layer(x, src_bias, lp, nhead)
    for lp in params["decoder"]:
        y = decoder_layer(y, x, src_bias, tgt_bias, lp, nhead)

    logits = linear(y.reshape(B * T, d_model), params["fc_w"], params["fc_b"],
                    out_dtype=jnp.float32)
    return logits.reshape(B, T, -1)


# ----------------------------------------------------------------------------
# deterministic parameter init (weights bf16 for the MXU; biases / LN f32)
# ----------------------------------------------------------------------------
def _init_linear(key, din, dout):
    kw, kb = jax.random.split(key)
    w = (jax.random.normal(kw, (din, dout), jnp.float32) * 0.02).astype(jnp.bfloat16)
    b = jax.random.normal(kb, (dout,), jnp.float32) * 0.02
    return w, b


def _init_self_attn(key, d_model, nhead):
    ks = jax.random.split(key, 4)
    wq, bq = _init_linear(ks[0], d_model, d_model)
    wk, bk = _init_linear(ks[1], d_model, d_model)
    wv, bv = _init_linear(ks[2], d_model, d_model)
    wo, bo = _init_linear(ks[3], d_model, d_model)
    return dict(
        wqkv=jnp.concatenate([wq, wk, wv], axis=1),     # (D, 3D) bf16
        bqkv=jnp.concatenate([bq, bk, bv], axis=0),     # (3D,)   f32
        wo=wo,                                          # (D, D)  bf16
        bo=bo,
    )


def _init_cross_attn(key, d_model, nhead):
    ks = jax.random.split(key, 4)
    wq, bq = _init_linear(ks[0], d_model, d_model)
    wk, bk = _init_linear(ks[1], d_model, d_model)
    wv, bv = _init_linear(ks[2], d_model, d_model)
    wo, bo = _init_linear(ks[3], d_model, d_model)
    return dict(
        wq=wq, bq=bq,
        wkv=jnp.concatenate([wk, wv], axis=1),          # (D, 2D) bf16
        bkv=jnp.concatenate([bk, bv], axis=0),          # (2D,)   f32
        wo=wo, bo=bo,
    )


def _init_ffn(key, d_model, d_ff):
    k1, k2 = jax.random.split(key)
    w1, b1 = _init_linear(k1, d_model, d_ff)
    w2, b2 = _init_linear(k2, d_ff, d_model)
    return dict(w1=w1, b1=b1, w2=w2, b2=b2)


def init_params(key, *, d_model, nhead, n_enc, n_dec, d_ff, vocab, max_len):
    keys = jax.random.split(key, 4 + n_enc + n_dec)
    in_emb = jax.random.normal(keys[0], (vocab, d_model), jnp.float32) * 0.02
    out_emb = jax.random.normal(keys[1], (vocab, d_model), jnp.float32) * 0.02
    out_emb = out_emb.at[0].set(0.0)                     # padding_idx=0
    fc_w, fc_b = _init_linear(keys[2], d_model, vocab)

    enc = []
    for i in range(n_enc):
        ka, kf = jax.random.split(keys[4 + i])
        enc.append(dict(
            self_attn=_init_self_attn(ka, d_model, nhead),
            ffn=_init_ffn(kf, d_model, d_ff),
            ln1_g=jnp.ones((d_model,), jnp.float32), ln1_b=jnp.zeros((d_model,), jnp.float32),
            ln2_g=jnp.ones((d_model,), jnp.float32), ln2_b=jnp.zeros((d_model,), jnp.float32),
        ))
    dec = []
    for i in range(n_dec):
        ka, kc, kf = jax.random.split(keys[4 + n_enc + i], 3)
        dec.append(dict(
            self_attn=_init_self_attn(ka, d_model, nhead),
            cross_attn=_init_cross_attn(kc, d_model, nhead),
            ffn=_init_ffn(kf, d_model, d_ff),
            ln1_g=jnp.ones((d_model,), jnp.float32), ln1_b=jnp.zeros((d_model,), jnp.float32),
            ln2_g=jnp.ones((d_model,), jnp.float32), ln2_b=jnp.zeros((d_model,), jnp.float32),
            ln3_g=jnp.ones((d_model,), jnp.float32), ln3_b=jnp.zeros((d_model,), jnp.float32),
        ))

    return dict(in_emb=in_emb, out_emb=out_emb, fc_w=fc_w, fc_b=fc_b,
                pe=sinusoidal_pe(max_len, d_model), encoder=enc, decoder=dec)


# ----------------------------------------------------------------------------
# main
# ----------------------------------------------------------------------------
if __name__ == "__main__":
    D_MODEL, NHEAD, N_ENC, N_DEC = 32, 4, 2, 2
    D_FF, VOCAB, MAX_LEN = 64, 128, 64
    B, SRC_LEN, TGT_LEN = 2, 8, 8

    key = jax.random.PRNGKey(0)
    kp, ks, kt = jax.random.split(key, 3)
    params = init_params(kp, d_model=D_MODEL, nhead=NHEAD, n_enc=N_ENC,
                         n_dec=N_DEC, d_ff=D_FF, vocab=VOCAB, max_len=MAX_LEN)

    src = jax.random.randint(ks, (B, SRC_LEN), 1, VOCAB, dtype=jnp.int32)
    tgt = jax.random.randint(kt, (B, TGT_LEN), 1, VOCAB, dtype=jnp.int32)
    # inject some padding (token id 0) to exercise the masks
    src = src.at[:, -2:].set(0)
    tgt = tgt.at[:, -1].set(0)

    fwd = jax.jit(functools.partial(transformer_forward, nhead=NHEAD, d_model=D_MODEL))
    out = fwd(params, src, tgt)
    out = jax.block_until_ready(out)

    assert out.shape == (B, TGT_LEN, VOCAB), out.shape
    assert jnp.all(jnp.isfinite(out))
    print("KERNEL_OK")
</pallas_src>

<mosaic_0001>
module attributes {stable_mosaic.version = 11 : i64} {
  func.func @_linear_kernel_bf16(%arg0: i32, %arg1: i32, %arg2: i32, %arg3: memref<16x32xbf16, #tpu.memory_space<vmem>>, %arg4: memref<32x96xbf16, #tpu.memory_space<vmem>>, %arg5: memref<1x96xf32, #tpu.memory_space<vmem>>, %arg6: memref<16x96xbf16, #tpu.memory_space<vmem>>, %arg7: memref<16x96xf32, #tpu.memory_space<vmem>>) attributes {dimension_semantics = [#tpu.dimension_semantics<parallel>, #tpu.dimension_semantics<parallel>, #tpu.dimension_semantics<arbitrary>], iteration_bounds = array<i64: 1, 1, 1>, scalar_prefetch = 0 : i64, scratch_operands = 1 : i64, tpu.core_type = #tpu.core_type<tc>, window_params = [{transform_indices = @transform_0, window_bounds = array<i64: 16, 32>}, {transform_indices = @transform_1, window_bounds = array<i64: 32, 96>}, {transform_indices = @transform_2, window_bounds = array<i64: 1, 96>}, {transform_indices = @transform_3, window_bounds = array<i64: 16, 96>}]} {
    %c0_i32 = arith.constant 0 : i32
    %0 = arith.cmpi eq, %arg2, %c0_i32 : i32
    %1 = arith.extui %0 : i1 to i32
    %c0_i32_0 = arith.constant 0 : i32
    %2 = arith.cmpi ne, %1, %c0_i32_0 : i32
    scf.if %2 {
      %cst_10 = arith.constant 0.000000e+00 : f32
      %12 = vector.broadcast %cst_10 : f32 to vector<16x96xf32>
      %c0_11 = arith.constant 0 : index
      %c0_12 = arith.constant 0 : index
      %13 = vector.load %arg7[%c0_11, %c0_12] : memref<16x96xf32, #tpu.memory_space<vmem>>, vector<16x96xf32>
      tpu.vector_store %arg7[%c0_11, %c0_12], %12 {strides = array<i32>} : memref<16x96xf32, #tpu.memory_space<vmem>>, vector<16x96xf32>,
    } else {
    }
    %c0 = arith.constant 0 : index
    %c0_1 = arith.constant 0 : index
    %3 = vector.load %arg7[%c0, %c0_1] : memref<16x96xf32, #tpu.memory_space<vmem>>, vector<16x96xf32>
    %c0_2 = arith.constant 0 : index
    %c0_3 = arith.constant 0 : index
    %4 = vector.load %arg3[%c0_2, %c0_3] : memref<16x32xbf16, #tpu.memory_space<vmem>>, vector<16x32xbf16>
    %c0_4 = arith.constant 0 : index
    %c0_5 = arith.constant 0 : index
    %5 = vector.load %arg4[%c0_4, %c0_5] : memref<32x96xbf16, #tpu.memory_space<vmem>>, vector<32x96xbf16>
    %cst = arith.constant dense<0.000000e+00> : vector<16x96xf32>
    %6 = tpu.matmul %4, %5, %cst {dimension_numbers = #tpu.dot_dimension_numbers<[1], [0], [0], [1], [0, 0, 1, 1], [], []>} : vector<16x32xbf16>, vector<32x96xbf16>, vector<16x96xf32> -> vector<16x96xf32>
    %7 = arith.addf %3, %6 : vector<16x96xf32>
    %c0_6 = arith.constant 0 : index
    %c0_7 = arith.constant 0 : index
    %8 = vector.load %arg7[%c0_6, %c0_7] : memref<16x96xf32, #tpu.memory_space<vmem>>, vector<16x96xf32>
    tpu.vector_store %arg7[%c0_6, %c0_7], %7 {strides = array<i32>} : memref<16x96xf32, #tpu.memory_space<vmem>>, vector<16x96xf32>,
    %c0_i32_8 = arith.constant 0 : i32
    %9 = arith.cmpi eq, %arg2, %c0_i32_8 : i32
    %10 = arith.extui %9 : i1 to i32
    %c0_i32_9 = arith.constant 0 : i32
    %11 = arith.cmpi ne, %10, %c0_i32_9 : i32
    scf.if %11 {
      %c0_10 = arith.constant 0 : index
      %c0_11 = arith.constant 0 : index
      %12 = vector.load %arg7[%c0_10, %c0_11] : memref<16x96xf32, #tpu.memory_space<vmem>>, vector<16x96xf32>
      %c0_12 = arith.constant 0 : index
      %c0_13 = arith.constant 0 : index
      %13 = vector.load %arg5[%c0_12, %c0_13] : memref<1x96xf32, #tpu.memory_space<vmem>>, vector<1x96xf32>
      %14 = vector.broadcast %13 : vector<1x96xf32> to vector<16x96xf32>
      %15 = arith.addf %12, %14 : vector<16x96xf32>
      %16 = arith.truncf %15 : vector<16x96xf32> to vector<16x96xbf16>
      %c0_14 = arith.constant 0 : index
      %c0_15 = arith.constant 0 : index
      %17 = vector.load %arg6[%c0_14, %c0_15] : memref<16x96xbf16, #tpu.memory_space<vmem>>, vector<16x96xbf16>
      tpu.vector_store %arg6[%c0_14, %c0_15], %16 {strides = array<i32>} : memref<16x96xbf16, #tpu.memory_space<vmem>>, vector<16x96xbf16>,
    } else {
    }
    return
  }
  func.func @transform_0(%arg0: i32, %arg1: i32, %arg2: i32) -> (i32, i32) {
    %c0_i32 = arith.constant 0 : i32
    return %arg0, %arg2 : i32, i32
  }
  func.func @transform_1(%arg0: i32, %arg1: i32, %arg2: i32) -> (i32, i32) {
    %c0_i32 = arith.constant 0 : i32
    return %arg2, %arg1 : i32, i32
  }
  func.func @transform_2(%arg0: i32, %arg1: i32, %arg2: i32) -> (i32, i32) {
    %c0_i32 = arith.constant 0 : i32
    %c0_i32_0 = arith.constant 0 : i32
    return %c0_i32, %arg1 : i32, i32
  }
  func.func @transform_3(%arg0: i32, %arg1: i32, %arg2: i32) -> (i32, i32) {
    %c0_i32 = arith.constant 0 : i32
    return %arg0, %arg1 : i32, i32
  }
}

module attributes {stable_mosaic.version = 11 : i64} {
  func.func @_linear_kernel_bf16(%arg0: i32, %arg1: i32, %arg2: i32, %arg3: memref<16x32xbf16, #tpu.memory_space<vmem>>, %arg4: memref<32x32xbf16, #tpu.memory_space<vmem>>, %arg5: memref<1x32xf32, #tpu.memory_space<vmem>>, %arg6: memref<16x32xbf16, #tpu.memory_space<vmem>>, %arg7: memref<16x32xf32, #tpu.memory_space<vmem>>) attributes {dimension_semantics = [#tpu.dimension_semantics<parallel>, #tpu.dimension_semantics<parallel>, #tpu.dimension_semantics<arbitrary>], iteration_bounds = array<i64: 1, 1, 1>, scalar_prefetch = 0 : i64, scratch_operands = 1 : i64, tpu.core_type = #tpu.core_type<tc>, window_params = [{transform_indices = @transform_0, window_bounds = array<i64: 16, 32>}, {transform_indices = @transform_1, window_bounds = array<i64: 32, 32>}, {transform_indices = @transform_2, window_bounds = array<i64: 1, 32>}, {transform_indices = @transform_3, window_bounds = array<i64: 16, 32>}]} {
    %c0_i32 = arith.constant 0 : i32
    %0 = arith.cmpi eq, %arg2, %c0_i32 : i32
    %1 = arith.extui %0 : i1 to i32
    %c0_i32_0 = arith.constant 0 : i32
    %2 = arith.cmpi ne, %1, %c0_i32_0 : i32
    scf.if %2 {
      %cst_10 = arith.constant 0.000000e+00 : f32
      %12 = vector.broadcast %cst_10 : f32 to vector<16x32xf32>
      %c0_11 = arith.constant 0 : index
      %c0_12 = arith.constant 0 : index
      %13 = vector.load %arg7[%c0_11, %c0_12] : memref<16x32xf32, #tpu.memory_space<vmem>>, vector<16x32xf32>
      tpu.vector_store %arg7[%c0_11, %c0_12], %12 {strides = array<i32>} : memref<16x32xf32, #tpu.memory_space<vmem>>, vector<16x32xf32>,
    } else {
    }
    %c0 = arith.constant 0 : index
    %c0_1 = arith.constant 0 : index
    %3 = vector.load %arg7[%c0, %c0_1] : memref<16x32xf32, #tpu.memory_space<vmem>>, vector<16x32xf32>
    %c0_2 = arith.constant 0 : index
    %c0_3 = arith.constant 0 : index
    %4 = vector.load %arg3[%c0_2, %c0_3] : memref<16x32xbf16, #tpu.memory_space<vmem>>, vector<16x32xbf16>
    %c0_4 = arith.constant 0 : index
    %c0_5 = arith.constant 0 : index
    %5 = vector.load %arg4[%c0_4, %c0_5] : memref<32x32xbf16, #tpu.memory_space<vmem>>, vector<32x32xbf16>
    %cst = arith.constant dense<0.000000e+00> : vector<16x32xf32>
    %6 = tpu.matmul %4, %5, %cst {dimension_numbers = #tpu.dot_dimension_numbers<[1], [0], [0], [1], [0, 0, 1, 1], [], []>} : vector<16x32xbf16>, vector<32x32xbf16>, vector<16x32xf32> -> vector<16x32xf32>
    %7 = arith.addf %3, %6 : vector<16x32xf32>
    %c0_6 = arith.constant 0 : index
    %c0_7 = arith.constant 0 : index
    %8 = vector.load %arg7[%c0_6, %c0_7] : memref<16x32xf32, #tpu.memory_space<vmem>>, vector<16x32xf32>
    tpu.vector_store %arg7[%c0_6, %c0_7], %7 {strides = array<i32>} : memref<16x32xf32, #tpu.memory_space<vmem>>, vector<16x32xf32>,
    %c0_i32_8 = arith.constant 0 : i32
    %9 = arith.cmpi eq, %arg2, %c0_i32_8 : i32
    %10 = arith.extui %9 : i1 to i32
    %c0_i32_9 = arith.constant 0 : i32
    %11 = arith.cmpi ne, %10, %c0_i32_9 : i32
    scf.if %11 {
      %c0_10 = arith.constant 0 : index
      %c0_11 = arith.constant 0 : index
      %12 = vector.load %arg7[%c0_10, %c0_11] : memref<16x32xf32, #tpu.memory_space<vmem>>, vector<16x32xf32>
      %c0_12 = arith.constant 0 : index
      %c0_13 = arith.constant 0 : index
      %13 = vector.load %arg5[%c0_12, %c0_13] : memref<1x32xf32, #tpu.memory_space<vmem>>, vector<1x32xf32>
      %14 = vector.broadcast %13 : vector<1x32xf32> to vector<16x32xf32>
      %15 = arith.addf %12, %14 : vector<16x32xf32>
      %16 = arith.truncf %15 : vector<16x32xf32> to vector<16x32xbf16>
      %c0_14 = arith.constant 0 : index
      %c0_15 = arith.constant 0 : index
      %17 = vector.load %arg6[%c0_14, %c0_15] : memref<16x32xbf16, #tpu.memory_space<vmem>>, vector<16x32xbf16>
      tpu.vector_store %arg6[%c0_14, %c0_15], %16 {strides = array<i32>} : memref<16x32xbf16, #tpu.memory_space<vmem>>, vector<16x32xbf16>,
    } else {
    }
    return
  }
  func.func @transform_0(%arg0: i32, %arg1: i32, %arg2: i32) -> (i32, i32) {
    %c0_i32 = arith.constant 0 : i32
    return %arg0, %arg2 : i32, i32
  }
  func.func @transform_1(%arg0: i32, %arg1: i32, %arg2: i32) -> (i32, i32) {
    %c0_i32 = arith.constant 0 : i32
    return %arg2, %arg1 : i32, i32
  }
  func.func @transform_2(%arg0: i32, %arg1: i32, %arg2: i32) -> (i32, i32) {
    %c0_i32 = arith.constant 0 : i32
    %c0_i32_0 = arith.constant 0 : i32
    return %c0_i32, %arg1 : i32, i32
  }
  func.func @transform_3(%arg0: i32, %arg1: i32, %arg2: i32) -> (i32, i32) {
    %c0_i32 = arith.constant 0 : i32
    return %arg0, %arg1 : i32, i32
  }
}

module attributes {stable_mosaic.version = 11 : i64} {
  func.func @_attn_kernel(%arg0: i32, %arg1: i32, %arg2: memref<1x1x8x8xbf16, #tpu.memory_space<vmem>>, %arg3: memref<1x1x8x8xbf16, #tpu.memory_space<vmem>>, %arg4: memref<1x1x8x8xbf16, #tpu.memory_space<vmem>>, %arg5: memref<1x1x8xf32, #tpu.memory_space<vmem>>, %arg6: memref<1x8x32xbf16, #tpu.memory_space<vmem>>, %arg7: memref<32x32xbf16, #tpu.memory_space<vmem>>, %arg8: memref<1x32xf32, #tpu.memory_space<vmem>>, %arg9: memref<1x32xf32, #tpu.memory_space<vmem>>, %arg10: memref<1x32xf32, #tpu.memory_space<vmem>>, %arg11: memref<1x8x32xbf16, #tpu.memory_space<vmem>>, %arg12: memref<4x8x8xbf16, #tpu.memory_space<vmem>>) attributes {dimension_semantics = [#tpu.dimension_semantics<parallel>, #tpu.dimension_semantics<arbitrary>], iteration_bounds = array<i64: 2, 4>, scalar_prefetch = 0 : i64, scratch_operands = 1 : i64, tpu.core_type = #tpu.core_type<tc>, window_params = [{transform_indices = @transform_0, window_bounds = array<i64: 1, 1, 8, 8>}, {transform_indices = @transform_1, window_bounds = array<i64: 1, 1, 8, 8>}, {transform_indices = @transform_2, window_bounds = array<i64: 1, 1, 8, 8>}, {transform_indices = @transform_3, window_bounds = array<i64: 1, 1, 8>}, {transform_indices = @transform_4, window_bounds = array<i64: 1, 8, 32>}, {pipeline_mode = #tpu.pipeline_mode<synchronous>, transform_indices = @transform_5, window_bounds = array<i64: 32, 32>}, {pipeline_mode = #tpu.pipeline_mode<synchronous>, transform_indices = @transform_6, window_bounds = array<i64: 1, 32>}, {pipeline_mode = #tpu.pipeline_mode<synchronous>, transform_indices = @transform_7, window_bounds = array<i64: 1, 32>}, {pipeline_mode = #tpu.pipeline_mode<synchronous>, transform_indices = @transform_8, window_bounds = array<i64: 1, 32>}, {transform_indices = @transform_9, window_bounds = array<i64: 1, 8, 32>}]} {
    %c0 = arith.constant 0 : index
    %c0_0 = arith.constant 0 : index
    %c0_1 = arith.constant 0 : index
    %c0_2 = arith.constant 0 : index
    %0 = vector.load %arg2[%c0, %c0_0, %c0_1, %c0_2] : memref<1x1x8x8xbf16, #tpu.memory_space<vmem>>, vector<1x1x8x8xbf16>
    %1 = vector.shape_cast %0 : vector<1x1x8x8xbf16> to vector<8x8xbf16>
    %c0_3 = arith.constant 0 : index
    %c0_4 = arith.constant 0 : index
    %c0_5 = arith.constant 0 : index
    %c0_6 = arith.constant 0 : index
    %2 = vector.load %arg3[%c0_3, %c0_4, %c0_5, %c0_6] : memref<1x1x8x8xbf16, #tpu.memory_space<vmem>>, vector<1x1x8x8xbf16>
    %3 = vector.shape_cast %2 : vector<1x1x8x8xbf16> to vector<8x8xbf16>
    %c0_7 = arith.constant 0 : index
    %c0_8 = arith.constant 0 : index
    %c0_9 = arith.constant 0 : index
    %c0_10 = arith.constant 0 : index
    %4 = vector.load %arg4[%c0_7, %c0_8, %c0_9, %c0_10] : memref<1x1x8x8xbf16, #tpu.memory_space<vmem>>, vector<1x1x8x8xbf16>
    %5 = vector.shape_cast %4 : vector<1x1x8x8xbf16> to vector<8x8xbf16>
    %cst = arith.constant dense<0.000000e+00> : vector<8x8xf32>
    %6 = tpu.matmul %1, %3, %cst {dimension_numbers = #tpu.dot_dimension_numbers<[1], [1], [0], [0], [0, 0, 1, 0], [], []>} : vector<8x8xbf16>, vector<8x8xbf16>, vector<8x8xf32> -> vector<8x8xf32>
    %cst_11 = arith.constant 0.353553385 : f32
    %7 = vector.broadcast %cst_11 : f32 to vector<8x8xf32>
    %8 = arith.mulf %6, %7 : vector<8x8xf32>
    %c0_12 = arith.constant 0 : index
    %c0_13 = arith.constant 0 : index
    %c0_14 = arith.constant 0 : index
    %9 = vector.load %arg5[%c0_12, %c0_13, %c0_14] : memref<1x1x8xf32, #tpu.memory_space<vmem>>, vector<1x1x8xf32>
    %10 = vector.shape_cast %9 : vector<1x1x8xf32> to vector<1x8xf32>
    %11 = vector.broadcast %10 : vector<1x8xf32> to vector<8x8xf32>
    %12 = arith.addf %8, %11 : vector<8x8xf32>
    %13 = tpu.iota {dimensions = array<i32: 0>} : vector<8x8xi32>
    %14 = tpu.iota {dimensions = array<i32: 1>} : vector<8x8xi32>
    %15 = arith.cmpi sle, %14, %13 : vector<8x8xi32>
    %cst_15 = arith.constant -1.000000e+09 : f32
    %16 = vector.broadcast %cst_15 : f32 to vector<8x8xf32>
    %17 = arith.select %15, %12, %16 : vector<8x8xi1>, vector<8x8xf32>
    %cst_16 = arith.constant dense<0xFF800000> : vector<8xf32>
    %18 = vector.multi_reduction <maximumf>, %17, %cst_16 [1] : vector<8x8xf32> to vector<8xf32>
    %19 = vector.shape_cast %18 : vector<8xf32> to vector<8x1xf32>
    %20 = vector.broadcast %19 : vector<8x1xf32> to vector<8x8xf32>
    %21 = arith.subf %17, %20 : vector<8x8xf32>
    %22 = math.exp %21 : vector<8x8xf32>
    %cst_17 = arith.constant dense<0.000000e+00> : vector<8xf32>
    %23 = vector.multi_reduction <add>, %22, %cst_17 [1] : vector<8x8xf32> to vector<8xf32>
    %24 = vector.shape_cast %23 : vector<8xf32> to vector<8x1xf32>
    %25 = tpu.reciprocal %24 {approx = true} : vector<8x1xf32> -> vector<8x1xf32>
    %26 = vector.broadcast %25 : vector<8x1xf32> to vector<8x8xf32>
    %27 = arith.mulf %22, %26 : vector<8x8xf32>
    %28 = arith.truncf %27 : vector<8x8xf32> to vector<8x8xbf16>
    %cst_18 = arith.constant dense<0.000000e+00> : vector<8x8xf32>
    %29 = tpu.matmul %28, %5, %cst_18 {dimension_numbers = #tpu.dot_dimension_numbers<[1], [0], [0], [1], [0, 0, 1, 1], [], []>} : vector<8x8xbf16>, vector<8x8xbf16>, vector<8x8xf32> -> vector<8x8xf32>
    %30 = arith.truncf %29 : vector<8x8xf32> to vector<8x8xbf16>
    %31 = arith.index_cast %arg1 : i32 to index
    %c0_19 = arith.constant 0 : index
    %c0_20 = arith.constant 0 : index
    %32 = vector.load %arg12[%31, %c0_19, %c0_20] : memref<4x8x8xbf16, #tpu.memory_space<vmem>>, vector<1x8x8xbf16>
    %33 = vector.shape_cast %32 : vector<1x8x8xbf16> to vector<8x8xbf16>
    %34 = vector.shape_cast %30 : vector<8x8xbf16> to vector<1x8x8xbf16>
    tpu.vector_store %arg12[%31, %c0_19, %c0_20], %34 {strides = array<i32>} : memref<4x8x8xbf16, #tpu.memory_space<vmem>>, vector<1x8x8xbf16>,
    %c3_i32 = arith.constant 3 : i32
    %35 = arith.cmpi eq, %arg1, %c3_i32 : i32
    %36 = arith.extui %35 : i1 to i32
    %c0_i32 = arith.constant 0 : i32
    %37 = arith.cmpi ne, %36, %c0_i32 : i32
    scf.if %37 {
      %c0_21 = arith.constant 0 : index
      %c0_22 = arith.constant 0 : index
      %c0_23 = arith.constant 0 : index
      %38 = vector.load %arg12[%c0_21, %c0_22, %c0_23] : memref<4x8x8xbf16, #tpu.memory_space<vmem>>, vector<1x8x8xbf16>
      %39 = vector.shape_cast %38 : vector<1x8x8xbf16> to vector<8x8xbf16>
      %c1 = arith.constant 1 : index
      %c0_24 = arith.constant 0 : index
      %c0_25 = arith.constant 0 : index
      %40 = vector.load %arg12[%c1, %c0_24, %c0_25] : memref<4x8x8xbf16, #tpu.memory_space<vmem>>, vector<1x8x8xbf16>
      %41 = vector.shape_cast %40 : vector<1x8x8xbf16> to vector<8x8xbf16>
      %c2 = arith.constant 2 : index
      %c0_26 = arith.constant 0 : index
      %c0_27 = arith.constant 0 : index
      %42 = vector.load %arg12[%c2, %c0_26, %c0_27] : memref<4x8x8xbf16, #tpu.memory_space<vmem>>, vector<1x8x8xbf16>
      %43 = vector.shape_cast %42 : vector<1x8x8xbf16> to vector<8x8xbf16>
      %c3 = arith.constant 3 : index
      %c0_28 = arith.constant 0 : index
      %c0_29 = arith.constant 0 : index
      %44 = vector.load %arg12[%c3, %c0_28, %c0_29] : memref<4x8x8xbf16, #tpu.memory_space<vmem>>, vector<1x8x8xbf16>
      %45 = vector.shape_cast %44 : vector<1x8x8xbf16> to vector<8x8xbf16>
      %46 = tpu.concatenate %39, %41, %43, %45 in 1 : vector<8x8xbf16>, vector<8x8xbf16>, vector<8x8xbf16>, vector<8x8xbf16> -> vector<8x32xbf16>
      %c0_30 = arith.constant 0 : index
      %c0_31 = arith.constant 0 : index
      %47 = vector.load %arg7[%c0_30, %c0_31] : memref<32x32xbf16, #tpu.memory_space<vmem>>, vector<32x32xbf16>
      %cst_32 = arith.constant dense<0.000000e+00> : vector<8x32xf32>
      %48 = tpu.matmul %46, %47, %cst_32 {dimension_numbers = #tpu.dot_dimension_numbers<[1], [0], [0], [1], [0, 0, 1, 1], [], []>} : vector<8x32xbf16>, vector<32x32xbf16>, vector<8x32xf32> -> vector<8x32xf32>
      %c0_33 = arith.constant 0 : index
      %c0_34 = arith.constant 0 : index
      %49 = vector.load %arg8[%c0_33, %c0_34] : memref<1x32xf32, #tpu.memory_space<vmem>>, vector<1x32xf32>
      %50 = vector.broadcast %49 : vector<1x32xf32> to vector<8x32xf32>
      %51 = arith.addf %48, %50 : vector<8x32xf32>
      %c0_35 = arith.constant 0 : index
      %c0_36 = arith.constant 0 : index
      %c0_37 = arith.constant 0 : index
      %52 = vector.load %arg6[%c0_35, %c0_36, %c0_37] : memref<1x8x32xbf16, #tpu.memory_space<vmem>>, vector<1x8x32xbf16>
      %53 = vector.shape_cast %52 : vector<1x8x32xbf16> to vector<8x32xbf16>
      %54 = arith.extf %53 : vector<8x32xbf16> to vector<8x32xf32>
      %55 = arith.addf %51, %54 : vector<8x32xf32>
      %cst_38 = arith.constant dense<0.000000e+00> : vector<8xf32>
      %56 = vector.multi_reduction <add>, %55, %cst_38 [1] : vector<8x32xf32> to vector<8xf32>
      %57 = vector.shape_cast %56 : vector<8xf32> to vector<8x1xf32>
      %cst_39 = arith.constant 3.200000e+01 : f32
      %58 = vector.broadcast %cst_39 : f32 to vector<8x1xf32>
      %59 = arith.divf %57, %58 : vector<8x1xf32>
      %60 = vector.broadcast %59 : vector<8x1xf32> to vector<8x32xf32>
      %61 = arith.subf %55, %60 : vector<8x32xf32>
      %62 = arith.mulf %61, %61 : vector<8x32xf32>
      %cst_40 = arith.constant dense<0.000000e+00> : vector<8xf32>
      %63 = vector.multi_reduction <add>, %62, %cst_40 [1] : vector<8x32xf32> to vector<8xf32>
      %64 = vector.shape_cast %63 : vector<8xf32> to vector<8x1xf32>
      %cst_41 = arith.constant 3.200000e+01 : f32
      %65 = vector.broadcast %cst_41 : f32 to vector<8x1xf32>
      %66 = arith.divf %64, %65 : vector<8x1xf32>
      %67 = vector.broadcast %59 : vector<8x1xf32> to vector<8x32xf32>
      %68 = arith.subf %55, %67 : vector<8x32xf32>
      %cst_42 = arith.constant 9.99999974E-6 : f32
      %69 = vector.broadcast %cst_42 : f32 to vector<8x1xf32>
      %70 = arith.addf %66, %69 : vector<8x1xf32>
      %71 = math.rsqrt %70 : vector<8x1xf32>
      %72 = vector.broadcast %71 : vector<8x1xf32> to vector<8x32xf32>
      %73 = arith.mulf %68, %72 : vector<8x32xf32>
      %c0_43 = arith.constant 0 : index
      %c0_44 = arith.constant 0 : index
      %74 = vector.load %arg9[%c0_43, %c0_44] : memref<1x32xf32, #tpu.memory_space<vmem>>, vector<1x32xf32>
      %75 = vector.broadcast %74 : vector<1x32xf32> to vector<8x32xf32>
      %76 = arith.mulf %73, %75 : vector<8x32xf32>
      %c0_45 = arith.constant 0 : index
      %c0_46 = arith.constant 0 : index
      %77 = vector.load %arg10[%c0_45, %c0_46] : memref<1x32xf32, #tpu.memory_space<vmem>>, vector<1x32xf32>
      %78 = vector.broadcast %77 : vector<1x32xf32> to vector<8x32xf32>
      %79 = arith.addf %76, %78 : vector<8x32xf32>
      %80 = arith.truncf %79 : vector<8x32xf32> to vector<8x32xbf16>
      %c0_47 = arith.constant 0 : index
      %c0_48 = arith.constant 0 : index
      %c0_49 = arith.constant 0 : index
      %81 = vector.load %arg11[%c0_47, %c0_48, %c0_49] : memref<1x8x32xbf16, #tpu.memory_space<vmem>>, vector<1x8x32xbf16>
      %82 = vector.shape_cast %81 : vector<1x8x32xbf16> to vector<8x32xbf16>
      %83 = vector.shape_cast %80 : vector<8x32xbf16> to vector<1x8x32xbf16>
      tpu.vector_store %arg11[%c0_47, %c0_48, %c0_49], %83 {strides = array<i32>} : memref<1x8x32xbf16, #tpu.memory_space<vmem>>, vector<1x8x32xbf16>,
    } else {
    }
    return
  }
  func.func @transform_0(%arg0: i32, %arg1: i32) -> (i32, i32, i32, i32) {
    %c0_i32 = arith.constant 0 : i32
    %c0_i32_0 = arith.constant 0 : i32
    %c0_i32_1 = arith.constant 0 : i32
    return %arg0, %arg1, %c0_i32, %c0_i32_0 : i32, i32, i32, i32
  }
  func.func @transform_1(%arg0: i32, %arg1: i32) -> (i32, i32, i32, i32) {
    %c0_i32 = arith.constant 0 : i32
    %c0_i32_0 = arith.constant 0 : i32
    %c0_i32_1 = arith.constant 0 : i32
    return %arg0, %arg1, %c0_i32, %c0_i32_0 : i32, i32, i32, i32
  }
  func.func @transform_2(%arg0: i32, %arg1: i32) -> (i32, i32, i32, i32) {
    %c0_i32 = arith.constant 0 : i32
    %c0_i32_0 = arith.constant 0 : i32
    %c0_i32_1 = arith.constant 0 : i32
    return %arg0, %arg1, %c0_i32, %c0_i32_0 : i32, i32, i32, i32
  }
  func.func @transform_3(%arg0: i32, %arg1: i32) -> (i32, i32, i32) {
    %c0_i32 = arith.constant 0 : i32
    %c0_i32_0 = arith.constant 0 : i32
    %c0_i32_1 = arith.constant 0 : i32
    return %arg0, %c0_i32, %c0_i32_0 : i32, i32, i32
  }
  func.func @transform_4(%arg0: i32, %arg1: i32) -> (i32, i32, i32) {
    %c0_i32 = arith.constant 0 : i32
    %c0_i32_0 = arith.constant 0 : i32
    %c0_i32_1 = arith.constant 0 : i32
    return %arg0, %c0_i32, %c0_i32_0 : i32, i32, i32
  }
  func.func @transform_5(%arg0: i32, %arg1: i32) -> (i32, i32) {
    %c0_i32 = arith.constant 0 : i32
    %c0_i32_0 = arith.constant 0 : i32
    %c0_i32_1 = arith.constant 0 : i32
    return %c0_i32, %c0_i32_0 : i32, i32
  }
  func.func @transform_6(%arg0: i32, %arg1: i32) -> (i32, i32) {
    %c0_i32 = arith.constant 0 : i32
    %c0_i32_0 = arith.constant 0 : i32
    %c0_i32_1 = arith.constant 0 : i32
    return %c0_i32, %c0_i32_0 : i32, i32
  }
  func.func @transform_7(%arg0: i32, %arg1: i32) -> (i32, i32) {
    %c0_i32 = arith.constant 0 : i32
    %c0_i32_0 = arith.constant 0 : i32
    %c0_i32_1 = arith.constant 0 : i32
    return %c0_i32, %c0_i32_0 : i32, i32
  }
  func.func @transform_8(%arg0: i32, %arg1: i32) -> (i32, i32) {
    %c0_i32 = arith.constant 0 : i32
    %c0_i32_0 = arith.constant 0 : i32
    %c0_i32_1 = arith.constant 0 : i32
    return %c0_i32, %c0_i32_0 : i32, i32
  }
  func.func @transform_9(%arg0: i32, %arg1: i32) -> (i32, i32, i32) {
    %c0_i32 = arith.constant 0 : i32
    %c0_i32_0 = arith.constant 0 : i32
    %c0_i32_1 = arith.constant 0 : i32
    return %arg0, %c0_i32, %c0_i32_0 : i32, i32, i32
  }
}

module attributes {stable_mosaic.version = 11 : i64} {
  func.func @_attn_kernel(%arg0: i32, %arg1: i32, %arg2: memref<1x1x8x8xbf16, #tpu.memory_space<vmem>>, %arg3: memref<1x1x8x8xbf16, #tpu.memory_space<vmem>>, %arg4: memref<1x1x8x8xbf16, #tpu.memory_space<vmem>>, %arg5: memref<1x1x8xf32, #tpu.memory_space<vmem>>, %arg6: memref<1x8x32xbf16, #tpu.memory_space<vmem>>, %arg7: memref<32x32xbf16, #tpu.memory_space<vmem>>, %arg8: memref<1x32xf32, #tpu.memory_space<vmem>>, %arg9: memref<1x32xf32, #tpu.memory_space<vmem>>, %arg10: memref<1x32xf32, #tpu.memory_space<vmem>>, %arg11: memref<1x8x32xbf16, #tpu.memory_space<vmem>>, %arg12: memref<4x8x8xbf16, #tpu.memory_space<vmem>>) attributes {dimension_semantics = [#tpu.dimension_semantics<parallel>, #tpu.dimension_semantics<arbitrary>], iteration_bounds = array<i64: 2, 4>, scalar_prefetch = 0 : i64, scratch_operands = 1 : i64, tpu.core_type = #tpu.core_type<tc>, window_params = [{transform_indices = @transform_0, window_bounds = array<i64: 1, 1, 8, 8>}, {transform_indices = @transform_1, window_bounds = array<i64: 1, 1, 8, 8>}, {transform_indices = @transform_2, window_bounds = array<i64: 1, 1, 8, 8>}, {transform_indices = @transform_3, window_bounds = array<i64: 1, 1, 8>}, {transform_indices = @transform_4, window_bounds = array<i64: 1, 8, 32>}, {pipeline_mode = #tpu.pipeline_mode<synchronous>, transform_indices = @transform_5, window_bounds = array<i64: 32, 32>}, {pipeline_mode = #tpu.pipeline_mode<synchronous>, transform_indices = @transform_6, window_bounds = array<i64: 1, 32>}, {pipeline_mode = #tpu.pipeline_mode<synchronous>, transform_indices = @transform_7, window_bounds = array<i64: 1, 32>}, {pipeline_mode = #tpu.pipeline_mode<synchronous>, transform_indices = @transform_8, window_bounds = array<i64: 1, 32>}, {transform_indices = @transform_9, window_bounds = array<i64: 1, 8, 32>}]} {
    %c0 = arith.constant 0 : index
    %c0_0 = arith.constant 0 : index
    %c0_1 = arith.constant 0 : index
    %c0_2 = arith.constant 0 : index
    %0 = vector.load %arg2[%c0, %c0_0, %c0_1, %c0_2] : memref<1x1x8x8xbf16, #tpu.memory_space<vmem>>, vector<1x1x8x8xbf16>
    %1 = vector.shape_cast %0 : vector<1x1x8x8xbf16> to vector<8x8xbf16>
    %c0_3 = arith.constant 0 : index
    %c0_4 = arith.constant 0 : index
    %c0_5 = arith.constant 0 : index
    %c0_6 = arith.constant 0 : index
    %2 = vector.load %arg3[%c0_3, %c0_4, %c0_5, %c0_6] : memref<1x1x8x8xbf16, #tpu.memory_space<vmem>>, vector<1x1x8x8xbf16>
    %3 = vector.shape_cast %2 : vector<1x1x8x8xbf16> to vector<8x8xbf16>
    %c0_7 = arith.constant 0 : index
    %c0_8 = arith.constant 0 : index
    %c0_9 = arith.constant 0 : index
    %c0_10 = arith.constant 0 : index
    %4 = vector.load %arg4[%c0_7, %c0_8, %c0_9, %c0_10] : memref<1x1x8x8xbf16, #tpu.memory_space<vmem>>, vector<1x1x8x8xbf16>
    %5 = vector.shape_cast %4 : vector<1x1x8x8xbf16> to vector<8x8xbf16>
    %cst = arith.constant dense<0.000000e+00> : vector<8x8xf32>
    %6 = tpu.matmul %1, %3, %cst {dimension_numbers = #tpu.dot_dimension_numbers<[1], [1], [0], [0], [0, 0, 1, 0], [], []>} : vector<8x8xbf16>, vector<8x8xbf16>, vector<8x8xf32> -> vector<8x8xf32>
    %cst_11 = arith.constant 0.353553385 : f32
    %7 = vector.broadcast %cst_11 : f32 to vector<8x8xf32>
    %8 = arith.mulf %6, %7 : vector<8x8xf32>
    %c0_12 = arith.constant 0 : index
    %c0_13 = arith.constant 0 : index
    %c0_14 = arith.constant 0 : index
    %9 = vector.load %arg5[%c0_12, %c0_13, %c0_14] : memref<1x1x8xf32, #tpu.memory_space<vmem>>, vector<1x1x8xf32>
    %10 = vector.shape_cast %9 : vector<1x1x8xf32> to vector<1x8xf32>
    %11 = vector.broadcast %10 : vector<1x8xf32> to vector<8x8xf32>
    %12 = arith.addf %8, %11 : vector<8x8xf32>
    %cst_15 = arith.constant dense<0xFF800000> : vector<8xf32>
    %13 = vector.multi_reduction <maximumf>, %12, %cst_15 [1] : vector<8x8xf32> to vector<8xf32>
    %14 = vector.shape_cast %13 : vector<8xf32> to vector<8x1xf32>
    %15 = vector.broadcast %14 : vector<8x1xf32> to vector<8x8xf32>
    %16 = arith.subf %12, %15 : vector<8x8xf32>
    %17 = math.exp %16 : vector<8x8xf32>
    %cst_16 = arith.constant dense<0.000000e+00> : vector<8xf32>
    %18 = vector.multi_reduction <add>, %17, %cst_16 [1] : vector<8x8xf32> to vector<8xf32>
    %19 = vector.shape_cast %18 : vector<8xf32> to vector<8x1xf32>
    %20 = tpu.reciprocal %19 {approx = true} : vector<8x1xf32> -> vector<8x1xf32>
    %21 = vector.broadcast %20 : vector<8x1xf32> to vector<8x8xf32>
    %22 = arith.mulf %17, %21 : vector<8x8xf32>
    %23 = arith.truncf %22 : vector<8x8xf32> to vector<8x8xbf16>
    %cst_17 = arith.constant dense<0.000000e+00> : vector<8x8xf32>
    %24 = tpu.matmul %23, %5, %cst_17 {dimension_numbers = #tpu.dot_dimension_numbers<[1], [0], [0], [1], [0, 0, 1, 1], [], []>} : vector<8x8xbf16>, vector<8x8xbf16>, vector<8x8xf32> -> vector<8x8xf32>
    %25 = arith.truncf %24 : vector<8x8xf32> to vector<8x8xbf16>
    %26 = arith.index_cast %arg1 : i32 to index
    %c0_18 = arith.constant 0 : index
    %c0_19 = arith.constant 0 : index
    %27 = vector.load %arg12[%26, %c0_18, %c0_19] : memref<4x8x8xbf16, #tpu.memory_space<vmem>>, vector<1x8x8xbf16>
    %28 = vector.shape_cast %27 : vector<1x8x8xbf16> to vector<8x8xbf16>
    %29 = vector.shape_cast %25 : vector<8x8xbf16> to vector<1x8x8xbf16>
    tpu.vector_store %arg12[%26, %c0_18, %c0_19], %29 {strides = array<i32>} : memref<4x8x8xbf16, #tpu.memory_space<vmem>>, vector<1x8x8xbf16>,
    %c3_i32 = arith.constant 3 : i32
    %30 = arith.cmpi eq, %arg1, %c3_i32 : i32
    %31 = arith.extui %30 : i1 to i32
    %c0_i32 = arith.constant 0 : i32
    %32 = arith.cmpi ne, %31, %c0_i32 : i32
    scf.if %32 {
      %c0_20 = arith.constant 0 : index
      %c0_21 = arith.constant 0 : index
      %c0_22 = arith.constant 0 : index
      %33 = vector.load %arg12[%c0_20, %c0_21, %c0_22] : memref<4x8x8xbf16, #tpu.memory_space<vmem>>, vector<1x8x8xbf16>
      %34 = vector.shape_cast %33 : vector<1x8x8xbf16> to vector<8x8xbf16>
      %c1 = arith.constant 1 : index
      %c0_23 = arith.constant 0 : index
      %c0_24 = arith.constant 0 : index
      %35 = vector.load %arg12[%c1, %c0_23, %c0_24] : memref<4x8x8xbf16, #tpu.memory_space<vmem>>, vector<1x8x8xbf16>
      %36 = vector.shape_cast %35 : vector<1x8x8xbf16> to vector<8x8xbf16>
      %c2 = arith.constant 2 : index
      %c0_25 = arith.constant 0 : index
      %c0_26 = arith.constant 0 : index
      %37 = vector.load %arg12[%c2, %c0_25, %c0_26] : memref<4x8x8xbf16, #tpu.memory_space<vmem>>, vector<1x8x8xbf16>
      %38 = vector.shape_cast %37 : vector<1x8x8xbf16> to vector<8x8xbf16>
      %c3 = arith.constant 3 : index
      %c0_27 = arith.constant 0 : index
      %c0_28 = arith.constant 0 : index
      %39 = vector.load %arg12[%c3, %c0_27, %c0_28] : memref<4x8x8xbf16, #tpu.memory_space<vmem>>, vector<1x8x8xbf16>
      %40 = vector.shape_cast %39 : vector<1x8x8xbf16> to vector<8x8xbf16>
      %41 = tpu.concatenate %34, %36, %38, %40 in 1 : vector<8x8xbf16>, vector<8x8xbf16>, vector<8x8xbf16>, vector<8x8xbf16> -> vector<8x32xbf16>
      %c0_29 = arith.constant 0 : index
      %c0_30 = arith.constant 0 : index
      %42 = vector.load %arg7[%c0_29, %c0_30] : memref<32x32xbf16, #tpu.memory_space<vmem>>, vector<32x32xbf16>
      %cst_31 = arith.constant dense<0.000000e+00> : vector<8x32xf32>
      %43 = tpu.matmul %41, %42, %cst_31 {dimension_numbers = #tpu.dot_dimension_numbers<[1], [0], [0], [1], [0, 0, 1, 1], [], []>} : vector<8x32xbf16>, vector<32x32xbf16>, vector<8x32xf32> -> vector<8x32xf32>
      %c0_32 = arith.constant 0 : index
      %c0_33 = arith.constant 0 : index
      %44 = vector.load %arg8[%c0_32, %c0_33] : memref<1x32xf32, #tpu.memory_space<vmem>>, vector<1x32xf32>
      %45 = vector.broadcast %44 : vector<1x32xf32> to vector<8x32xf32>
      %46 = arith.addf %43, %45 : vector<8x32xf32>
      %c0_34 = arith.constant 0 : index
      %c0_35 = arith.constant 0 : index
      %c0_36 = arith.constant 0 : index
      %47 = vector.load %arg6[%c0_34, %c0_35, %c0_36] : memref<1x8x32xbf16, #tpu.memory_space<vmem>>, vector<1x8x32xbf16>
      %48 = vector.shape_cast %47 : vector<1x8x32xbf16> to vector<8x32xbf16>
      %49 = arith.extf %48 : vector<8x32xbf16> to vector<8x32xf32>
      %50 = arith.addf %46, %49 : vector<8x32xf32>
      %cst_37 = arith.constant dense<0.000000e+00> : vector<8xf32>
      %51 = vector.multi_reduction <add>, %50, %cst_37 [1] : vector<8x32xf32> to vector<8xf32>
      %52 = vector.shape_cast %51 : vector<8xf32> to vector<8x1xf32>
      %cst_38 = arith.constant 3.200000e+01 : f32
      %53 = vector.broadcast %cst_38 : f32 to vector<8x1xf32>
      %54 = arith.divf %52, %53 : vector<8x1xf32>
      %55 = vector.broadcast %54 : vector<8x1xf32> to vector<8x32xf32>
      %56 = arith.subf %50, %55 : vector<8x32xf32>
      %57 = arith.mulf %56, %56 : vector<8x32xf32>
      %cst_39 = arith.constant dense<0.000000e+00> : vector<8xf32>
      %58 = vector.multi_reduction <add>, %57, %cst_39 [1] : vector<8x32xf32> to vector<8xf32>
      %59 = vector.shape_cast %58 : vector<8xf32> to vector<8x1xf32>
      %cst_40 = arith.constant 3.200000e+01 : f32
      %60 = vector.broadcast %cst_40 : f32 to vector<8x1xf32>
      %61 = arith.divf %59, %60 : vector<8x1xf32>
      %62 = vector.broadcast %54 : vector<8x1xf32> to vector<8x32xf32>
      %63 = arith.subf %50, %62 : vector<8x32xf32>
      %cst_41 = arith.constant 9.99999974E-6 : f32
      %64 = vector.broadcast %cst_41 : f32 to vector<8x1xf32>
      %65 = arith.addf %61, %64 : vector<8x1xf32>
      %66 = math.rsqrt %65 : vector<8x1xf32>
      %67 = vector.broadcast %66 : vector<8x1xf32> to vector<8x32xf32>
      %68 = arith.mulf %63, %67 : vector<8x32xf32>
      %c0_42 = arith.constant 0 : index
      %c0_43 = arith.constant 0 : index
      %69 = vector.load %arg9[%c0_42, %c0_43] : memref<1x32xf32, #tpu.memory_space<vmem>>, vector<1x32xf32>
      %70 = vector.broadcast %69 : vector<1x32xf32> to vector<8x32xf32>
      %71 = arith.mulf %68, %70 : vector<8x32xf32>
      %c0_44 = arith.constant 0 : index
      %c0_45 = arith.constant 0 : index
      %72 = vector.load %arg10[%c0_44, %c0_45] : memref<1x32xf32, #tpu.memory_space<vmem>>, vector<1x32xf32>
      %73 = vector.broadcast %72 : vector<1x32xf32> to vector<8x32xf32>
      %74 = arith.addf %71, %73 : vector<8x32xf32>
      %75 = arith.truncf %74 : vector<8x32xf32> to vector<8x32xbf16>
      %c0_46 = arith.constant 0 : index
      %c0_47 = arith.constant 0 : index
      %c0_48 = arith.constant 0 : index
      %76 = vector.load %arg11[%c0_46, %c0_47, %c0_48] : memref<1x8x32xbf16, #tpu.memory_space<vmem>>, vector<1x8x32xbf16>
      %77 = vector.shape_cast %76 : vector<1x8x32xbf16> to vector<8x32xbf16>
      %78 = vector.shape_cast %75 : vector<8x32xbf16> to vector<1x8x32xbf16>
      tpu.vector_store %arg11[%c0_46, %c0_47, %c0_48], %78 {strides = array<i32>} : memref<1x8x32xbf16, #tpu.memory_space<vmem>>, vector<1x8x32xbf16>,
    } else {
    }
    return
  }
  func.func @transform_0(%arg0: i32, %arg1: i32) -> (i32, i32, i32, i32) {
    %c0_i32 = arith.constant 0 : i32
    %c0_i32_0 = arith.constant 0 : i32
    %c0_i32_1 = arith.constant 0 : i32
    return %arg0, %arg1, %c0_i32, %c0_i32_0 : i32, i32, i32, i32
  }
  func.func @transform_1(%arg0: i32, %arg1: i32) -> (i32, i32, i32, i32) {
    %c0_i32 = arith.constant 0 : i32
    %c0_i32_0 = arith.constant 0 : i32
    %c0_i32_1 = arith.constant 0 : i32
    return %arg0, %arg1, %c0_i32, %c0_i32_0 : i32, i32, i32, i32
  }
  func.func @transform_2(%arg0: i32, %arg1: i32) -> (i32, i32, i32, i32) {
    %c0_i32 = arith.constant 0 : i32
    %c0_i32_0 = arith.constant 0 : i32
    %c0_i32_1 = arith.constant 0 : i32
    return %arg0, %arg1, %c0_i32, %c0_i32_0 : i32, i32, i32, i32
  }
  func.func @transform_3(%arg0: i32, %arg1: i32) -> (i32, i32, i32) {
    %c0_i32 = arith.constant 0 : i32
    %c0_i32_0 = arith.constant 0 : i32
    %c0_i32_1 = arith.constant 0 : i32
    return %arg0, %c0_i32, %c0_i32_0 : i32, i32, i32
  }
  func.func @transform_4(%arg0: i32, %arg1: i32) -> (i32, i32, i32) {
    %c0_i32 = arith.constant 0 : i32
    %c0_i32_0 = arith.constant 0 : i32
    %c0_i32_1 = arith.constant 0 : i32
    return %arg0, %c0_i32, %c0_i32_0 : i32, i32, i32
  }
  func.func @transform_5(%arg0: i32, %arg1: i32) -> (i32, i32) {
    %c0_i32 = arith.constant 0 : i32
    %c0_i32_0 = arith.constant 0 : i32
    %c0_i32_1 = arith.constant 0 : i32
    return %c0_i32, %c0_i32_0 : i32, i32
  }
  func.func @transform_6(%arg0: i32, %arg1: i32) -> (i32, i32) {
    %c0_i32 = arith.constant 0 : i32
    %c0_i32_0 = arith.constant 0 : i32
    %c0_i32_1 = arith.constant 0 : i32
    return %c0_i32, %c0_i32_0 : i32, i32
  }
  func.func @transform_7(%arg0: i32, %arg1: i32) -> (i32, i32) {
    %c0_i32 = arith.constant 0 : i32
    %c0_i32_0 = arith.constant 0 : i32
    %c0_i32_1 = arith.constant 0 : i32
    return %c0_i32, %c0_i32_0 : i32, i32
  }
  func.func @transform_8(%arg0: i32, %arg1: i32) -> (i32, i32) {
    %c0_i32 = arith.constant 0 : i32
    %c0_i32_0 = arith.constant 0 : i32
    %c0_i32_1 = arith.constant 0 : i32
    return %c0_i32, %c0_i32_0 : i32, i32
  }
  func.func @transform_9(%arg0: i32, %arg1: i32) -> (i32, i32, i32) {
    %c0_i32 = arith.constant 0 : i32
    %c0_i32_0 = arith.constant 0 : i32
    %c0_i32_1 = arith.constant 0 : i32
    return %arg0, %c0_i32, %c0_i32_0 : i32, i32, i32
  }
}

module attributes {stable_mosaic.version = 11 : i64} {
  func.func @_ffn_kernel(%arg0: i32, %arg1: i32, %arg2: memref<16x32xbf16, #tpu.memory_space<vmem>>, %arg3: memref<32x64xbf16, #tpu.memory_space<vmem>>, %arg4: memref<1x64xf32, #tpu.memory_space<vmem>>, %arg5: memref<64x32xbf16, #tpu.memory_space<vmem>>, %arg6: memref<1x32xf32, #tpu.memory_space<vmem>>, %arg7: memref<1x32xf32, #tpu.memory_space<vmem>>, %arg8: memref<1x32xf32, #tpu.memory_space<vmem>>, %arg9: memref<16x32xbf16, #tpu.memory_space<vmem>>, %arg10: memref<16x32xf32, #tpu.memory_space<vmem>>) attributes {dimension_semantics = [#tpu.dimension_semantics<parallel>, #tpu.dimension_semantics<arbitrary>], iteration_bounds = array<i64: 1, 1>, scalar_prefetch = 0 : i64, scratch_operands = 1 : i64, tpu.core_type = #tpu.core_type<tc>, window_params = [{transform_indices = @transform_0, window_bounds = array<i64: 16, 32>}, {transform_indices = @transform_1, window_bounds = array<i64: 32, 64>}, {transform_indices = @transform_2, window_bounds = array<i64: 1, 64>}, {transform_indices = @transform_3, window_bounds = array<i64: 64, 32>}, {pipeline_mode = #tpu.pipeline_mode<synchronous>, transform_indices = @transform_4, window_bounds = array<i64: 1, 32>}, {pipeline_mode = #tpu.pipeline_mode<synchronous>, transform_indices = @transform_5, window_bounds = array<i64: 1, 32>}, {pipeline_mode = #tpu.pipeline_mode<synchronous>, transform_indices = @transform_6, window_bounds = array<i64: 1, 32>}, {transform_indices = @transform_7, window_bounds = array<i64: 16, 32>}]} {
    %c0_i32 = arith.constant 0 : i32
    %0 = arith.cmpi eq, %arg1, %c0_i32 : i32
    %1 = arith.extui %0 : i1 to i32
    %c0_i32_0 = arith.constant 0 : i32
    %2 = arith.cmpi ne, %1, %c0_i32_0 : i32
    scf.if %2 {
      %cst_16 = arith.constant 0.000000e+00 : f32
      %20 = vector.broadcast %cst_16 : f32 to vector<16x32xf32>
      %c0_17 = arith.constant 0 : index
      %c0_18 = arith.constant 0 : index
      %21 = vector.load %arg10[%c0_17, %c0_18] : memref<16x32xf32, #tpu.memory_space<vmem>>, vector<16x32xf32>
      tpu.vector_store %arg10[%c0_17, %c0_18], %20 {strides = array<i32>} : memref<16x32xf32, #tpu.memory_space<vmem>>, vector<16x32xf32>,
    } else {
    }
    %c0 = arith.constant 0 : index
    %c0_1 = arith.constant 0 : index
    %3 = vector.load %arg2[%c0, %c0_1] : memref<16x32xbf16, #tpu.memory_space<vmem>>, vector<16x32xbf16>
    %c0_2 = arith.constant 0 : index
    %c0_3 = arith.constant 0 : index
    %4 = vector.load %arg3[%c0_2, %c0_3] : memref<32x64xbf16, #tpu.memory_space<vmem>>, vector<32x64xbf16>
    %cst = arith.constant dense<0.000000e+00> : vector<16x64xf32>
    %5 = tpu.matmul %3, %4, %cst {dimension_numbers = #tpu.dot_dimension_numbers<[1], [0], [0], [1], [0, 0, 1, 1], [], []>} : vector<16x32xbf16>, vector<32x64xbf16>, vector<16x64xf32> -> vector<16x64xf32>
    %c0_4 = arith.constant 0 : index
    %c0_5 = arith.constant 0 : index
    %6 = vector.load %arg4[%c0_4, %c0_5] : memref<1x64xf32, #tpu.memory_space<vmem>>, vector<1x64xf32>
    %7 = vector.broadcast %6 : vector<1x64xf32> to vector<16x64xf32>
    %8 = arith.addf %5, %7 : vector<16x64xf32>
    %cst_6 = arith.constant 0.000000e+00 : f32
    %9 = vector.broadcast %cst_6 : f32 to vector<16x64xf32>
    %10 = arith.maximumf %8, %9 : vector<16x64xf32>
    %c0_7 = arith.constant 0 : index
    %c0_8 = arith.constant 0 : index
    %11 = vector.load %arg10[%c0_7, %c0_8] : memref<16x32xf32, #tpu.memory_space<vmem>>, vector<16x32xf32>
    %12 = arith.truncf %10 : vector<16x64xf32> to vector<16x64xbf16>
    %c0_9 = arith.constant 0 : index
    %c0_10 = arith.constant 0 : index
    %13 = vector.load %arg5[%c0_9, %c0_10] : memref<64x32xbf16, #tpu.memory_space<vmem>>, vector<64x32xbf16>
    %cst_11 = arith.constant dense<0.000000e+00> : vector<16x32xf32>
    %14 = tpu.matmul %12, %13, %cst_11 {dimension_numbers = #tpu.dot_dimension_numbers<[1], [0], [0], [1], [0, 0, 1, 1], [], []>} : vector<16x64xbf16>, vector<64x32xbf16>, vector<16x32xf32> -> vector<16x32xf32>
    %15 = arith.addf %11, %14 : vector<16x32xf32>
    %c0_12 = arith.constant 0 : index
    %c0_13 = arith.constant 0 : index
    %16 = vector.load %arg10[%c0_12, %c0_13] : memref<16x32xf32, #tpu.memory_space<vmem>>, vector<16x32xf32>
    tpu.vector_store %arg10[%c0_12, %c0_13], %15 {strides = array<i32>} : memref<16x32xf32, #tpu.memory_space<vmem>>, vector<16x32xf32>,
    %c0_i32_14 = arith.constant 0 : i32
    %17 = arith.cmpi eq, %arg1, %c0_i32_14 : i32
    %18 = arith.extui %17 : i1 to i32
    %c0_i32_15 = arith.constant 0 : i32
    %19 = arith.cmpi ne, %18, %c0_i32_15 : i32
    scf.if %19 {
      %c0_16 = arith.constant 0 : index
      %c0_17 = arith.constant 0 : index
      %20 = vector.load %arg10[%c0_16, %c0_17] : memref<16x32xf32, #tpu.memory_space<vmem>>, vector<16x32xf32>
      %c0_18 = arith.constant 0 : index
      %c0_19 = arith.constant 0 : index
      %21 = vector.load %arg6[%c0_18, %c0_19] : memref<1x32xf32, #tpu.memory_space<vmem>>, vector<1x32xf32>
      %22 = vector.broadcast %21 : vector<1x32xf32> to vector<16x32xf32>
      %23 = arith.addf %20, %22 : vector<16x32xf32>
      %c0_20 = arith.constant 0 : index
      %c0_21 = arith.constant 0 : index
      %24 = vector.load %arg2[%c0_20, %c0_21] : memref<16x32xbf16, #tpu.memory_space<vmem>>, vector<16x32xbf16>
      %25 = arith.extf %24 : vector<16x32xbf16> to vector<16x32xf32>
      %26 = arith.addf %23, %25 : vector<16x32xf32>
      %cst_22 = arith.constant dense<0.000000e+00> : vector<16xf32>
      %27 = vector.multi_reduction <add>, %26, %cst_22 [1] : vector<16x32xf32> to vector<16xf32>
      %28 = vector.shape_cast %27 : vector<16xf32> to vector<16x1xf32>
      %cst_23 = arith.constant 3.200000e+01 : f32
      %29 = vector.broadcast %cst_23 : f32 to vector<16x1xf32>
      %30 = arith.divf %28, %29 : vector<16x1xf32>
      %31 = vector.broadcast %30 : vector<16x1xf32> to vector<16x32xf32>
      %32 = arith.subf %26, %31 : vector<16x32xf32>
      %33 = arith.mulf %32, %32 : vector<16x32xf32>
      %cst_24 = arith.constant dense<0.000000e+00> : vector<16xf32>
      %34 = vector.multi_reduction <add>, %33, %cst_24 [1] : vector<16x32xf32> to vector<16xf32>
      %35 = vector.shape_cast %34 : vector<16xf32> to vector<16x1xf32>
      %cst_25 = arith.constant 3.200000e+01 : f32
      %36 = vector.broadcast %cst_25 : f32 to vector<16x1xf32>
      %37 = arith.divf %35, %36 : vector<16x1xf32>
      %38 = vector.broadcast %30 : vector<16x1xf32> to vector<16x32xf32>
      %39 = arith.subf %26, %38 : vector<16x32xf32>
      %cst_26 = arith.constant 9.99999974E-6 : f32
      %40 = vector.broadcast %cst_26 : f32 to vector<16x1xf32>
      %41 = arith.addf %37, %40 : vector<16x1xf32>
      %42 = math.rsqrt %41 : vector<16x1xf32>
      %43 = vector.broadcast %42 : vector<16x1xf32> to vector<16x32xf32>
      %44 = arith.mulf %39, %43 : vector<16x32xf32>
      %c0_27 = arith.constant 0 : index
      %c0_28 = arith.constant 0 : index
      %45 = vector.load %arg7[%c0_27, %c0_28] : memref<1x32xf32, #tpu.memory_space<vmem>>, vector<1x32xf32>
      %46 = vector.broadcast %45 : vector<1x32xf32> to vector<16x32xf32>
      %47 = arith.mulf %44, %46 : vector<16x32xf32>
      %c0_29 = arith.constant 0 : index
      %c0_30 = arith.constant 0 : index
      %48 = vector.load %arg8[%c0_29, %c0_30] : memref<1x32xf32, #tpu.memory_space<vmem>>, vector<1x32xf32>
      %49 = vector.broadcast %48 : vector<1x32xf32> to vector<16x32xf32>
      %50 = arith.addf %47, %49 : vector<16x32xf32>
      %51 = arith.truncf %50 : vector<16x32xf32> to vector<16x32xbf16>
      %c0_31 = arith.constant 0 : index
      %c0_32 = arith.constant 0 : index
      %52 = vector.load %arg9[%c0_31, %c0_32] : memref<16x32xbf16, #tpu.memory_space<vmem>>, vector<16x32xbf16>
      tpu.vector_store %arg9[%c0_31, %c0_32], %51 {strides = array<i32>} : memref<16x32xbf16, #tpu.memory_space<vmem>>, vector<16x32xbf16>,
    } else {
    }
    return
  }
  func.func @transform_0(%arg0: i32, %arg1: i32) -> (i32, i32) {
    %c0_i32 = arith.constant 0 : i32
    %c0_i32_0 = arith.constant 0 : i32
    return %arg0, %c0_i32 : i32, i32
  }
  func.func @transform_1(%arg0: i32, %arg1: i32) -> (i32, i32) {
    %c0_i32 = arith.constant 0 : i32
    %c0_i32_0 = arith.constant 0 : i32
    return %c0_i32, %arg1 : i32, i32
  }
  func.func @transform_2(%arg0: i32, %arg1: i32) -> (i32, i32) {
    %c0_i32 = arith.constant 0 : i32
    %c0_i32_0 = arith.constant 0 : i32
    return %c0_i32, %arg1 : i32, i32
  }
  func.func @transform_3(%arg0: i32, %arg1: i32) -> (i32, i32) {
    %c0_i32 = arith.constant 0 : i32
    %c0_i32_0 = arith.constant 0 : i32
    return %arg1, %c0_i32 : i32, i32
  }
  func.func @transform_4(%arg0: i32, %arg1: i32) -> (i32, i32) {
    %c0_i32 = arith.constant 0 : i32
    %c0_i32_0 = arith.constant 0 : i32
    %c0_i32_1 = arith.constant 0 : i32
    return %c0_i32, %c0_i32_0 : i32, i32
  }
  func.func @transform_5(%arg0: i32, %arg1: i32) -> (i32, i32) {
    %c0_i32 = arith.constant 0 : i32
    %c0_i32_0 = arith.constant 0 : i32
    %c0_i32_1 = arith.constant 0 : i32
    return %c0_i32, %c0_i32_0 : i32, i32
  }
  func.func @transform_6(%arg0: i32, %arg1: i32) -> (i32, i32) {
    %c0_i32 = arith.constant 0 : i32
    %c0_i32_0 = arith.constant 0 : i32
    %c0_i32_1 = arith.constant 0 : i32
    return %c0_i32, %c0_i32_0 : i32, i32
  }
  func.func @transform_7(%arg0: i32, %arg1: i32) -> (i32, i32) {
    %c0_i32 = arith.constant 0 : i32
    %c0_i32_0 = arith.constant 0 : i32
    return %arg0, %c0_i32 : i32, i32
  }
}

module attributes {stable_mosaic.version = 11 : i64} {
  func.func @_linear_kernel_bf16(%arg0: i32, %arg1: i32, %arg2: i32, %arg3: memref<16x32xbf16, #tpu.memory_space<vmem>>, %arg4: memref<32x64xbf16, #tpu.memory_space<vmem>>, %arg5: memref<1x64xf32, #tpu.memory_space<vmem>>, %arg6: memref<16x64xbf16, #tpu.memory_space<vmem>>, %arg7: memref<16x64xf32, #tpu.memory_space<vmem>>) attributes {dimension_semantics = [#tpu.dimension_semantics<parallel>, #tpu.dimension_semantics<parallel>, #tpu.dimension_semantics<arbitrary>], iteration_bounds = array<i64: 1, 1, 1>, scalar_prefetch = 0 : i64, scratch_operands = 1 : i64, tpu.core_type = #tpu.core_type<tc>, window_params = [{transform_indices = @transform_0, window_bounds = array<i64: 16, 32>}, {transform_indices = @transform_1, window_bounds = array<i64: 32, 64>}, {transform_indices = @transform_2, window_bounds = array<i64: 1, 64>}, {transform_indices = @transform_3, window_bounds = array<i64: 16, 64>}]} {
    %c0_i32 = arith.constant 0 : i32
    %0 = arith.cmpi eq, %arg2, %c0_i32 : i32
    %1 = arith.extui %0 : i1 to i32
    %c0_i32_0 = arith.constant 0 : i32
    %2 = arith.cmpi ne, %1, %c0_i32_0 : i32
    scf.if %2 {
      %cst_10 = arith.constant 0.000000e+00 : f32
      %12 = vector.broadcast %cst_10 : f32 to vector<16x64xf32>
      %c0_11 = arith.constant 0 : index
      %c0_12 = arith.constant 0 : index
      %13 = vector.load %arg7[%c0_11, %c0_12] : memref<16x64xf32, #tpu.memory_space<vmem>>, vector<16x64xf32>
      tpu.vector_store %arg7[%c0_11, %c0_12], %12 {strides = array<i32>} : memref<16x64xf32, #tpu.memory_space<vmem>>, vector<16x64xf32>,
    } else {
    }
    %c0 = arith.constant 0 : index
    %c0_1 = arith.constant 0 : index
    %3 = vector.load %arg7[%c0, %c0_1] : memref<16x64xf32, #tpu.memory_space<vmem>>, vector<16x64xf32>
    %c0_2 = arith.constant 0 : index
    %c0_3 = arith.constant 0 : index
    %4 = vector.load %arg3[%c0_2, %c0_3] : memref<16x32xbf16, #tpu.memory_space<vmem>>, vector<16x32xbf16>
    %c0_4 = arith.constant 0 : index
    %c0_5 = arith.constant 0 : index
    %5 = vector.load %arg4[%c0_4, %c0_5] : memref<32x64xbf16, #tpu.memory_space<vmem>>, vector<32x64xbf16>
    %cst = arith.constant dense<0.000000e+00> : vector<16x64xf32>
    %6 = tpu.matmul %4, %5, %cst {dimension_numbers = #tpu.dot_dimension_numbers<[1], [0], [0], [1], [0, 0, 1, 1], [], []>} : vector<16x32xbf16>, vector<32x64xbf16>, vector<16x64xf32> -> vector<16x64xf32>
    %7 = arith.addf %3, %6 : vector<16x64xf32>
    %c0_6 = arith.constant 0 : index
    %c0_7 = arith.constant 0 : index
    %8 = vector.load %arg7[%c0_6, %c0_7] : memref<16x64xf32, #tpu.memory_space<vmem>>, vector<16x64xf32>
    tpu.vector_store %arg7[%c0_6, %c0_7], %7 {strides = array<i32>} : memref<16x64xf32, #tpu.memory_space<vmem>>, vector<16x64xf32>,
    %c0_i32_8 = arith.constant 0 : i32
    %9 = arith.cmpi eq, %arg2, %c0_i32_8 : i32
    %10 = arith.extui %9 : i1 to i32
    %c0_i32_9 = arith.constant 0 : i32
    %11 = arith.cmpi ne, %10, %c0_i32_9 : i32
    scf.if %11 {
      %c0_10 = arith.constant 0 : index
      %c0_11 = arith.constant 0 : index
      %12 = vector.load %arg7[%c0_10, %c0_11] : memref<16x64xf32, #tpu.memory_space<vmem>>, vector<16x64xf32>
      %c0_12 = arith.constant 0 : index
      %c0_13 = arith.constant 0 : index
      %13 = vector.load %arg5[%c0_12, %c0_13] : memref<1x64xf32, #tpu.memory_space<vmem>>, vector<1x64xf32>
      %14 = vector.broadcast %13 : vector<1x64xf32> to vector<16x64xf32>
      %15 = arith.addf %12, %14 : vector<16x64xf32>
      %16 = arith.truncf %15 : vector<16x64xf32> to vector<16x64xbf16>
      %c0_14 = arith.constant 0 : index
      %c0_15 = arith.constant 0 : index
      %17 = vector.load %arg6[%c0_14, %c0_15] : memref<16x64xbf16, #tpu.memory_space<vmem>>, vector<16x64xbf16>
      tpu.vector_store %arg6[%c0_14, %c0_15], %16 {strides = array<i32>} : memref<16x64xbf16, #tpu.memory_space<vmem>>, vector<16x64xbf16>,
    } else {
    }
    return
  }
  func.func @transform_0(%arg0: i32, %arg1: i32, %arg2: i32) -> (i32, i32) {
    %c0_i32 = arith.constant 0 : i32
    return %arg0, %arg2 : i32, i32
  }
  func.func @transform_1(%arg0: i32, %arg1: i32, %arg2: i32) -> (i32, i32) {
    %c0_i32 = arith.constant 0 : i32
    return %arg2, %arg1 : i32, i32
  }
  func.func @transform_2(%arg0: i32, %arg1: i32, %arg2: i32) -> (i32, i32) {
    %c0_i32 = arith.constant 0 : i32
    %c0_i32_0 = arith.constant 0 : i32
    return %c0_i32, %arg1 : i32, i32
  }
  func.func @transform_3(%arg0: i32, %arg1: i32, %arg2: i32) -> (i32, i32) {
    %c0_i32 = arith.constant 0 : i32
    return %arg0, %arg1 : i32, i32
  }
}

module attributes {stable_mosaic.version = 11 : i64} {
  func.func @_linear_kernel_f32(%arg0: i32, %arg1: i32, %arg2: i32, %arg3: memref<16x32xbf16, #tpu.memory_space<vmem>>, %arg4: memref<32x128xbf16, #tpu.memory_space<vmem>>, %arg5: memref<1x128xf32, #tpu.memory_space<vmem>>, %arg6: memref<16x128xf32, #tpu.memory_space<vmem>>) attributes {dimension_semantics = [#tpu.dimension_semantics<parallel>, #tpu.dimension_semantics<parallel>, #tpu.dimension_semantics<arbitrary>], iteration_bounds = array<i64: 1, 1, 1>, scalar_prefetch = 0 : i64, scratch_operands = 0 : i64, tpu.core_type = #tpu.core_type<tc>, window_params = [{transform_indices = @transform_0, window_bounds = array<i64: 16, 32>}, {transform_indices = @transform_1, window_bounds = array<i64: 32, 128>}, {transform_indices = @transform_2, window_bounds = array<i64: 1, 128>}, {transform_indices = @transform_3, window_bounds = array<i64: 16, 128>}]} {
    %c0_i32 = arith.constant 0 : i32
    %0 = arith.cmpi eq, %arg2, %c0_i32 : i32
    %1 = arith.extui %0 : i1 to i32
    %c0_i32_0 = arith.constant 0 : i32
    %2 = arith.cmpi ne, %1, %c0_i32_0 : i32
    scf.if %2 {
      %cst_10 = arith.constant 0.000000e+00 : f32
      %12 = vector.broadcast %cst_10 : f32 to vector<16x128xf32>
      %c0_11 = arith.constant 0 : index
      %c0_12 = arith.constant 0 : index
      %13 = vector.load %arg6[%c0_11, %c0_12] : memref<16x128xf32, #tpu.memory_space<vmem>>, vector<16x128xf32>
      tpu.vector_store %arg6[%c0_11, %c0_12], %12 {strides = array<i32>} : memref<16x128xf32, #tpu.memory_space<vmem>>, vector<16x128xf32>,
    } else {
    }
    %c0 = arith.constant 0 : index
    %c0_1 = arith.constant 0 : index
    %3 = vector.load %arg6[%c0, %c0_1] : memref<16x128xf32, #tpu.memory_space<vmem>>, vector<16x128xf32>
    %c0_2 = arith.constant 0 : index
    %c0_3 = arith.constant 0 : index
    %4 = vector.load %arg3[%c0_2, %c0_3] : memref<16x32xbf16, #tpu.memory_space<vmem>>, vector<16x32xbf16>
    %c0_4 = arith.constant 0 : index
    %c0_5 = arith.constant 0 : index
    %5 = vector.load %arg4[%c0_4, %c0_5] : memref<32x128xbf16, #tpu.memory_space<vmem>>, vector<32x128xbf16>
    %cst = arith.constant dense<0.000000e+00> : vector<16x128xf32>
    %6 = tpu.matmul %4, %5, %cst {dimension_numbers = #tpu.dot_dimension_numbers<[1], [0], [0], [1], [0, 0, 1, 1], [], []>} : vector<16x32xbf16>, vector<32x128xbf16>, vector<16x128xf32> -> vector<16x128xf32>
    %7 = arith.addf %3, %6 : vector<16x128xf32>
    %c0_6 = arith.constant 0 : index
    %c0_7 = arith.constant 0 : index
    %8 = vector.load %arg6[%c0_6, %c0_7] : memref<16x128xf32, #tpu.memory_space<vmem>>, vector<16x128xf32>
    tpu.vector_store %arg6[%c0_6, %c0_7], %7 {strides = array<i32>} : memref<16x128xf32, #tpu.memory_space<vmem>>, vector<16x128xf32>,
    %c0_i32_8 = arith.constant 0 : i32
    %9 = arith.cmpi eq, %arg2, %c0_i32_8 : i32
    %10 = arith.extui %9 : i1 to i32
    %c0_i32_9 = arith.constant 0 : i32
    %11 = arith.cmpi ne, %10, %c0_i32_9 : i32
    scf.if %11 {
      %c0_10 = arith.constant 0 : index
      %c0_11 = arith.constant 0 : index
      %12 = vector.load %arg6[%c0_10, %c0_11] : memref<16x128xf32, #tpu.memory_space<vmem>>, vector<16x128xf32>
      %c0_12 = arith.constant 0 : index
      %c0_13 = arith.constant 0 : index
      %13 = vector.load %arg5[%c0_12, %c0_13] : memref<1x128xf32, #tpu.memory_space<vmem>>, vector<1x128xf32>
      %14 = vector.broadcast %13 : vector<1x128xf32> to vector<16x128xf32>
      %15 = arith.addf %12, %14 : vector<16x128xf32>
      %c0_14 = arith.constant 0 : index
      %c0_15 = arith.constant 0 : index
      %16 = vector.load %arg6[%c0_14, %c0_15] : memref<16x128xf32, #tpu.memory_space<vmem>>, vector<16x128xf32>
      tpu.vector_store %arg6[%c0_14, %c0_15], %15 {strides = array<i32>} : memref<16x128xf32, #tpu.memory_space<vmem>>, vector<16x128xf32>,
    } else {
    }
    return
  }
  func.func @transform_0(%arg0: i32, %arg1: i32, %arg2: i32) -> (i32, i32) {
    %c0_i32 = arith.constant 0 : i32
    return %arg0, %arg2 : i32, i32
  }
  func.func @transform_1(%arg0: i32, %arg1: i32, %arg2: i32) -> (i32, i32) {
    %c0_i32 = arith.constant 0 : i32
    return %arg2, %arg1 : i32, i32
  }
  func.func @transform_2(%arg0: i32, %arg1: i32, %arg2: i32) -> (i32, i32) {
    %c0_i32 = arith.constant 0 : i32
    %c0_i32_0 = arith.constant 0 : i32
    return %c0_i32, %arg1 : i32, i32
  }
  func.func @transform_3(%arg0: i32, %arg1: i32, %arg2: i32) -> (i32, i32) {
    %c0_i32 = arith.constant 0 : i32
    return %arg0, %arg1 : i32, i32
  }
}

</mosaic_0001>

<llo_original>
// kernel: transformer_forward.25
$region0: #{transformer_forward.25}
  #allocation0 [shape = 'u32[]', space=smem, size = 0x4, offset = 0x4, fixed_abs, tag = 'smem constant byte address 0x4 - core index']
  #allocation1 [shape = 'u32[144,128]{1,0:T(1,128)}', space=vmem, size = 0x12000, scoped, tag = 'internal scratch']
  #allocation2 [shape = 'f32[16,96]{1,0:T(8,128)}', space=vmem, size = 0x2000, scoped, tag = 'scratch operand']
  %s0 = inlined_call_operand.vmem [shape: bf16[16,32], index: 0, kind: input, shape index: {}]
  %s1 = inlined_call_operand.vmem [shape: bf16[32,96], index: 1, kind: input, shape index: {}]
  %s2 = inlined_call_operand.vmem [shape: f32[1,96], index: 2, kind: input, shape index: {}]
  %s3 = inlined_call_operand.vmem [shape: bf16[16,96], index: 3, kind: output, shape index: {}]
  %s4 = sld [smem:[#allocation0]]
  $region30: #{transformer_forward.25} parent=0
    _
  %s6 = ssub.s32 1, %s4
  %s7 = scalar_select 0, %s6, %s4
  // Predicated region
  $region2: #{transformer_forward.25} parent=0 // pred_check
    _
  $region3: #{transformer_forward.25} parent=0 // pred_check_branch
    %9 = sbr.rel (0) target = $region5
  $region4: #{transformer_forward.25} parent=0 // pred_region
    _
  $region5: #{transformer_forward.25} parent=0 // pred_fallthru
    _
  // Predicated region
  $region6: #{transformer_forward.25} parent=0 // pred_check
    _
  $region7: #{transformer_forward.25} parent=0 // pred_check_branch
    %11 = sbr.rel (0) target = $region9
  $region8: #{transformer_forward.25} parent=0 // pred_region
    _
  $region9: #{transformer_forward.25} parent=0 // pred_fallthru
    _
  // Predicated region
  $region10: #{transformer_forward.25} parent=0 // pred_check
    _
  $region11: #{transformer_forward.25} parent=0 // pred_check_branch
    %13 = sbr.rel (0) target = $region13
  $region12: #{transformer_forward.25} parent=0 // pred_region
    _
  $region13: #{transformer_forward.25} parent=0 // pred_fallthru
    _
  %p15 = scmp.eq.s32.totalorder 0, 0
  // Predicated region
  $region14: #{transformer_forward.25} parent=0 // pred_check
    %p16 = pneg %p15
  $region15: #{transformer_forward.25} parent=0 // pred_check_branch
    %18 = sbr.rel (%p16) target = $region17
  $region16: #{transformer_forward.25} parent=0 // pred_region
    %vm19 = vcmask 785408
    %20 = vst.msk [vmem:[#allocation2] sm:$0xff] %vm19, 0.0
    %21 = vst.msk [vmem:[#allocation2 + $0x8] sm:$0xff] %vm19, 0.0
  $region17: #{transformer_forward.25} parent=0 // pred_fallthru
    _
  %v22 = vld [vmem:[#allocation2] sm:$0xff]
  %v23 = vld [vmem:[#allocation2 + $0x8] sm:$0xff]
  %v24 = vld [vmem:[%s0] sm:$0xf]
  %v25 = vld [vmem:[%s0 + $0x4] sm:$0xf]
  %v26 = vld [vmem:[%s1] sm:$0xf]
  %v27 = vld [vmem:[%s1 + $0x4] sm:$0xf]
  %v28 = vld [vmem:[%s1 + $0x8] sm:$0xf]
  %v29 = vld [vmem:[%s1 + $0xc] sm:$0xf]
  %v32 = vunpack.c.l.b16 %v24
  %v33 = vunpack.c.l.b16 %v25
  %v34 = vpack.c.b16 %v33, %v32
  %v39 = vunpack.c.l.b16 %v26
  %v40 = vunpack.c.l.b16 %v27
  %v41 = vunpack.c.l.b16 %v28
  %v42 = vunpack.c.l.b16 %v29
  %v43 = vpack.c.b16 %v40, %v39
  %v44 = vpack.c.b16 %v42, %v41
  %vm47 = vcmask 261120
  %v49 = vsel %vm47, %v34, 0
  %51 = vmatprep.subr.bf16.mxu0 0
  %52 = vmatpush1.bf16.msra.mxu0 0
  %53 = vmatprep.subr.bf16.mxu0 0
  %54 = vmatpush1.bf16.msra.mxu0 0
  %55 = vmatprep.subr.bf16.mxu0 0
  %56 = vmatpush1.bf16.msra.mxu0 0
  %57 = vmatprep.subr.bf16.mxu0 0
  %58 = vmatpush1.bf16.msra.mxu0 0
  %59 = vmatprep.subr.bf16.mxu0 0
  %60 = vmatpush1.bf16.msra.mxu0 0
  %61 = vmatprep.subr.bf16.mxu0 0
  %62 = vmatpush1.bf16.msra.mxu0 0
  %63 = vmatprep.subr.bf16.mxu0 0
  %64 = vmatpush1.bf16.msra.mxu0 %v44
  %65 = vmatprep.subr.bf16.mxu0 0
  %66 = vmatpush1.bf16.msra.mxu0 %v43
  %67 = vmatprep.subr.bf16.mxu0 0
  %68 = vmatpush2.bf16.msra.mxu0 0
  %69 = vmatprep.subr.bf16.mxu0 0
  %70 = vmatpush2.bf16.msra.mxu0 0
  %71 = vmatprep.subr.bf16.mxu0 0
  %72 = vmatpush2.bf16.msra.mxu0 0
  %73 = vmatprep.subr.bf16.mxu0 0
  %74 = vmatpush2.bf16.msra.mxu0 0
  %75 = vmatprep.subr.bf16.mxu0 0
  %76 = vmatpush2.bf16.msra.mxu0 0
  %77 = vmatprep.subr.bf16.mxu0 0
  %78 = vmatpush2.bf16.msra.mxu0 0
  %79 = vmatprep.subr.bf16.mxu0 0
  %80 = vmatpush2.bf16.msra.mxu0 0
  %81 = vmatprep.subr.bf16.mxu0 0
  %82 = vmatpush2.bf16.msra.mxu0 0
  %83 = vmatprep.mubr.bf16.mxu0 0
  %84 = vmatmul.mubr.bf16.gmra.mxu0 %v49
  %v85 = vpop.f32.mrf.mxu0
  %v86 = vadd.f32 0.0, %v85
  %v87 = vpop.f32.mrf.mxu0
  %v88 = vpop.f32.mrf.mxu0
  %v89 = vadd.f32 0.0, %v88
  %v90 = vpop.f32.mrf.mxu0
  %91 = vdwg.mxu0
  %v92 = vadd.f32 %v22, %v86
  %v93 = vadd.f32 %v23, %v89
  %vm94 = vcmask 785408
  %95 = vst.msk [vmem:[#allocation2] sm:$0xff] %vm94, %v92
  %96 = vst.msk [vmem:[#allocation2 + $0x8] sm:$0xff] %vm94, %v93
  // Predicated region
  $region18: #{transformer_forward.25} parent=0 // pred_check
    %p97 = pneg %p15
  $region19: #{transformer_forward.25} parent=0 // pred_check_branch
    %99 = sbr.rel (%p97) target = $region21
  $region20: #{transformer_forward.25} parent=0 // pred_region
    %v100 = vld [vmem:[#allocation2] sm:$0xff]
    %v101 = vld [vmem:[#allocation2 + $0x8] sm:$0xff]
    %v102 = vld [vmem:[%s2] sm:$0x1]
    %v104 = vlaneseq
    %v105 = vshrl.u32 %v104, 7
    %v106 = vsub.s32 0, %v105
    %v107 = vrot.slane %v102, %v106
    %v109 = vadd.f32 %v100, %v107
    %v110 = vadd.f32 %v101, %v107
    %v111 = vpack.c.bf16 %v110, %v109
    %v113 = vunpack.c.l.b16 %v111
    %v114 = vunpack.c.h.b16 %v111
    %v115 = vpack.c.b16 %v113, %v113
    %v116 = vpack.c.b16 %v114, %v114
    %vm119 = vcmask 781312
    %120 = vst.msk [vmem:[%s3] sm:$0xf] %vm119, %v115
    %121 = vst.msk [vmem:[%s3 + $0x4] sm:$0xf] %vm119, %v116
  $region21: #{transformer_forward.25} parent=0 // pred_fallthru
    _
  // Predicated region
  $region22: #{transformer_forward.25} parent=0 // pred_check
    _
  $region23: #{transformer_forward.25} parent=0 // pred_check_branch
    %123 = sbr.rel (0) target = $region25
  $region24: #{transformer_forward.25} parent=0 // pred_region
    _
  $region25: #{transformer_forward.25} parent=0 // pred_fallthru
    _
  // Predicated region
  $region26: #{transformer_forward.25} parent=0 // pred_check
    _
  $region27: #{transformer_forward.25} parent=0 // pred_check_branch
    %125 = sbr.rel (0) target = $region29
  $region28: #{transformer_forward.25} parent=0 // pred_region
    _
  $region29: #{transformer_forward.25} parent=0 // pred_fallthru
    _

// kernel: transformer_forward.27
$region0: #{transformer_forward.27}
  #allocation0 [shape = 'u32[]', space=smem, size = 0x4, offset = 0x4, fixed_abs, tag = 'smem constant byte address 0x4 - core index']
  #allocation1 [shape = 'u32[144,128]{1,0:T(1,128)}', space=vmem, size = 0x12000, scoped, tag = 'internal scratch']
  #allocation2 [shape = 'f32[16,32]{1,0:T(8,128)}', space=vmem, size = 0x2000, scoped, tag = 'scratch operand']
  %s0 = inlined_call_operand.vmem [shape: bf16[16,32], index: 0, kind: input, shape index: {}]
  %s1 = inlined_call_operand.vmem [shape: bf16[32,32], index: 1, kind: input, shape index: {}]
  %s2 = inlined_call_operand.vmem [shape: f32[1,32], index: 2, kind: input, shape index: {}]
  %s3 = inlined_call_operand.vmem [shape: bf16[16,32], index: 3, kind: output, shape index: {}]
  %s4 = sld [smem:[#allocation0]]
  $region30: #{transformer_forward.27} parent=0
    _
  %s6 = ssub.s32 1, %s4
  %s7 = scalar_select 0, %s6, %s4
  // Predicated region
  $region2: #{transformer_forward.27} parent=0 // pred_check
    _
  $region3: #{transformer_forward.27} parent=0 // pred_check_branch
    %9 = sbr.rel (0) target = $region5
  $region4: #{transformer_forward.27} parent=0 // pred_region
    _
  $region5: #{transformer_forward.27} parent=0 // pred_fallthru
    _
  // Predicated region
  $region6: #{transformer_forward.27} parent=0 // pred_check
    _
  $region7: #{transformer_forward.27} parent=0 // pred_check_branch
    %11 = sbr.rel (0) target = $region9
  $region8: #{transformer_forward.27} parent=0 // pred_region
    _
  $region9: #{transformer_forward.27} parent=0 // pred_fallthru
    _
  // Predicated region
  $region10: #{transformer_forward.27} parent=0 // pred_check
    _
  $region11: #{transformer_forward.27} parent=0 // pred_check_branch
    %13 = sbr.rel (0) target = $region13
  $region12: #{transformer_forward.27} parent=0 // pred_region
    _
  $region13: #{transformer_forward.27} parent=0 // pred_fallthru
    _
  %p15 = scmp.eq.s32.totalorder 0, 0
  // Predicated region
  $region14: #{transformer_forward.27} parent=0 // pred_check
    %p16 = pneg %p15
  $region15: #{transformer_forward.27} parent=0 // pred_check_branch
    %18 = sbr.rel (%p16) target = $region17
  $region16: #{transformer_forward.27} parent=0 // pred_region
    %vm19 = vcmask 261120
    %20 = vst.msk [vmem:[#allocation2] sm:$0xff] %vm19, 0.0
    %21 = vst.msk [vmem:[#allocation2 + $0x8] sm:$0xff] %vm19, 0.0
  $region17: #{transformer_forward.27} parent=0 // pred_fallthru
    _
  %v22 = vld [vmem:[#allocation2] sm:$0xff]
  %v23 = vld [vmem:[#allocation2 + $0x8] sm:$0xff]
  %v24 = vld [vmem:[%s0] sm:$0xf]
  %v25 = vld [vmem:[%s0 + $0x4] sm:$0xf]
  %v26 = vld [vmem:[%s1] sm:$0xf]
  %v27 = vld [vmem:[%s1 + $0x4] sm:$0xf]
  %v28 = vld [vmem:[%s1 + $0x8] sm:$0xf]
  %v29 = vld [vmem:[%s1 + $0xc] sm:$0xf]
  %v32 = vunpack.c.l.b16 %v24
  %v33 = vunpack.c.l.b16 %v25
  %v34 = vpack.c.b16 %v33, %v32
  %v39 = vunpack.c.l.b16 %v26
  %v40 = vunpack.c.l.b16 %v27
  %v41 = vunpack.c.l.b16 %v28
  %v42 = vunpack.c.l.b16 %v29
  %v43 = vpack.c.b16 %v40, %v39
  %v44 = vpack.c.b16 %v42, %v41
  %vm47 = vcmask 261120
  %v49 = vsel %vm47, %v34, 0
  %51 = vmatprep.subr.bf16.mxu0 0
  %52 = vmatpush1.bf16.msra.mxu0 0
  %53 = vmatprep.subr.bf16.mxu0 0
  %54 = vmatpush1.bf16.msra.mxu0 0
  %55 = vmatprep.subr.bf16.mxu0 0
  %56 = vmatpush1.bf16.msra.mxu0 0
  %57 = vmatprep.subr.bf16.mxu0 0
  %58 = vmatpush1.bf16.msra.mxu0 0
  %59 = vmatprep.subr.bf16.mxu0 0
  %60 = vmatpush1.bf16.msra.mxu0 0
  %61 = vmatprep.subr.bf16.mxu0 0
  %62 = vmatpush1.bf16.msra.mxu0 0
  %63 = vmatprep.subr.bf16.mxu0 0
  %64 = vmatpush1.bf16.msra.mxu0 %v44
  %65 = vmatprep.subr.bf16.mxu0 0
  %66 = vmatpush1.bf16.msra.mxu0 %v43
  %67 = vmatprep.subr.bf16.mxu0 0
  %68 = vmatpush2.bf16.msra.mxu0 0
  %69 = vmatprep.subr.bf16.mxu0 0
  %70 = vmatpush2.bf16.msra.mxu0 0
  %71 = vmatprep.subr.bf16.mxu0 0
  %72 = vmatpush2.bf16.msra.mxu0 0
  %73 = vmatprep.subr.bf16.mxu0 0
  %74 = vmatpush2.bf16.msra.mxu0 0
  %75 = vmatprep.subr.bf16.mxu0 0
  %76 = vmatpush2.bf16.msra.mxu0 0
  %77 = vmatprep.subr.bf16.mxu0 0
  %78 = vmatpush2.bf16.msra.mxu0 0
  %79 = vmatprep.subr.bf16.mxu0 0
  %80 = vmatpush2.bf16.msra.mxu0 0
  %81 = vmatprep.subr.bf16.mxu0 0
  %82 = vmatpush2.bf16.msra.mxu0 0
  %83 = vmatprep.mubr.bf16.mxu0 0
  %84 = vmatmul.mubr.bf16.gmra.mxu0 %v49
  %v85 = vpop.f32.mrf.mxu0
  %v86 = vadd.f32 0.0, %v85
  %v87 = vpop.f32.mrf.mxu0
  %v88 = vpop.f32.mrf.mxu0
  %v89 = vadd.f32 0.0, %v88
  %v90 = vpop.f32.mrf.mxu0
  %91 = vdwg.mxu0
  %v92 = vadd.f32 %v22, %v86
  %v93 = vadd.f32 %v23, %v89
  %94 = vst.msk [vmem:[#allocation2] sm:$0xff] %vm47, %v92
  %95 = vst.msk [vmem:[#allocation2 + $0x8] sm:$0xff] %vm47, %v93
  // Predicated region
  $region18: #{transformer_forward.27} parent=0 // pred_check
    %p96 = pneg %p15
  $region19: #{transformer_forward.27} parent=0 // pred_check_branch
    %98 = sbr.rel (%p96) target = $region21
  $region20: #{transformer_forward.27} parent=0 // pred_region
    %v99 = vld [vmem:[#allocation2] sm:$0xff]
    %v100 = vld [vmem:[#allocation2 + $0x8] sm:$0xff]
    %v101 = vld [vmem:[%s2] sm:$0x1]
    %v103 = vlaneseq
    %v104 = vshrl.u32 %v103, 7
    %v105 = vsub.s32 0, %v104
    %v106 = vrot.slane %v101, %v105
    %v108 = vadd.f32 %v99, %v106
    %v109 = vadd.f32 %v100, %v106
    %v110 = vpack.c.bf16 %v109, %v108
    %v112 = vunpack.c.l.b16 %v110
    %v113 = vunpack.c.h.b16 %v110
    %v114 = vpack.c.b16 %v112, %v112
    %v115 = vpack.c.b16 %v113, %v113
    %vm118 = vcmask 257024
    %119 = vst.msk [vmem:[%s3] sm:$0xf] %vm118, %v114
    %120 = vst.msk [vmem:[%s3 + $0x4] sm:$0xf] %vm118, %v115
  $region21: #{transformer_forward.27} parent=0 // pred_fallthru
    _
  // Predicated region
  $region22: #{transformer_forward.27} parent=0 // pred_check
    _
  $region23: #{transformer_forward.27} parent=0 // pred_check_branch
    %122 = sbr.rel (0) target = $region25
  $region24: #{transformer_forward.27} parent=0 // pred_region
    _
  $region25: #{transformer_forward.27} parent=0 // pred_fallthru
    _
  // Predicated region
  $region26: #{transformer_forward.27} parent=0 // pred_check
    _
  $region27: #{transformer_forward.27} parent=0 // pred_check_branch
    %124 = sbr.rel (0) target = $region29
  $region28: #{transformer_forward.27} parent=0 // pred_region
    _
  $region29: #{transformer_forward.27} parent=0 // pred_fallthru
    _

// kernel: transformer_forward.26
$region0: #{transformer_forward.26}
  #allocation0 [shape = 'u32[]', space=smem, size = 0x4, offset = 0x4, fixed_abs, tag = 'smem constant byte address 0x4 - core index']
  #allocation1 [shape = 'u32[144,128]{1,0:T(1,128)}', space=vmem, size = 0x12000, scoped, tag = 'internal scratch']
  #allocation2 [shape = 'bf16[4,8,8]{2,1,0:T(8,128)(2,1)}', space=vmem, size = 0x2000, scoped, tag = 'scratch operand']
  %s0 = inlined_call_operand.vmem [shape: bf16[2,4,8,8], index: 0, kind: input, shape index: {}]
  %s1 = inlined_call_operand.vmem [shape: bf16[2,4,8,8], index: 1, kind: input, shape index: {}]
  %s2 = inlined_call_operand.vmem [shape: bf16[2,4,8,8], index: 2, kind: input, shape index: {}]
  %s3 = inlined_call_operand.vmem [shape: f32[2,1,8], index: 3, kind: input, shape index: {}]
  %s4 = inlined_call_operand.vmem [shape: bf16[2,8,32], index: 4, kind: input, shape index: {}]
  %s5 = inlined_call_operand.vmem [shape: bf16[32,32], index: 5, kind: input, shape index: {}]
  %s6 = inlined_call_operand.vmem [shape: f32[1,32], index: 6, kind: input, shape index: {}]
  %s7 = inlined_call_operand.vmem [shape: f32[1,32], index: 7, kind: input, shape index: {}]
  %s8 = inlined_call_operand.vmem [shape: f32[1,32], index: 8, kind: input, shape index: {}]
  %s9 = inlined_call_operand.vmem [shape: bf16[2,8,32], index: 9, kind: output, shape index: {}]
  %s10 = sld [smem:[#allocation0]]
  $region73: #{transformer_forward.26} parent=0
    _
  %s12 = ssub.s32 1, %s10
  %s13 = scalar_select 0, %s12, %s10
  loop: start=0, step=1, limit=10
  $region2: #{transformer_forward.26} parent=0 // loop_pre_header
    _
  $region3: #{transformer_forward.26} parent=0 // loop_header
    %s15 = sphi 0, %s19
    %p16 = scmp.ge.s32.totalorder %s15, 10
    %s22 = sphi 0, %s34
    %s23 = sphi 0, %s30
    %s24 = sphi 0, %s22
    %s25 = sphi 0, %s23
    %s26 = sphi 0, %s24
    %s27 = sphi 0, %s25
    %s39 = sphi 0, %s41
    %s42 = sphi 0, %s39
    %s43 = sphi 0, %s42
    %s59 = sphi 0, %s43
    %s67 = sphi 0, %s69
    %s70 = sphi 0, %s67
    %s71 = sphi 0, %s70
    %s87 = sphi 0, %s71
    %s95 = sphi 0, %s97
    %s98 = sphi 0, %s95
    %s99 = sphi 0, %s98
    %s115 = sphi 0, %s99
    %s121 = sphi 0, %s123
    %s124 = sphi 0, %s121
    %s125 = sphi 0, %s124
    %s141 = sphi 0, %s125
    %s147 = sphi 0, %s149
    %s150 = sphi 0, %s147
    %s151 = sphi 0, %s150
    %s167 = sphi 0, %s151
    %s171 = sphi 0, %s171
    %s173 = sphi 0, %s171
    %s174 = sphi 0, %s173
    %s188 = sphi 0, %s174
    %s192 = sphi 0, %s192
    %s194 = sphi 0, %s192
    %s195 = sphi 0, %s194
    %s209 = sphi 0, %s195
    %s213 = sphi 0, %s213
    %s215 = sphi 0, %s213
    %s216 = sphi 0, %s215
    %s230 = sphi 0, %s216
    %s234 = sphi 0, %s234
    %s236 = sphi 0, %s234
    %s237 = sphi 0, %s236
    %s251 = sphi 0, %s237
    %s257 = sphi 0, %s259
    %s260 = sphi 0, %s257
    %s261 = sphi 0, %s260
    %s277 = sphi 0, %s261
  $region4: #{transformer_forward.26} parent=0 // loop_header_branch
    %18 = sbr.rel (%p16) target = $region8
  $region5: #{transformer_forward.26} parent=0 // loop_body
    %s20 = ssub.s32 %s15, 1
    %s21 = ssub.s32 %s15, 2
    %s28 = sadd.s32 1, %s23
    %p29 = scmp.ge.s32.totalorder %s28, 4
    %s30 = scalar_select %p29, 0, %s28
    %s31 = sadd.s32 1, %s22
    %s32 = scalar_select %p29, %s31, %s22
    %p33 = scmp.ge.s32.totalorder %s32, 2
    %s34 = scalar_select %p33, 0, %s32
    %s35 = ssub.s32 %s22, %s34
    %s36 = ssub.s32 %s23, %s30
    %s37 = sor.u32 %s35, %s36
    %p38 = scmp.eq.s32.totalorder %s37, 0
    %s40 = sadd.s32 %s39, 1
    %s41 = scalar_select %p38, %s39, %s40
    %p44 = pneg %p38
    %p45 = scmp.eq.s32.totalorder %s15, 7
    %p46 = por %p44, %p45
    %p47 = scmp.ne.s32.totalorder %s39, %s42
    %p48 = scmp.eq.s32.totalorder %s15, 0
    %p49 = por %p47, %p48
    %p50 = scmp.ne.s32.totalorder %s39, %s42
    %p51 = scmp.eq.s32.totalorder %s20, 7
    %p52 = por %p50, %p51
    %p53 = scmp.ne.s32.totalorder %s42, %s43
    %p54 = scmp.eq.s32.totalorder %s20, 0
    %p55 = por %p53, %p54
    %p56 = scmp.ne.s32.totalorder %s42, %s43
    %p57 = scmp.eq.s32.totalorder %s21, 7
    %p58 = por %p56, %p57
    %p60 = scmp.ne.s32.totalorder %s43, %s59
    %p61 = scmp.eq.s32.totalorder %s21, 0
    %p62 = por %p60, %p61
    %s63 = ssub.s32 %s22, %s34
    %s64 = ssub.s32 %s23, %s30
    %s65 = sor.u32 %s63, %s64
    %p66 = scmp.eq.s32.totalorder %s65, 0
    %s68 = sadd.s32 %s67, 1
    %s69 = scalar_select %p66, %s67, %s68
    %p72 = pneg %p66
    %p73 = scmp.eq.s32.totalorder %s15, 7
    %p74 = por %p72, %p73
    %p75 = scmp.ne.s32.totalorder %s67, %s70
    %p76 = scmp.eq.s32.totalorder %s15, 0
    %p77 = por %p75, %p76
    %p78 = scmp.ne.s32.totalorder %s67, %s70
    %p79 = scmp.eq.s32.totalorder %s20, 7
    %p80 = por %p78, %p79
    %p81 = scmp.ne.s32.totalorder %s70, %s71
    %p82 = scmp.eq.s32.totalorder %s20, 0
    %p83 = por %p81, %p82
    %p84 = scmp.ne.s32.totalorder %s70, %s71
    %p85 = scmp.eq.s32.totalorder %s21, 7
    %p86 = por %p84, %p85
    %p88 = scmp.ne.s32.totalorder %s71, %s87
    %p89 = scmp.eq.s32.totalorder %s21, 0
    %p90 = por %p88, %p89
    %s91 = ssub.s32 %s22, %s34
    %s92 = ssub.s32 %s23, %s30
    %s93 = sor.u32 %s91, %s92
    %p94 = scmp.eq.s32.totalorder %s93, 0
    %s96 = sadd.s32 %s95, 1
    %s97 = scalar_select %p94, %s95, %s96
    %p100 = pneg %p94
    %p101 = scmp.eq.s32.totalorder %s15, 7
    %p102 = por %p100, %p101
    %p103 = scmp.ne.s32.totalorder %s95, %s98
    %p104 = scmp.eq.s32.totalorder %s15, 0
    %p105 = por %p103, %p104
    %p106 = scmp.ne.s32.totalorder %s95, %s98
    %p107 = scmp.eq.s32.totalorder %s20, 7
    %p108 = por %p106, %p107
    %p109 = scmp.ne.s32.totalorder %s98, %s99
    %p110 = scmp.eq.s32.totalorder %s20, 0
    %p111 = por %p109, %p110
    %p112 = scmp.ne.s32.totalorder %s98, %s99
    %p113 = scmp.eq.s32.totalorder %s21, 7
    %p114 = por %p112, %p113
    %p116 = scmp.ne.s32.totalorder %s99, %s115
    %p117 = scmp.eq.s32.totalorder %s21, 0
    %p118 = por %p116, %p117
    %s119 = ssub.s32 %s22, %s34
    %p120 = scmp.eq.s32.totalorder %s119, 0
    %s122 = sadd.s32 %s121, 1
    %s123 = scalar_select %p120, %s121, %s122
    %p126 = pneg %p120
    %p127 = scmp.eq.s32.totalorder %s15, 7
    %p128 = por %p126, %p127
    %p129 = scmp.ne.s32.totalorder %s121, %s124
    %p130 = scmp.eq.s32.totalorder %s15, 0
    %p131 = por %p129, %p130
    %p132 = scmp.ne.s32.totalorder %s121, %s124
    %p133 = scmp.eq.s32.totalorder %s20, 7
    %p134 = por %p132, %p133
    %p135 = scmp.ne.s32.totalorder %s124, %s125
    %p136 = scmp.eq.s32.totalorder %s20, 0
    %p137 = por %p135, %p136
    %p138 = scmp.ne.s32.totalorder %s124, %s125
    %p139 = scmp.eq.s32.totalorder %s21, 7
    %p140 = por %p138, %p139
    %p142 = scmp.ne.s32.totalorder %s125, %s141
    %p143 = scmp.eq.s32.totalorder %s21, 0
    %p144 = por %p142, %p143
    %s145 = ssub.s32 %s22, %s34
    %p146 = scmp.eq.s32.totalorder %s145, 0
    %s148 = sadd.s32 %s147, 1
    %s149 = scalar_select %p146, %s147, %s148
    %p152 = pneg %p146
    %p153 = scmp.eq.s32.totalorder %s15, 7
    %p154 = por %p152, %p153
    %p155 = scmp.ne.s32.totalorder %s147, %s150
    %p156 = scmp.eq.s32.totalorder %s15, 0
    %p157 = por %p155, %p156
    %p158 = scmp.ne.s32.totalorder %s147, %s150
    %p159 = scmp.eq.s32.totalorder %s20, 7
    %p160 = por %p158, %p159
    %p161 = scmp.ne.s32.totalorder %s150, %s151
    %p162 = scmp.eq.s32.totalorder %s20, 0
    %p163 = por %p161, %p162
    %p164 = scmp.ne.s32.totalorder %s150, %s151
    %p165 = scmp.eq.s32.totalorder %s21, 7
    %p166 = por %p164, %p165
    %p168 = scmp.ne.s32.totalorder %s151, %s167
    %p169 = scmp.eq.s32.totalorder %s21, 0
    %p170 = por %p168, %p169
    %s172 = sadd.s32 %s171, 1
    %p175 = scmp.eq.s32.totalorder %s15, 7
    %p176 = scmp.ne.s32.totalorder %s171, %s173
    %p177 = scmp.eq.s32.totalorder %s15, 0
    %p178 = por %p176, %p177
    %p179 = scmp.ne.s32.totalorder %s171, %s173
    %p180 = scmp.eq.s32.totalorder %s20, 7
    %p181 = por %p179, %p180
    %p182 = scmp.ne.s32.totalorder %s173, %s174
    %p183 = scmp.eq.s32.totalorder %s20, 0
    %p184 = por %p182, %p183
    %p185 = scmp.ne.s32.totalorder %s173, %s174
    %p186 = scmp.eq.s32.totalorder %s21, 7
    %p187 = por %p185, %p186
    %p189 = scmp.ne.s32.totalorder %s174, %s188
    %p190 = scmp.eq.s32.totalorder %s21, 0
    %p191 = por %p189, %p190
    %s193 = sadd.s32 %s192, 1
    %p196 = scmp.eq.s32.totalorder %s15, 7
    %p197 = scmp.ne.s32.totalorder %s192, %s194
    %p198 = scmp.eq.s32.totalorder %s15, 0
    %p199 = por %p197, %p198
    %p200 = scmp.ne.s32.totalorder %s192, %s194
    %p201 = scmp.eq.s32.totalorder %s20, 7
    %p202 = por %p200, %p201
    %p203 = scmp.ne.s32.totalorder %s194, %s195
    %p204 = scmp.eq.s32.totalorder %s20, 0
    %p205 = por %p203, %p204
    %p206 = scmp.ne.s32.totalorder %s194, %s195
    %p207 = scmp.eq.s32.totalorder %s21, 7
    %p208 = por %p206, %p207
    %p210 = scmp.ne.s32.totalorder %s195, %s209
    %p211 = scmp.eq.s32.totalorder %s21, 0
    %p212 = por %p210, %p211
    %s214 = sadd.s32 %s213, 1
    %p217 = scmp.eq.s32.totalorder %s15, 7
    %p218 = scmp.ne.s32.totalorder %s213, %s215
    %p219 = scmp.eq.s32.totalorder %s15, 0
    %p220 = por %p218, %p219
    %p221 = scmp.ne.s32.totalorder %s213, %s215
    %p222 = scmp.eq.s32.totalorder %s20, 7
    %p223 = por %p221, %p222
    %p224 = scmp.ne.s32.totalorder %s215, %s216
    %p225 = scmp.eq.s32.totalorder %s20, 0
    %p226 = por %p224, %p225
    %p227 = scmp.ne.s32.totalorder %s215, %s216
    %p228 = scmp.eq.s32.totalorder %s21, 7
    %p229 = por %p227, %p228
    %p231 = scmp.ne.s32.totalorder %s216, %s230
    %p232 = scmp.eq.s32.totalorder %s21, 0
    %p233 = por %p231, %p232
    %s235 = sadd.s32 %s234, 1
    %p238 = scmp.eq.s32.totalorder %s15, 7
    %p239 = scmp.ne.s32.totalorder %s234, %s236
    %p240 = scmp.eq.s32.totalorder %s15, 0
    %p241 = por %p239, %p240
    %p242 = scmp.ne.s32.totalorder %s234, %s236
    %p243 = scmp.eq.s32.totalorder %s20, 7
    %p244 = por %p242, %p243
    %p245 = scmp.ne.s32.totalorder %s236, %s237
    %p246 = scmp.eq.s32.totalorder %s20, 0
    %p247 = por %p245, %p246
    %p248 = scmp.ne.s32.totalorder %s236, %s237
    %p249 = scmp.eq.s32.totalorder %s21, 7
    %p250 = por %p248, %p249
    %p252 = scmp.ne.s32.totalorder %s237, %s251
    %p253 = scmp.eq.s32.totalorder %s21, 0
    %p254 = por %p252, %p253
    %s255 = ssub.s32 %s22, %s34
    %p256 = scmp.eq.s32.totalorder %s255, 0
    %s258 = sadd.s32 %s257, 1
    %s259 = scalar_select %p256, %s257, %s258
    %p262 = pneg %p256
    %p263 = scmp.eq.s32.totalorder %s15, 7
    %p264 = por %p262, %p263
    %p265 = scmp.ne.s32.totalorder %s257, %s260
    %p266 = scmp.eq.s32.totalorder %s15, 0
    %p267 = por %p265, %p266
    %p268 = scmp.ne.s32.totalorder %s257, %s260
    %p269 = scmp.eq.s32.totalorder %s20, 7
    %p270 = por %p268, %p269
    %p271 = scmp.ne.s32.totalorder %s260, %s261
    %p272 = scmp.eq.s32.totalorder %s20, 0
    %p273 = por %p271, %p272
    %p274 = scmp.ne.s32.totalorder %s260, %s261
    %p275 = scmp.eq.s32.totalorder %s21, 7
    %p276 = por %p274, %p275
    %p278 = scmp.ne.s32.totalorder %s261, %s277
    %p279 = scmp.eq.s32.totalorder %s21, 0
    %p280 = por %p278, %p279
    %p281 = scmp.le.s32.totalorder 1, %s15
    %p282 = scmp.lt.s32.totalorder %s15, 9
    %p283 = pnand %p281, %p282
    %p284 = pneg %p283
    // Predicated region
    $region9: #{transformer_forward.26} parent=5 // pred_check
      _
    $region10: #{transformer_forward.26} parent=5 // pred_check_branch
      %286 = sbr.rel (%p283) target = $region12
    $region11: #{transformer_forward.26} parent=5 // pred_region
      %s287 = ssub.s32 %s15, 1
      // Predicated region
      $region13: #{transformer_forward.26} parent=11 // pred_check
        %p288 = pneg %p184
      $region14: #{transformer_forward.26} parent=11 // pred_check_branch
        %290 = sbr.rel (%p288) target = $region16
      $region15: #{transformer_forward.26} parent=11 // pred_region
        _
      $region16: #{transformer_forward.26} parent=11 // pred_fallthru
        _
      // Predicated region
      $region17: #{transformer_forward.26} parent=11 // pred_check
        %p291 = pneg %p205
      $region18: #{transformer_forward.26} parent=11 // pred_check_branch
        %293 = sbr.rel (%p291) target = $region20
      $region19: #{transformer_forward.26} parent=11 // pred_region
        _
      $region20: #{transformer_forward.26} parent=11 // pred_fallthru
        _
      // Predicated region
      $region21: #{transformer_forward.26} parent=11 // pred_check
        %p294 = pneg %p226
      $region22: #{transformer_forward.26} parent=11 // pred_check_branch
        %296 = sbr.rel (%p294) target = $region24
      $region23: #{transformer_forward.26} parent=11 // pred_region
        _
      $region24: #{transformer_forward.26} parent=11 // pred_fallthru
        _
      // Predicated region
      $region25: #{transformer_forward.26} parent=11 // pred_check
        %p297 = pneg %p247
      $region26: #{transformer_forward.26} parent=11 // pred_check_branch
        %299 = sbr.rel (%p297) target = $region28
      $region27: #{transformer_forward.26} parent=11 // pred_region
        _
      $region28: #{transformer_forward.26} parent=11 // pred_fallthru
        _
    $region12: #{transformer_forward.26} parent=5 // pred_fallthru
      _
    %p300 = scmp.lt.s32.totalorder %s15, 8
    // Predicated region
    $region29: #{transformer_forward.26} parent=5 // pred_check
      %p301 = pneg %p300
    $region30: #{transformer_forward.26} parent=5 // pred_check_branch
      %303 = sbr.rel (%p301) target = $region32
    $region31: #{transformer_forward.26} parent=5 // pred_region
      // Predicated region
      $region33: #{transformer_forward.26} parent=31 // pred_check
        %p304 = pneg %p49
      $region34: #{transformer_forward.26} parent=31 // pred_check_branch
        %306 = sbr.rel (%p304) target = $region36
      $region35: #{transformer_forward.26} parent=31 // pred_region
        %p307 = scmp.lt.s32.totalorder %s22, 1
        %s308 = scalar_select %p307, %s22, 1
        %p309 = scmp.lt.s32.totalorder %s23, 3
        %s310 = scalar_select %p309, %s23, 3
        %s311 = smul.addr %s308, 4
        %s312 = sadd.s32 %s310, %s311
        %s313 = smul.addr %s312, 4
        %s314 = scalar_lea.vmem %s0, %s313
      $region36: #{transformer_forward.26} parent=31 // pred_fallthru
        _
      // Predicated region
      $region37: #{transformer_forward.26} parent=31 // pred_check
        %p315 = pneg %p77
      $region38: #{transformer_forward.26} parent=31 // pred_check_branch
        %317 = sbr.rel (%p315) target = $region40
      $region39: #{transformer_forward.26} parent=31 // pred_region
        %p318 = scmp.lt.s32.totalorder %s22, 1
        %s319 = scalar_select %p318, %s22, 1
        %p320 = scmp.lt.s32.totalorder %s23, 3
        %s321 = scalar_select %p320, %s23, 3
        %s322 = smul.addr %s319, 4
        %s323 = sadd.s32 %s321, %s322
        %s324 = smul.addr %s323, 4
        %s325 = scalar_lea.vmem %s1, %s324
      $region40: #{transformer_forward.26} parent=31 // pred_fallthru
        _
      // Predicated region
      $region41: #{transformer_forward.26} parent=31 // pred_check
        %p326 = pneg %p105
      $region42: #{transformer_forward.26} parent=31 // pred_check_branch
        %328 = sbr.rel (%p326) target = $region44
      $region43: #{transformer_forward.26} parent=31 // pred_region
        %p329 = scmp.lt.s32.totalorder %s22, 1
        %s330 = scalar_select %p329, %s22, 1
        %p331 = scmp.lt.s32.totalorder %s23, 3
        %s332 = scalar_select %p331, %s23, 3
        %s333 = smul.addr %s330, 4
        %s334 = sadd.s32 %s332, %s333
        %s335 = smul.addr %s334, 4
        %s336 = scalar_lea.vmem %s2, %s335
      $region44: #{transformer_forward.26} parent=31 // pred_fallthru
        _
      // Predicated region
      $region45: #{transformer_forward.26} parent=31 // pred_check
        %p337 = pneg %p131
      $region46: #{transformer_forward.26} parent=31 // pred_check_branch
        %339 = sbr.rel (%p337) target = $region48
      $region47: #{transformer_forward.26} parent=31 // pred_region
        %p340 = scmp.lt.s32.totalorder %s22, 1
        %s341 = scalar_select %p340, %s22, 1
        %s342 = scalar_lea.vmem %s3, %s341
      $region48: #{transformer_forward.26} parent=31 // pred_fallthru
        _
      // Predicated region
      $region49: #{transformer_forward.26} parent=31 // pred_check
        %p343 = pneg %p157
      $region50: #{transformer_forward.26} parent=31 // pred_check_branch
        %345 = sbr.rel (%p343) target = $region52
      $region51: #{transformer_forward.26} parent=31 // pred_region
        %p346 = scmp.lt.s32.totalorder %s22, 1
        %s347 = scalar_select %p346, %s22, 1
        %s348 = smul.addr %s347, 4
        %s349 = scalar_lea.vmem %s4, %s348
      $region52: #{transformer_forward.26} parent=31 // pred_fallthru
        _
    $region32: #{transformer_forward.26} parent=5 // pred_fallthru
      _
    %p350 = scmp.le.s32.totalorder 1, %s15
    %p351 = scmp.lt.s32.totalorder %s15, 9
    %p352 = pnand %p350, %p351
    %p353 = pneg %p352
    // Predicated region
    $region53: #{transformer_forward.26} parent=5 // pred_check
      _
    $region54: #{transformer_forward.26} parent=5 // pred_check_branch
      %355 = sbr.rel (%p352) target = $region56
    $region55: #{transformer_forward.26} parent=5 // pred_region
      %s356 = ssub.s32 %s15, 1
      %p357 = scmp.lt.s32.totalorder %s24, 1
      %s358 = scalar_select %p357, %s24, 1
      %p359 = scmp.lt.s32.totalorder %s25, 3
      %s360 = scalar_select %p359, %s25, 3
      %s361 = smul.addr %s358, 4
      %s362 = sadd.s32 %s360, %s361
      %s363 = smul.addr %s362, 4
      %s364 = scalar_lea.vmem %s0, %s363
      %p365 = pneg %p55
      %p366 = pneg %p52
      %p367 = scmp.lt.s32.totalorder %s24, 1
      %s368 = scalar_select %p367, %s24, 1
      %p369 = scmp.lt.s32.totalorder %s25, 3
      %s370 = scalar_select %p369, %s25, 3
      %s371 = smul.addr %s368, 4
      %s372 = sadd.s32 %s370, %s371
      %s373 = smul.addr %s372, 4
      %s374 = scalar_lea.vmem %s1, %s373
      %p375 = pneg %p83
      %p376 = pneg %p80
      %p377 = scmp.lt.s32.totalorder %s24, 1
      %s378 = scalar_select %p377, %s24, 1
      %p379 = scmp.lt.s32.totalorder %s25, 3
      %s380 = scalar_select %p379, %s25, 3
      %s381 = smul.addr %s378, 4
      %s382 = sadd.s32 %s380, %s381
      %s383 = smul.addr %s382, 4
      %s384 = scalar_lea.vmem %s2, %s383
      %p385 = pneg %p111
      %p386 = pneg %p108
      %p387 = scmp.lt.s32.totalorder %s24, 1
      %s388 = scalar_select %p387, %s24, 1
      %s389 = scalar_lea.vmem %s3, %s388
      %p390 = pneg %p137
      %p391 = pneg %p134
      %p392 = scmp.lt.s32.totalorder %s24, 1
      %s393 = scalar_select %p392, %s24, 1
      %s394 = smul.addr %s393, 4
      %s395 = scalar_lea.vmem %s4, %s394
      %p396 = pneg %p163
      %p397 = pneg %p160
      %p398 = pneg %p184
      %p399 = pneg %p181
      %p400 = pneg %p205
      %p401 = pneg %p202
      %p402 = pneg %p226
      %p403 = pneg %p223
      %p404 = pneg %p247
      %p405 = pneg %p244
      %p406 = pneg %p273
      %p407 = pneg %p270
      %p408 = scmp.lt.s32.totalorder %s24, 1
      %s409 = scalar_select %p408, %s24, 1
      %s410 = smul.addr %s409, 4
      %s411 = scalar_lea.vmem %s9, %s410
      %p412 = scmp.lt.s32.totalorder %s24, 1
      %s413 = scalar_select %p412, %s24, 1
      %p414 = scmp.lt.s32.totalorder %s25, 3
      %s415 = scalar_select %p414, %s25, 3
      %s416 = smul.addr %s413, 4
      %s417 = sadd.s32 %s415, %s416
      %s418 = smul.addr %s417, 4
      %s419 = scalar_lea.vmem %s0, %s418
      %p420 = scmp.lt.s32.totalorder %s24, 1
      %s421 = scalar_select %p420, %s24, 1
      %p422 = scmp.lt.s32.totalorder %s25, 3
      %s423 = scalar_select %p422, %s25, 3
      %s424 = smul.addr %s421, 4
      %s425 = sadd.s32 %s423, %s424
      %s426 = smul.addr %s425, 4
      %s427 = scalar_lea.vmem %s1, %s426
      %p428 = scmp.lt.s32.totalorder %s24, 1
      %s429 = scalar_select %p428, %s24, 1
      %p430 = scmp.lt.s32.totalorder %s25, 3
      %s431 = scalar_select %p430, %s25, 3
      %s432 = smul.addr %s429, 4
      %s433 = sadd.s32 %s431, %s432
      %s434 = smul.addr %s433, 4
      %s435 = scalar_lea.vmem %s2, %s434
      %p436 = scmp.lt.s32.totalorder %s24, 1
      %s437 = scalar_select %p436, %s24, 1
      %s438 = scalar_lea.vmem %s3, %s437
      %p439 = scmp.lt.s32.totalorder %s24, 1
      %s440 = scalar_select %p439, %s24, 1
      %s441 = smul.addr %s440, 4
      %s442 = scalar_lea.vmem %s4, %s441
      %p443 = scmp.lt.s32.totalorder %s24, 1
      %s444 = scalar_select %p443, %s24, 1
      %s445 = smul.addr %s444, 4
      %s446 = scalar_lea.vmem %s9, %s445
      %v448 = vld [vmem:[%s419] sm:$0xf]
      %v449 = vld [vmem:[%s427] sm:$0xf]
      %v450 = vld [vmem:[%s435] sm:$0xf]
      %vm451 = vcmask 64512
      %v453 = vsel %vm451, %v448, 0
      %v456 = vsel %vm451, %v449, 0
      %458 = vmatprep.subr.bf16.mxu0 0
      %459 = vmatpush1.bf16.xpose.msra.mxu0 0
      %460 = vmatprep.subr.bf16.mxu0 0
      %461 = vmatpush1.bf16.xpose.msra.mxu0 0
      %462 = vmatprep.subr.bf16.mxu0 0
      %463 = vmatpush1.bf16.xpose.msra.mxu0 0
      %464 = vmatprep.subr.bf16.mxu0 0
      %465 = vmatpush1.bf16.xpose.msra.mxu0 0
      %466 = vmatprep.subr.bf16.mxu0 0
      %467 = vmatpush1.bf16.xpose.msra.mxu0 0
      %468 = vmatprep.subr.bf16.mxu0 0
      %469 = vmatpush1.bf16.xpose.msra.mxu0 0
      %470 = vmatprep.subr.bf16.mxu0 0
      %471 = vmatpush1.bf16.xpose.msra.mxu0 0
      %472 = vmatprep.subr.bf16.mxu0 0
      %473 = vmatpush1.bf16.xpose.msra.mxu0 %v456
      %474 = vmatprep.subr.bf16.mxu0 0
      %475 = vmatpush2.bf16.xpose.msra.mxu0 0
      %476 = vmatprep.subr.bf16.mxu0 0
      %477 = vmatpush2.bf16.xpose.msra.mxu0 0
      %478 = vmatprep.subr.bf16.mxu0 0
      %479 = vmatpush2.bf16.xpose.msra.mxu0 0
      %480 = vmatprep.subr.bf16.mxu0 0
      %481 = vmatpush2.bf16.xpose.msra.mxu0 0
      %482 = vmatprep.subr.bf16.mxu0 0
      %483 = vmatpush2.bf16.xpose.msra.mxu0 0
      %484 = vmatprep.subr.bf16.mxu0 0
      %485 = vmatpush2.bf16.xpose.msra.mxu0 0
      %486 = vmatprep.subr.bf16.mxu0 0
      %487 = vmatpush2.bf16.xpose.msra.mxu0 0
      %488 = vmatprep.subr.bf16.mxu0 0
      %489 = vmatpush2.bf16.xpose.msra.mxu0 0
      %490 = vmatprep.mubr.bf16.mxu0 0
      %491 = vmatmul.mubr.bf16.gmra.mxu0 %v453
      %v492 = vpop.f32.mrf.mxu0
      %v493 = vadd.f32 0.0, %v492
      %v494 = vpop.f32.mrf.mxu0
      %v495 = vpop.f32.mrf.mxu0
      %v496 = vpop.f32.mrf.mxu0
      %497 = vdwg.mxu0
      %v498 = vmul.f32 %v493, 0.35355338
      %v499 = vld [vmem:[%s438] sm:$0x1]
      %v501 = vlaneseq
      %v502 = vshrl.u32 %v501, 7
      %v503 = vsub.s32 0, %v502
      %v504 = vrot.slane %v499, %v503
      %v506 = vadd.f32 %v498, %v504
      %v507 = vlaneseq
      %v508 = vshrl.u32 %v507, 7
      %v509 = vlaneseq
      %v510 = vand.u32 %v509, 127
      %vm511 = vcmp.le.s32.totalorder %v510, %v508
      %v512 = vsel %vm511, %v506, -1e+09
      %v513 = vsel %vm451, %v512, -inf
      %514 = vmax.xlane.f32.xlu0 %v513
      %v515 = vpop.xlane.xlu0 %514
      %v516 = vsub.f32 %v512, %v515
      %v517 = vmul.f32 %v516, 1.442695
      %v518 = vpow.pop %v517
      %v519 = vsel %vm451, %v518, 0.0
      %520 = vadd.xlane.f32.xlu0 %v519
      %v521 = vpop.xlane.xlu0 %520
      %v522 = vrcp.pop %v521
      %v523 = vmul.f32 %v518, %v522
      %v524 = vpack.c.bf16 %v523, %v523
      %v526 = vsel %vm451, %v524, 0
      %vm528 = vcmask 1043456
      %v530 = vsel %vm528, %v450, 0
      %532 = vmatprep.subr.bf16.mxu0 0
      %533 = vmatpush1.bf16.msra.mxu0 0
      %534 = vmatprep.subr.bf16.mxu0 0
      %535 = vmatpush1.bf16.msra.mxu0 0
      %536 = vmatprep.subr.bf16.mxu0 0
      %537 = vmatpush1.bf16.msra.mxu0 0
      %538 = vmatprep.subr.bf16.mxu0 0
      %539 = vmatpush1.bf16.msra.mxu0 0
      %540 = vmatprep.subr.bf16.mxu0 0
      %541 = vmatpush1.bf16.msra.mxu0 0
      %542 = vmatprep.subr.bf16.mxu0 0
      %543 = vmatpush1.bf16.msra.mxu0 0
      %544 = vmatprep.subr.bf16.mxu0 0
      %545 = vmatpush1.bf16.msra.mxu0 0
      %546 = vmatprep.subr.bf16.mxu0 0
      %547 = vmatpush1.bf16.msra.mxu0 %v530
      %548 = vmatprep.subr.bf16.mxu0 0
      %549 = vmatpush2.bf16.msra.mxu0 0
      %550 = vmatprep.subr.bf16.mxu0 0
      %551 = vmatpush2.bf16.msra.mxu0 0
      %552 = vmatprep.subr.bf16.mxu0 0
      %553 = vmatpush2.bf16.msra.mxu0 0
      %554 = vmatprep.subr.bf16.mxu0 0
      %555 = vmatpush2.bf16.msra.mxu0 0
      %556 = vmatprep.subr.bf16.mxu0 0
      %557 = vmatpush2.bf16.msra.mxu0 0
      %558 = vmatprep.subr.bf16.mxu0 0
      %559 = vmatpush2.bf16.msra.mxu0 0
      %560 = vmatprep.subr.bf16.mxu0 0
      %561 = vmatpush2.bf16.msra.mxu0 0
      %562 = vmatprep.subr.bf16.mxu0 0
      %563 = vmatpush2.bf16.msra.mxu0 0
      %564 = vmatprep.mubr.bf16.mxu0 0
      %565 = vmatmul.mubr.bf16.gmra.mxu0 %v526
      %v566 = vpop.f32.mrf.mxu0
      %v567 = vadd.f32 0.0, %v566
      %v568 = vpop.f32.mrf.mxu0
      %v569 = vpop.f32.mrf.mxu0
      %v570 = vpop.f32.mrf.mxu0
      %571 = vdwg.mxu0
      %v572 = vpack.c.bf16 %v567, %v567
      %s573 = smul.addr %s25, 4
      %s574 = scalar_lea.vmem [#allocation2], %s573
      %vm575 = vcmask 60416
      %576 = vst.msk [vmem:[%s574] sm:$0xf] %vm575, %v572
      %p577 = scmp.eq.s32.totalorder %s25, 3
      // Predicated region
      $region57: #{transformer_forward.26} parent=55 // pred_check
        %p578 = pneg %p577
      $region58: #{transformer_forward.26} parent=55 // pred_check_branch
        %580 = sbr.rel (%p578) target = $region60
      $region59: #{transformer_forward.26} parent=55 // pred_region
        %v581 = vld [vmem:[#allocation2] sm:$0xf]
        %s582 = scalar_lea.vmem [#allocation2], 4
        %v583 = vld [vmem:[%s582] sm:$0xf]
        %s584 = scalar_lea.vmem [#allocation2], 8
        %v585 = vld [vmem:[%s584] sm:$0xf]
        %s586 = scalar_lea.vmem [#allocation2], 12
        %v587 = vld [vmem:[%s586] sm:$0xf]
        %v589 = vunpack.c.l.b16 %v583
        %v590 = vpack.c.b16 %v589, %v589
        %591 = vrot.lane.b32.xlu0 %v590, 8
        %v592 = vpop.permute.xlu0 %591
        %v594 = vunpack.c.l.b16 %v585
        %v595 = vpack.c.b16 %v594, %v594
        %596 = vrot.lane.b32.xlu0 %v595, 16
        %v597 = vpop.permute.xlu0 %596
        %v599 = vunpack.c.l.b16 %v587
        %v600 = vpack.c.b16 %v599, %v599
        %601 = vrot.lane.b32.xlu0 %v600, 24
        %v602 = vpop.permute.xlu0 %601
        %v605 = vsel %vm451, %v581, %v592
        %vm606 = vcmask 130048
        %v608 = vsel %vm606, %v605, %v597
        %vm609 = vcmask 195584
        %v611 = vsel %vm609, %v608, %v602
        %v612 = vld [vmem:[%s5] sm:$0xf]
        %v613 = vld [vmem:[%s5 + $0x4] sm:$0xf]
        %v614 = vld [vmem:[%s5 + $0x8] sm:$0xf]
        %v615 = vld [vmem:[%s5 + $0xc] sm:$0xf]
        %v616 = vld [vmem:[%s6] sm:$0x1]
        %v618 = vlaneseq
        %v619 = vshrl.u32 %v618, 7
        %v620 = vsub.s32 0, %v619
        %v621 = vrot.slane %v616, %v620
        %v627 = vunpack.c.l.b16 %v612
        %v628 = vunpack.c.l.b16 %v613
        %v629 = vunpack.c.l.b16 %v614
        %v630 = vunpack.c.l.b16 %v615
        %v631 = vpack.c.b16 %v628, %v627
        %v632 = vpack.c.b16 %v630, %v629
        %vm635 = vcmask 261120
        %v636 = vsel %vm635, %v611, 0
        %638 = vmatprep.subr.bf16.mxu0 0
        %639 = vmatpush1.bf16.msra.mxu0 0
        %640 = vmatprep.subr.bf16.mxu0 0
        %641 = vmatpush1.bf16.msra.mxu0 0
        %642 = vmatprep.subr.bf16.mxu0 0
        %643 = vmatpush1.bf16.msra.mxu0 0
        %644 = vmatprep.subr.bf16.mxu0 0
        %645 = vmatpush1.bf16.msra.mxu0 0
        %646 = vmatprep.subr.bf16.mxu0 0
        %647 = vmatpush1.bf16.msra.mxu0 0
        %648 = vmatprep.subr.bf16.mxu0 0
        %649 = vmatpush1.bf16.msra.mxu0 0
        %650 = vmatprep.subr.bf16.mxu0 0
        %651 = vmatpush1.bf16.msra.mxu0 %v632
        %652 = vmatprep.subr.bf16.mxu0 0
        %653 = vmatpush1.bf16.msra.mxu0 %v631
        %654 = vmatprep.subr.bf16.mxu0 0
        %655 = vmatpush2.bf16.msra.mxu0 0
        %656 = vmatprep.subr.bf16.mxu0 0
        %657 = vmatpush2.bf16.msra.mxu0 0
        %658 = vmatprep.subr.bf16.mxu0 0
        %659 = vmatpush2.bf16.msra.mxu0 0
        %660 = vmatprep.subr.bf16.mxu0 0
        %661 = vmatpush2.bf16.msra.mxu0 0
        %662 = vmatprep.subr.bf16.mxu0 0
        %663 = vmatpush2.bf16.msra.mxu0 0
        %664 = vmatprep.subr.bf16.mxu0 0
        %665 = vmatpush2.bf16.msra.mxu0 0
        %666 = vmatprep.subr.bf16.mxu0 0
        %667 = vmatpush2.bf16.msra.mxu0 0
        %668 = vmatprep.subr.bf16.mxu0 0
        %669 = vmatpush2.bf16.msra.mxu0 0
        %670 = vmatprep.mubr.bf16.mxu0 0
        %671 = vmatmul.mubr.bf16.gmra.mxu0 %v636
        %v672 = vpop.f32.mrf.mxu0
        %v673 = vadd.f32 %v621, %v672
        %v674 = vpop.f32.mrf.mxu0
        %v675 = vpop.f32.mrf.mxu0
        %v676 = vpop.f32.mrf.mxu0
        %677 = vdwg.mxu0
        %v678 = vld [vmem:[%s442] sm:$0xf]
        %v679 = vunpack.c.l.bf16 %v678
        %v680 = vadd.f32 %v673, %v679
        %v681 = vsel %vm635, %v680, 0.0
        %682 = vadd.xlane.f32.xlu0 %v681
        %v683 = vpop.xlane.xlu0 %682
        %v684 = vrcp.pop 32.0
        %v685 = vmul.f32 %v683, %v684
        %v686 = vsub.f32 %v680, %v685
        %v687 = vmul.f32 %v686, %v686
        %v688 = vsel %vm635, %v687, 0.0
        %689 = vadd.xlane.f32.xlu0 %v688
        %v690 = vpop.xlane.xlu0 %689
        %v691 = vmul.f32 %v690, %v684
        %v692 = vadd.f32 %v691, 1e-05
        %v693 = vrsqrt.pop %v692
        %v694 = vmul.f32 %v686, %v693
        %v695 = vld [vmem:[%s7] sm:$0x1]
        %v697 = vlaneseq
        %v698 = vshrl.u32 %v697, 7
        %v699 = vsub.s32 0, %v698
        %v700 = vrot.slane %v695, %v699
        %v702 = vmul.f32 %v694, %v700
        %v703 = vld [vmem:[%s8] sm:$0x1]
        %v705 = vlaneseq
        %v706 = vshrl.u32 %v705, 7
        %v707 = vsub.s32 0, %v706
        %v708 = vrot.slane %v703, %v707
        %v710 = vadd.f32 %v702, %v708
        %v711 = vpack.c.bf16 %v710, %v710
        %vm712 = vcmask 257024
        %713 = vst.msk [vmem:[%s446] sm:$0xf] %vm712, %v711
      $region60: #{transformer_forward.26} parent=55 // pred_fallthru
        _
      %p714 = scmp.lt.s32.totalorder %s24, 1
      %s715 = scalar_select %p714, %s24, 1
      %s716 = smul.addr %s715, 4
      %s717 = scalar_lea.vmem %s9, %s716
      // Predicated region
      $region61: #{transformer_forward.26} parent=55 // pred_check
        %p718 = pneg %p270
      $region62: #{transformer_forward.26} parent=55 // pred_check_branch
        %720 = sbr.rel (%p718) target = $region64
      $region63: #{transformer_forward.26} parent=55 // pred_region
        _
      $region64: #{transformer_forward.26} parent=55 // pred_fallthru
        _
    $region56: #{transformer_forward.26} parent=5 // pred_fallthru
      _
    %p721 = scmp.le.s32.totalorder 2, %s15
    // Predicated region
    $region65: #{transformer_forward.26} parent=5 // pred_check
      %p722 = pneg %p721
    $region66: #{transformer_forward.26} parent=5 // pred_check_branch
      %724 = sbr.rel (%p722) target = $region68
    $region67: #{transformer_forward.26} parent=5 // pred_region
      %s725 = ssub.s32 %s15, 2
      // Predicated region
      $region69: #{transformer_forward.26} parent=67 // pred_check
        %p726 = pneg %p276
      $region70: #{transformer_forward.26} parent=67 // pred_check_branch
        %728 = sbr.rel (%p726) target = $region72
      $region71: #{transformer_forward.26} parent=67 // pred_region
        %p729 = scmp.lt.s32.totalorder %s26, 1
        %s730 = scalar_select %p729, %s26, 1
        %s731 = smul.addr %s730, 4
        %s732 = scalar_lea.vmem %s9, %s731
      $region72: #{transformer_forward.26} parent=67 // pred_fallthru
        _
    $region68: #{transformer_forward.26} parent=5 // pred_fallthru
      _
  $region6: #{transformer_forward.26} parent=0 // loop_footer
    %s19 = sadd.s32 1, %s15
  $region7: #{transformer_forward.26} parent=0 // loop_footer_branch
    %14 = sbr.rel target = $region3
  $region8: #{transformer_forward.26} parent=0 // loop_exit
    _

// kernel: transformer_forward.20
$region0: #{transformer_forward.20}
  #allocation0 [shape = 'u32[]', space=smem, size = 0x4, offset = 0x4, fixed_abs, tag = 'smem constant byte address 0x4 - core index']
  #allocation1 [shape = 'u32[144,128]{1,0:T(1,128)}', space=vmem, size = 0x12000, scoped, tag = 'internal scratch']
  #allocation2 [shape = 'bf16[4,8,8]{2,1,0:T(8,128)(2,1)}', space=vmem, size = 0x2000, scoped, tag = 'scratch operand']
  %s0 = inlined_call_operand.vmem [shape: bf16[2,4,8,8], index: 0, kind: input, shape index: {}]
  %s1 = inlined_call_operand.vmem [shape: bf16[2,4,8,8], index: 1, kind: input, shape index: {}]
  %s2 = inlined_call_operand.vmem [shape: bf16[2,4,8,8], index: 2, kind: input, shape index: {}]
  %s3 = inlined_call_operand.vmem [shape: f32[2,1,8], index: 3, kind: input, shape index: {}]
  %s4 = inlined_call_operand.vmem [shape: bf16[2,8,32], index: 4, kind: input, shape index: {}]
  %s5 = inlined_call_operand.vmem [shape: bf16[32,32], index: 5, kind: input, shape index: {}]
  %s6 = inlined_call_operand.vmem [shape: f32[1,32], index: 6, kind: input, shape index: {}]
  %s7 = inlined_call_operand.vmem [shape: f32[1,32], index: 7, kind: input, shape index: {}]
  %s8 = inlined_call_operand.vmem [shape: f32[1,32], index: 8, kind: input, shape index: {}]
  %s9 = inlined_call_operand.vmem [shape: bf16[2,8,32], index: 9, kind: output, shape index: {}]
  %s10 = sld [smem:[#allocation0]]
  $region73: #{transformer_forward.20} parent=0
    _
  %s12 = ssub.s32 1, %s10
  %s13 = scalar_select 0, %s12, %s10
  loop: start=0, step=1, limit=10
  $region2: #{transformer_forward.20} parent=0 // loop_pre_header
    _
  $region3: #{transformer_forward.20} parent=0 // loop_header
    %s15 = sphi 0, %s19
    %p16 = scmp.ge.s32.totalorder %s15, 10
    %s22 = sphi 0, %s34
    %s23 = sphi 0, %s30
    %s24 = sphi 0, %s22
    %s25 = sphi 0, %s23
    %s26 = sphi 0, %s24
    %s27 = sphi 0, %s25
    %s39 = sphi 0, %s41
    %s42 = sphi 0, %s39
    %s43 = sphi 0, %s42
    %s59 = sphi 0, %s43
    %s67 = sphi 0, %s69
    %s70 = sphi 0, %s67
    %s71 = sphi 0, %s70
    %s87 = sphi 0, %s71
    %s95 = sphi 0, %s97
    %s98 = sphi 0, %s95
    %s99 = sphi 0, %s98
    %s115 = sphi 0, %s99
    %s121 = sphi 0, %s123
    %s124 = sphi 0, %s121
    %s125 = sphi 0, %s124
    %s141 = sphi 0, %s125
    %s147 = sphi 0, %s149
    %s150 = sphi 0, %s147
    %s151 = sphi 0, %s150
    %s167 = sphi 0, %s151
    %s171 = sphi 0, %s171
    %s173 = sphi 0, %s171
    %s174 = sphi 0, %s173
    %s188 = sphi 0, %s174
    %s192 = sphi 0, %s192
    %s194 = sphi 0, %s192
    %s195 = sphi 0, %s194
    %s209 = sphi 0, %s195
    %s213 = sphi 0, %s213
    %s215 = sphi 0, %s213
    %s216 = sphi 0, %s215
    %s230 = sphi 0, %s216
    %s234 = sphi 0, %s234
    %s236 = sphi 0, %s234
    %s237 = sphi 0, %s236
    %s251 = sphi 0, %s237
    %s257 = sphi 0, %s259
    %s260 = sphi 0, %s257
    %s261 = sphi 0, %s260
    %s277 = sphi 0, %s261
  $region4: #{transformer_forward.20} parent=0 // loop_header_branch
    %18 = sbr.rel (%p16) target = $region8
  $region5: #{transformer_forward.20} parent=0 // loop_body
    %s20 = ssub.s32 %s15, 1
    %s21 = ssub.s32 %s15, 2
    %s28 = sadd.s32 1, %s23
    %p29 = scmp.ge.s32.totalorder %s28, 4
    %s30 = scalar_select %p29, 0, %s28
    %s31 = sadd.s32 1, %s22
    %s32 = scalar_select %p29, %s31, %s22
    %p33 = scmp.ge.s32.totalorder %s32, 2
    %s34 = scalar_select %p33, 0, %s32
    %s35 = ssub.s32 %s22, %s34
    %s36 = ssub.s32 %s23, %s30
    %s37 = sor.u32 %s35, %s36
    %p38 = scmp.eq.s32.totalorder %s37, 0
    %s40 = sadd.s32 %s39, 1
    %s41 = scalar_select %p38, %s39, %s40
    %p44 = pneg %p38
    %p45 = scmp.eq.s32.totalorder %s15, 7
    %p46 = por %p44, %p45
    %p47 = scmp.ne.s32.totalorder %s39, %s42
    %p48 = scmp.eq.s32.totalorder %s15, 0
    %p49 = por %p47, %p48
    %p50 = scmp.ne.s32.totalorder %s39, %s42
    %p51 = scmp.eq.s32.totalorder %s20, 7
    %p52 = por %p50, %p51
    %p53 = scmp.ne.s32.totalorder %s42, %s43
    %p54 = scmp.eq.s32.totalorder %s20, 0
    %p55 = por %p53, %p54
    %p56 = scmp.ne.s32.totalorder %s42, %s43
    %p57 = scmp.eq.s32.totalorder %s21, 7
    %p58 = por %p56, %p57
    %p60 = scmp.ne.s32.totalorder %s43, %s59
    %p61 = scmp.eq.s32.totalorder %s21, 0
    %p62 = por %p60, %p61
    %s63 = ssub.s32 %s22, %s34
    %s64 = ssub.s32 %s23, %s30
    %s65 = sor.u32 %s63, %s64
    %p66 = scmp.eq.s32.totalorder %s65, 0
    %s68 = sadd.s32 %s67, 1
    %s69 = scalar_select %p66, %s67, %s68
    %p72 = pneg %p66
    %p73 = scmp.eq.s32.totalorder %s15, 7
    %p74 = por %p72, %p73
    %p75 = scmp.ne.s32.totalorder %s67, %s70
    %p76 = scmp.eq.s32.totalorder %s15, 0
    %p77 = por %p75, %p76
    %p78 = scmp.ne.s32.totalorder %s67, %s70
    %p79 = scmp.eq.s32.totalorder %s20, 7
    %p80 = por %p78, %p79
    %p81 = scmp.ne.s32.totalorder %s70, %s71
    %p82 = scmp.eq.s32.totalorder %s20, 0
    %p83 = por %p81, %p82
    %p84 = scmp.ne.s32.totalorder %s70, %s71
    %p85 = scmp.eq.s32.totalorder %s21, 7
    %p86 = por %p84, %p85
    %p88 = scmp.ne.s32.totalorder %s71, %s87
    %p89 = scmp.eq.s32.totalorder %s21, 0
    %p90 = por %p88, %p89
    %s91 = ssub.s32 %s22, %s34
    %s92 = ssub.s32 %s23, %s30
    %s93 = sor.u32 %s91, %s92
    %p94 = scmp.eq.s32.totalorder %s93, 0
    %s96 = sadd.s32 %s95, 1
    %s97 = scalar_select %p94, %s95, %s96
    %p100 = pneg %p94
    %p101 = scmp.eq.s32.totalorder %s15, 7
    %p102 = por %p100, %p101
    %p103 = scmp.ne.s32.totalorder %s95, %s98
    %p104 = scmp.eq.s32.totalorder %s15, 0
    %p105 = por %p103, %p104
    %p106 = scmp.ne.s32.totalorder %s95, %s98
    %p107 = scmp.eq.s32.totalorder %s20, 7
    %p108 = por %p106, %p107
    %p109 = scmp.ne.s32.totalorder %s98, %s99
    %p110 = scmp.eq.s32.totalorder %s20, 0
    %p111 = por %p109, %p110
    %p112 = scmp.ne.s32.totalorder %s98, %s99
    %p113 = scmp.eq.s32.totalorder %s21, 7
    %p114 = por %p112, %p113
    %p116 = scmp.ne.s32.totalorder %s99, %s115
    %p117 = scmp.eq.s32.totalorder %s21, 0
    %p118 = por %p116, %p117
    %s119 = ssub.s32 %s22, %s34
    %p120 = scmp.eq.s32.totalorder %s119, 0
    %s122 = sadd.s32 %s121, 1
    %s123 = scalar_select %p120, %s121, %s122
    %p126 = pneg %p120
    %p127 = scmp.eq.s32.totalorder %s15, 7
    %p128 = por %p126, %p127
    %p129 = scmp.ne.s32.totalorder %s121, %s124
    %p130 = scmp.eq.s32.totalorder %s15, 0
    %p131 = por %p129, %p130
    %p132 = scmp.ne.s32.totalorder %s121, %s124
    %p133 = scmp.eq.s32.totalorder %s20, 7
    %p134 = por %p132, %p133
    %p135 = scmp.ne.s32.totalorder %s124, %s125
    %p136 = scmp.eq.s32.totalorder %s20, 0
    %p137 = por %p135, %p136
    %p138 = scmp.ne.s32.totalorder %s124, %s125
    %p139 = scmp.eq.s32.totalorder %s21, 7
    %p140 = por %p138, %p139
    %p142 = scmp.ne.s32.totalorder %s125, %s141
    %p143 = scmp.eq.s32.totalorder %s21, 0
    %p144 = por %p142, %p143
    %s145 = ssub.s32 %s22, %s34
    %p146 = scmp.eq.s32.totalorder %s145, 0
    %s148 = sadd.s32 %s147, 1
    %s149 = scalar_select %p146, %s147, %s148
    %p152 = pneg %p146
    %p153 = scmp.eq.s32.totalorder %s15, 7
    %p154 = por %p152, %p153
    %p155 = scmp.ne.s32.totalorder %s147, %s150
    %p156 = scmp.eq.s32.totalorder %s15, 0
    %p157 = por %p155, %p156
    %p158 = scmp.ne.s32.totalorder %s147, %s150
    %p159 = scmp.eq.s32.totalorder %s20, 7
    %p160 = por %p158, %p159
    %p161 = scmp.ne.s32.totalorder %s150, %s151
    %p162 = scmp.eq.s32.totalorder %s20, 0
    %p163 = por %p161, %p162
    %p164 = scmp.ne.s32.totalorder %s150, %s151
    %p165 = scmp.eq.s32.totalorder %s21, 7
    %p166 = por %p164, %p165
    %p168 = scmp.ne.s32.totalorder %s151, %s167
    %p169 = scmp.eq.s32.totalorder %s21, 0
    %p170 = por %p168, %p169
    %s172 = sadd.s32 %s171, 1
    %p175 = scmp.eq.s32.totalorder %s15, 7
    %p176 = scmp.ne.s32.totalorder %s171, %s173
    %p177 = scmp.eq.s32.totalorder %s15, 0
    %p178 = por %p176, %p177
    %p179 = scmp.ne.s32.totalorder %s171, %s173
    %p180 = scmp.eq.s32.totalorder %s20, 7
    %p181 = por %p179, %p180
    %p182 = scmp.ne.s32.totalorder %s173, %s174
    %p183 = scmp.eq.s32.totalorder %s20, 0
    %p184 = por %p182, %p183
    %p185 = scmp.ne.s32.totalorder %s173, %s174
    %p186 = scmp.eq.s32.totalorder %s21, 7
    %p187 = por %p185, %p186
    %p189 = scmp.ne.s32.totalorder %s174, %s188
    %p190 = scmp.eq.s32.totalorder %s21, 0
    %p191 = por %p189, %p190
    %s193 = sadd.s32 %s192, 1
    %p196 = scmp.eq.s32.totalorder %s15, 7
    %p197 = scmp.ne.s32.totalorder %s192, %s194
    %p198 = scmp.eq.s32.totalorder %s15, 0
    %p199 = por %p197, %p198
    %p200 = scmp.ne.s32.totalorder %s192, %s194
    %p201 = scmp.eq.s32.totalorder %s20, 7
    %p202 = por %p200, %p201
    %p203 = scmp.ne.s32.totalorder %s194, %s195
    %p204 = scmp.eq.s32.totalorder %s20, 0
    %p205 = por %p203, %p204
    %p206 = scmp.ne.s32.totalorder %s194, %s195
    %p207 = scmp.eq.s32.totalorder %s21, 7
    %p208 = por %p206, %p207
    %p210 = scmp.ne.s32.totalorder %s195, %s209
    %p211 = scmp.eq.s32.totalorder %s21, 0
    %p212 = por %p210, %p211
    %s214 = sadd.s32 %s213, 1
    %p217 = scmp.eq.s32.totalorder %s15, 7
    %p218 = scmp.ne.s32.totalorder %s213, %s215
    %p219 = scmp.eq.s32.totalorder %s15, 0
    %p220 = por %p218, %p219
    %p221 = scmp.ne.s32.totalorder %s213, %s215
    %p222 = scmp.eq.s32.totalorder %s20, 7
    %p223 = por %p221, %p222
    %p224 = scmp.ne.s32.totalorder %s215, %s216
    %p225 = scmp.eq.s32.totalorder %s20, 0
    %p226 = por %p224, %p225
    %p227 = scmp.ne.s32.totalorder %s215, %s216
    %p228 = scmp.eq.s32.totalorder %s21, 7
    %p229 = por %p227, %p228
    %p231 = scmp.ne.s32.totalorder %s216, %s230
    %p232 = scmp.eq.s32.totalorder %s21, 0
    %p233 = por %p231, %p232
    %s235 = sadd.s32 %s234, 1
    %p238 = scmp.eq.s32.totalorder %s15, 7
    %p239 = scmp.ne.s32.totalorder %s234, %s236
    %p240 = scmp.eq.s32.totalorder %s15, 0
    %p241 = por %p239, %p240
    %p242 = scmp.ne.s32.totalorder %s234, %s236
    %p243 = scmp.eq.s32.totalorder %s20, 7
    %p244 = por %p242, %p243
    %p245 = scmp.ne.s32.totalorder %s236, %s237
    %p246 = scmp.eq.s32.totalorder %s20, 0
    %p247 = por %p245, %p246
    %p248 = scmp.ne.s32.totalorder %s236, %s237
    %p249 = scmp.eq.s32.totalorder %s21, 7
    %p250 = por %p248, %p249
    %p252 = scmp.ne.s32.totalorder %s237, %s251
    %p253 = scmp.eq.s32.totalorder %s21, 0
    %p254 = por %p252, %p253
    %s255 = ssub.s32 %s22, %s34
    %p256 = scmp.eq.s32.totalorder %s255, 0
    %s258 = sadd.s32 %s257, 1
    %s259 = scalar_select %p256, %s257, %s258
    %p262 = pneg %p256
    %p263 = scmp.eq.s32.totalorder %s15, 7
    %p264 = por %p262, %p263
    %p265 = scmp.ne.s32.totalorder %s257, %s260
    %p266 = scmp.eq.s32.totalorder %s15, 0
    %p267 = por %p265, %p266
    %p268 = scmp.ne.s32.totalorder %s257, %s260
    %p269 = scmp.eq.s32.totalorder %s20, 7
    %p270 = por %p268, %p269
    %p271 = scmp.ne.s32.totalorder %s260, %s261
    %p272 = scmp.eq.s32.totalorder %s20, 0
    %p273 = por %p271, %p272
    %p274 = scmp.ne.s32.totalorder %s260, %s261
    %p275 = scmp.eq.s32.totalorder %s21, 7
    %p276 = por %p274, %p275
    %p278 = scmp.ne.s32.totalorder %s261, %s277
    %p279 = scmp.eq.s32.totalorder %s21, 0
    %p280 = por %p278, %p279
    %p281 = scmp.le.s32.totalorder 1, %s15
    %p282 = scmp.lt.s32.totalorder %s15, 9
    %p283 = pnand %p281, %p282
    %p284 = pneg %p283
    // Predicated region
    $region9: #{transformer_forward.20} parent=5 // pred_check
      _
    $region10: #{transformer_forward.20} parent=5 // pred_check_branch
      %286 = sbr.rel (%p283) target = $region12
    $region11: #{transformer_forward.20} parent=5 // pred_region
      %s287 = ssub.s32 %s15, 1
      // Predicated region
      $region13: #{transformer_forward.20} parent=11 // pred_check
        %p288 = pneg %p184
      $region14: #{transformer_forward.20} parent=11 // pred_check_branch
        %290 = sbr.rel (%p288) target = $region16
      $region15: #{transformer_forward.20} parent=11 // pred_region
        _
      $region16: #{transformer_forward.20} parent=11 // pred_fallthru
        _
      // Predicated region
      $region17: #{transformer_forward.20} parent=11 // pred_check
        %p291 = pneg %p205
      $region18: #{transformer_forward.20} parent=11 // pred_check_branch
        %293 = sbr.rel (%p291) target = $region20
      $region19: #{transformer_forward.20} parent=11 // pred_region
        _
      $region20: #{transformer_forward.20} parent=11 // pred_fallthru
        _
      // Predicated region
      $region21: #{transformer_forward.20} parent=11 // pred_check
        %p294 = pneg %p226
      $region22: #{transformer_forward.20} parent=11 // pred_check_branch
        %296 = sbr.rel (%p294) target = $region24
      $region23: #{transformer_forward.20} parent=11 // pred_region
        _
      $region24: #{transformer_forward.20} parent=11 // pred_fallthru
        _
      // Predicated region
      $region25: #{transformer_forward.20} parent=11 // pred_check
        %p297 = pneg %p247
      $region26: #{transformer_forward.20} parent=11 // pred_check_branch
        %299 = sbr.rel (%p297) target = $region28
      $region27: #{transformer_forward.20} parent=11 // pred_region
        _
      $region28: #{transformer_forward.20} parent=11 // pred_fallthru
        _
    $region12: #{transformer_forward.20} parent=5 // pred_fallthru
      _
    %p300 = scmp.lt.s32.totalorder %s15, 8
    // Predicated region
    $region29: #{transformer_forward.20} parent=5 // pred_check
      %p301 = pneg %p300
    $region30: #{transformer_forward.20} parent=5 // pred_check_branch
      %303 = sbr.rel (%p301) target = $region32
    $region31: #{transformer_forward.20} parent=5 // pred_region
      // Predicated region
      $region33: #{transformer_forward.20} parent=31 // pred_check
        %p304 = pneg %p49
      $region34: #{transformer_forward.20} parent=31 // pred_check_branch
        %306 = sbr.rel (%p304) target = $region36
      $region35: #{transformer_forward.20} parent=31 // pred_region
        %p307 = scmp.lt.s32.totalorder %s22, 1
        %s308 = scalar_select %p307, %s22, 1
        %p309 = scmp.lt.s32.totalorder %s23, 3
        %s310 = scalar_select %p309, %s23, 3
        %s311 = smul.addr %s308, 4
        %s312 = sadd.s32 %s310, %s311
        %s313 = smul.addr %s312, 4
        %s314 = scalar_lea.vmem %s0, %s313
      $region36: #{transformer_forward.20} parent=31 // pred_fallthru
        _
      // Predicated region
      $region37: #{transformer_forward.20} parent=31 // pred_check
        %p315 = pneg %p77
      $region38: #{transformer_forward.20} parent=31 // pred_check_branch
        %317 = sbr.rel (%p315) target = $region40
      $region39: #{transformer_forward.20} parent=31 // pred_region
        %p318 = scmp.lt.s32.totalorder %s22, 1
        %s319 = scalar_select %p318, %s22, 1
        %p320 = scmp.lt.s32.totalorder %s23, 3
        %s321 = scalar_select %p320, %s23, 3
        %s322 = smul.addr %s319, 4
        %s323 = sadd.s32 %s321, %s322
        %s324 = smul.addr %s323, 4
        %s325 = scalar_lea.vmem %s1, %s324
      $region40: #{transformer_forward.20} parent=31 // pred_fallthru
        _
      // Predicated region
      $region41: #{transformer_forward.20} parent=31 // pred_check
        %p326 = pneg %p105
      $region42: #{transformer_forward.20} parent=31 // pred_check_branch
        %328 = sbr.rel (%p326) target = $region44
      $region43: #{transformer_forward.20} parent=31 // pred_region
        %p329 = scmp.lt.s32.totalorder %s22, 1
        %s330 = scalar_select %p329, %s22, 1
        %p331 = scmp.lt.s32.totalorder %s23, 3
        %s332 = scalar_select %p331, %s23, 3
        %s333 = smul.addr %s330, 4
        %s334 = sadd.s32 %s332, %s333
        %s335 = smul.addr %s334, 4
        %s336 = scalar_lea.vmem %s2, %s335
      $region44: #{transformer_forward.20} parent=31 // pred_fallthru
        _
      // Predicated region
      $region45: #{transformer_forward.20} parent=31 // pred_check
        %p337 = pneg %p131
      $region46: #{transformer_forward.20} parent=31 // pred_check_branch
        %339 = sbr.rel (%p337) target = $region48
      $region47: #{transformer_forward.20} parent=31 // pred_region
        %p340 = scmp.lt.s32.totalorder %s22, 1
        %s341 = scalar_select %p340, %s22, 1
        %s342 = scalar_lea.vmem %s3, %s341
      $region48: #{transformer_forward.20} parent=31 // pred_fallthru
        _
      // Predicated region
      $region49: #{transformer_forward.20} parent=31 // pred_check
        %p343 = pneg %p157
      $region50: #{transformer_forward.20} parent=31 // pred_check_branch
        %345 = sbr.rel (%p343) target = $region52
      $region51: #{transformer_forward.20} parent=31 // pred_region
        %p346 = scmp.lt.s32.totalorder %s22, 1
        %s347 = scalar_select %p346, %s22, 1
        %s348 = smul.addr %s347, 4
        %s349 = scalar_lea.vmem %s4, %s348
      $region52: #{transformer_forward.20} parent=31 // pred_fallthru
        _
    $region32: #{transformer_forward.20} parent=5 // pred_fallthru
      _
    %p350 = scmp.le.s32.totalorder 1, %s15
    %p351 = scmp.lt.s32.totalorder %s15, 9
    %p352 = pnand %p350, %p351
    %p353 = pneg %p352
    // Predicated region
    $region53: #{transformer_forward.20} parent=5 // pred_check
      _
    $region54: #{transformer_forward.20} parent=5 // pred_check_branch
      %355 = sbr.rel (%p352) target = $region56
    $region55: #{transformer_forward.20} parent=5 // pred_region
      %s356 = ssub.s32 %s15, 1
      %p357 = scmp.lt.s32.totalorder %s24, 1
      %s358 = scalar_select %p357, %s24, 1
      %p359 = scmp.lt.s32.totalorder %s25, 3
      %s360 = scalar_select %p359, %s25, 3
      %s361 = smul.addr %s358, 4
      %s362 = sadd.s32 %s360, %s361
      %s363 = smul.addr %s362, 4
      %s364 = scalar_lea.vmem %s0, %s363
      %p365 = pneg %p55
      %p366 = pneg %p52
      %p367 = scmp.lt.s32.totalorder %s24, 1
      %s368 = scalar_select %p367, %s24, 1
      %p369 = scmp.lt.s32.totalorder %s25, 3
      %s370 = scalar_select %p369, %s25, 3
      %s371 = smul.addr %s368, 4
      %s372 = sadd.s32 %s370, %s371
      %s373 = smul.addr %s372, 4
      %s374 = scalar_lea.vmem %s1, %s373
      %p375 = pneg %p83
      %p376 = pneg %p80
      %p377 = scmp.lt.s32.totalorder %s24, 1
      %s378 = scalar_select %p377, %s24, 1
      %p379 = scmp.lt.s32.totalorder %s25, 3
      %s380 = scalar_select %p379, %s25, 3
      %s381 = smul.addr %s378, 4
      %s382 = sadd.s32 %s380, %s381
      %s383 = smul.addr %s382, 4
      %s384 = scalar_lea.vmem %s2, %s383
      %p385 = pneg %p111
      %p386 = pneg %p108
      %p387 = scmp.lt.s32.totalorder %s24, 1
      %s388 = scalar_select %p387, %s24, 1
      %s389 = scalar_lea.vmem %s3, %s388
      %p390 = pneg %p137
      %p391 = pneg %p134
      %p392 = scmp.lt.s32.totalorder %s24, 1
      %s393 = scalar_select %p392, %s24, 1
      %s394 = smul.addr %s393, 4
      %s395 = scalar_lea.vmem %s4, %s394
      %p396 = pneg %p163
      %p397 = pneg %p160
      %p398 = pneg %p184
      %p399 = pneg %p181
      %p400 = pneg %p205
      %p401 = pneg %p202
      %p402 = pneg %p226
      %p403 = pneg %p223
      %p404 = pneg %p247
      %p405 = pneg %p244
      %p406 = pneg %p273
      %p407 = pneg %p270
      %p408 = scmp.lt.s32.totalorder %s24, 1
      %s409 = scalar_select %p408, %s24, 1
      %s410 = smul.addr %s409, 4
      %s411 = scalar_lea.vmem %s9, %s410
      %p412 = scmp.lt.s32.totalorder %s24, 1
      %s413 = scalar_select %p412, %s24, 1
      %p414 = scmp.lt.s32.totalorder %s25, 3
      %s415 = scalar_select %p414, %s25, 3
      %s416 = smul.addr %s413, 4
      %s417 = sadd.s32 %s415, %s416
      %s418 = smul.addr %s417, 4
      %s419 = scalar_lea.vmem %s0, %s418
      %p420 = scmp.lt.s32.totalorder %s24, 1
      %s421 = scalar_select %p420, %s24, 1
      %p422 = scmp.lt.s32.totalorder %s25, 3
      %s423 = scalar_select %p422, %s25, 3
      %s424 = smul.addr %s421, 4
      %s425 = sadd.s32 %s423, %s424
      %s426 = smul.addr %s425, 4
      %s427 = scalar_lea.vmem %s1, %s426
      %p428 = scmp.lt.s32.totalorder %s24, 1
      %s429 = scalar_select %p428, %s24, 1
      %p430 = scmp.lt.s32.totalorder %s25, 3
      %s431 = scalar_select %p430, %s25, 3
      %s432 = smul.addr %s429, 4
      %s433 = sadd.s32 %s431, %s432
      %s434 = smul.addr %s433, 4
      %s435 = scalar_lea.vmem %s2, %s434
      %p436 = scmp.lt.s32.totalorder %s24, 1
      %s437 = scalar_select %p436, %s24, 1
      %s438 = scalar_lea.vmem %s3, %s437
      %p439 = scmp.lt.s32.totalorder %s24, 1
      %s440 = scalar_select %p439, %s24, 1
      %s441 = smul.addr %s440, 4
      %s442 = scalar_lea.vmem %s4, %s441
      %p443 = scmp.lt.s32.totalorder %s24, 1
      %s444 = scalar_select %p443, %s24, 1
      %s445 = smul.addr %s444, 4
      %s446 = scalar_lea.vmem %s9, %s445
      %v448 = vld [vmem:[%s419] sm:$0xf]
      %v449 = vld [vmem:[%s427] sm:$0xf]
      %v450 = vld [vmem:[%s435] sm:$0xf]
      %vm451 = vcmask 64512
      %v453 = vsel %vm451, %v448, 0
      %v456 = vsel %vm451, %v449, 0
      %458 = vmatprep.subr.bf16.mxu0 0
      %459 = vmatpush1.bf16.xpose.msra.mxu0 0
      %460 = vmatprep.subr.bf16.mxu0 0
      %461 = vmatpush1.bf16.xpose.msra.mxu0 0
      %462 = vmatprep.subr.bf16.mxu0 0
      %463 = vmatpush1.bf16.xpose.msra.mxu0 0
      %464 = vmatprep.subr.bf16.mxu0 0
      %465 = vmatpush1.bf16.xpose.msra.mxu0 0
      %466 = vmatprep.subr.bf16.mxu0 0
      %467 = vmatpush1.bf16.xpose.msra.mxu0 0
      %468 = vmatprep.subr.bf16.mxu0 0
      %469 = vmatpush1.bf16.xpose.msra.mxu0 0
      %470 = vmatprep.subr.bf16.mxu0 0
      %471 = vmatpush1.bf16.xpose.msra.mxu0 0
      %472 = vmatprep.subr.bf16.mxu0 0
      %473 = vmatpush1.bf16.xpose.msra.mxu0 %v456
      %474 = vmatprep.subr.bf16.mxu0 0
      %475 = vmatpush2.bf16.xpose.msra.mxu0 0
      %476 = vmatprep.subr.bf16.mxu0 0
      %477 = vmatpush2.bf16.xpose.msra.mxu0 0
      %478 = vmatprep.subr.bf16.mxu0 0
      %479 = vmatpush2.bf16.xpose.msra.mxu0 0
      %480 = vmatprep.subr.bf16.mxu0 0
      %481 = vmatpush2.bf16.xpose.msra.mxu0 0
      %482 = vmatprep.subr.bf16.mxu0 0
      %483 = vmatpush2.bf16.xpose.msra.mxu0 0
      %484 = vmatprep.subr.bf16.mxu0 0
      %485 = vmatpush2.bf16.xpose.msra.mxu0 0
      %486 = vmatprep.subr.bf16.mxu0 0
      %487 = vmatpush2.bf16.xpose.msra.mxu0 0
      %488 = vmatprep.subr.bf16.mxu0 0
      %489 = vmatpush2.bf16.xpose.msra.mxu0 0
      %490 = vmatprep.mubr.bf16.mxu0 0
      %491 = vmatmul.mubr.bf16.gmra.mxu0 %v453
      %v492 = vpop.f32.mrf.mxu0
      %v493 = vadd.f32 0.0, %v492
      %v494 = vpop.f32.mrf.mxu0
      %v495 = vpop.f32.mrf.mxu0
      %v496 = vpop.f32.mrf.mxu0
      %497 = vdwg.mxu0
      %v498 = vmul.f32 %v493, 0.35355338
      %v499 = vld [vmem:[%s438] sm:$0x1]
      %v501 = vlaneseq
      %v502 = vshrl.u32 %v501, 7
      %v503 = vsub.s32 0, %v502
      %v504 = vrot.slane %v499, %v503
      %v506 = vadd.f32 %v498, %v504
      %v507 = vsel %vm451, %v506, -inf
      %508 = vmax.xlane.f32.xlu0 %v507
      %v509 = vpop.xlane.xlu0 %508
      %v510 = vsub.f32 %v506, %v509
      %v511 = vmul.f32 %v510, 1.442695
      %v512 = vpow.pop %v511
      %v513 = vsel %vm451, %v512, 0.0
      %514 = vadd.xlane.f32.xlu0 %v513
      %v515 = vpop.xlane.xlu0 %514
      %v516 = vrcp.pop %v515
      %v517 = vmul.f32 %v512, %v516
      %v518 = vpack.c.bf16 %v517, %v517
      %v520 = vsel %vm451, %v518, 0
      %vm522 = vcmask 1043456
      %v524 = vsel %vm522, %v450, 0
      %526 = vmatprep.subr.bf16.mxu0 0
      %527 = vmatpush1.bf16.msra.mxu0 0
      %528 = vmatprep.subr.bf16.mxu0 0
      %529 = vmatpush1.bf16.msra.mxu0 0
      %530 = vmatprep.subr.bf16.mxu0 0
      %531 = vmatpush1.bf16.msra.mxu0 0
      %532 = vmatprep.subr.bf16.mxu0 0
      %533 = vmatpush1.bf16.msra.mxu0 0
      %534 = vmatprep.subr.bf16.mxu0 0
      %535 = vmatpush1.bf16.msra.mxu0 0
      %536 = vmatprep.subr.bf16.mxu0 0
      %537 = vmatpush1.bf16.msra.mxu0 0
      %538 = vmatprep.subr.bf16.mxu0 0
      %539 = vmatpush1.bf16.msra.mxu0 0
      %540 = vmatprep.subr.bf16.mxu0 0
      %541 = vmatpush1.bf16.msra.mxu0 %v524
      %542 = vmatprep.subr.bf16.mxu0 0
      %543 = vmatpush2.bf16.msra.mxu0 0
      %544 = vmatprep.subr.bf16.mxu0 0
      %545 = vmatpush2.bf16.msra.mxu0 0
      %546 = vmatprep.subr.bf16.mxu0 0
      %547 = vmatpush2.bf16.msra.mxu0 0
      %548 = vmatprep.subr.bf16.mxu0 0
      %549 = vmatpush2.bf16.msra.mxu0 0
      %550 = vmatprep.subr.bf16.mxu0 0
      %551 = vmatpush2.bf16.msra.mxu0 0
      %552 = vmatprep.subr.bf16.mxu0 0
      %553 = vmatpush2.bf16.msra.mxu0 0
      %554 = vmatprep.subr.bf16.mxu0 0
      %555 = vmatpush2.bf16.msra.mxu0 0
      %556 = vmatprep.subr.bf16.mxu0 0
      %557 = vmatpush2.bf16.msra.mxu0 0
      %558 = vmatprep.mubr.bf16.mxu0 0
      %559 = vmatmul.mubr.bf16.gmra.mxu0 %v520
      %v560 = vpop.f32.mrf.mxu0
      %v561 = vadd.f32 0.0, %v560
      %v562 = vpop.f32.mrf.mxu0
      %v563 = vpop.f32.mrf.mxu0
      %v564 = vpop.f32.mrf.mxu0
      %565 = vdwg.mxu0
      %v566 = vpack.c.bf16 %v561, %v561
      %s567 = smul.addr %s25, 4
      %s568 = scalar_lea.vmem [#allocation2], %s567
      %vm569 = vcmask 60416
      %570 = vst.msk [vmem:[%s568] sm:$0xf] %vm569, %v566
      %p571 = scmp.eq.s32.totalorder %s25, 3
      // Predicated region
      $region57: #{transformer_forward.20} parent=55 // pred_check
        %p572 = pneg %p571
      $region58: #{transformer_forward.20} parent=55 // pred_check_branch
        %574 = sbr.rel (%p572) target = $region60
      $region59: #{transformer_forward.20} parent=55 // pred_region
        %v575 = vld [vmem:[#allocation2] sm:$0xf]
        %s576 = scalar_lea.vmem [#allocation2], 4
        %v577 = vld [vmem:[%s576] sm:$0xf]
        %s578 = scalar_lea.vmem [#allocation2], 8
        %v579 = vld [vmem:[%s578] sm:$0xf]
        %s580 = scalar_lea.vmem [#allocation2], 12
        %v581 = vld [vmem:[%s580] sm:$0xf]
        %v583 = vunpack.c.l.b16 %v577
        %v584 = vpack.c.b16 %v583, %v583
        %585 = vrot.lane.b32.xlu0 %v584, 8
        %v586 = vpop.permute.xlu0 %585
        %v588 = vunpack.c.l.b16 %v579
        %v589 = vpack.c.b16 %v588, %v588
        %590 = vrot.lane.b32.xlu0 %v589, 16
        %v591 = vpop.permute.xlu0 %590
        %v593 = vunpack.c.l.b16 %v581
        %v594 = vpack.c.b16 %v593, %v593
        %595 = vrot.lane.b32.xlu0 %v594, 24
        %v596 = vpop.permute.xlu0 %595
        %v599 = vsel %vm451, %v575, %v586
        %vm600 = vcmask 130048
        %v602 = vsel %vm600, %v599, %v591
        %vm603 = vcmask 195584
        %v605 = vsel %vm603, %v602, %v596
        %v606 = vld [vmem:[%s5] sm:$0xf]
        %v607 = vld [vmem:[%s5 + $0x4] sm:$0xf]
        %v608 = vld [vmem:[%s5 + $0x8] sm:$0xf]
        %v609 = vld [vmem:[%s5 + $0xc] sm:$0xf]
        %v610 = vld [vmem:[%s6] sm:$0x1]
        %v612 = vlaneseq
        %v613 = vshrl.u32 %v612, 7
        %v614 = vsub.s32 0, %v613
        %v615 = vrot.slane %v610, %v614
        %v621 = vunpack.c.l.b16 %v606
        %v622 = vunpack.c.l.b16 %v607
        %v623 = vunpack.c.l.b16 %v608
        %v624 = vunpack.c.l.b16 %v609
        %v625 = vpack.c.b16 %v622, %v621
        %v626 = vpack.c.b16 %v624, %v623
        %vm629 = vcmask 261120
        %v630 = vsel %vm629, %v605, 0
        %632 = vmatprep.subr.bf16.mxu0 0
        %633 = vmatpush1.bf16.msra.mxu0 0
        %634 = vmatprep.subr.bf16.mxu0 0
        %635 = vmatpush1.bf16.msra.mxu0 0
        %636 = vmatprep.subr.bf16.mxu0 0
        %637 = vmatpush1.bf16.msra.mxu0 0
        %638 = vmatprep.subr.bf16.mxu0 0
        %639 = vmatpush1.bf16.msra.mxu0 0
        %640 = vmatprep.subr.bf16.mxu0 0
        %641 = vmatpush1.bf16.msra.mxu0 0
        %642 = vmatprep.subr.bf16.mxu0 0
        %643 = vmatpush1.bf16.msra.mxu0 0
        %644 = vmatprep.subr.bf16.mxu0 0
        %645 = vmatpush1.bf16.msra.mxu0 %v626
        %646 = vmatprep.subr.bf16.mxu0 0
        %647 = vmatpush1.bf16.msra.mxu0 %v625
        %648 = vmatprep.subr.bf16.mxu0 0
        %649 = vmatpush2.bf16.msra.mxu0 0
        %650 = vmatprep.subr.bf16.mxu0 0
        %651 = vmatpush2.bf16.msra.mxu0 0
        %652 = vmatprep.subr.bf16.mxu0 0
        %653 = vmatpush2.bf16.msra.mxu0 0
        %654 = vmatprep.subr.bf16.mxu0 0
        %655 = vmatpush2.bf16.msra.mxu0 0
        %656 = vmatprep.subr.bf16.mxu0 0
        %657 = vmatpush2.bf16.msra.mxu0 0
        %658 = vmatprep.subr.bf16.mxu0 0
        %659 = vmatpush2.bf16.msra.mxu0 0
        %660 = vmatprep.subr.bf16.mxu0 0
        %661 = vmatpush2.bf16.msra.mxu0 0
        %662 = vmatprep.subr.bf16.mxu0 0
        %663 = vmatpush2.bf16.msra.mxu0 0
        %664 = vmatprep.mubr.bf16.mxu0 0
        %665 = vmatmul.mubr.bf16.gmra.mxu0 %v630
        %v666 = vpop.f32.mrf.mxu0
        %v667 = vadd.f32 %v615, %v666
        %v668 = vpop.f32.mrf.mxu0
        %v669 = vpop.f32.mrf.mxu0
        %v670 = vpop.f32.mrf.mxu0
        %671 = vdwg.mxu0
        %v672 = vld [vmem:[%s442] sm:$0xf]
        %v673 = vunpack.c.l.bf16 %v672
        %v674 = vadd.f32 %v667, %v673
        %v675 = vsel %vm629, %v674, 0.0
        %676 = vadd.xlane.f32.xlu0 %v675
        %v677 = vpop.xlane.xlu0 %676
        %v678 = vrcp.pop 32.0
        %v679 = vmul.f32 %v677, %v678
        %v680 = vsub.f32 %v674, %v679
        %v681 = vmul.f32 %v680, %v680
        %v682 = vsel %vm629, %v681, 0.0
        %683 = vadd.xlane.f32.xlu0 %v682
        %v684 = vpop.xlane.xlu0 %683
        %v685 = vmul.f32 %v684, %v678
        %v686 = vadd.f32 %v685, 1e-05
        %v687 = vrsqrt.pop %v686
        %v688 = vmul.f32 %v680, %v687
        %v689 = vld [vmem:[%s7] sm:$0x1]
        %v691 = vlaneseq
        %v692 = vshrl.u32 %v691, 7
        %v693 = vsub.s32 0, %v692
        %v694 = vrot.slane %v689, %v693
        %v696 = vmul.f32 %v688, %v694
        %v697 = vld [vmem:[%s8] sm:$0x1]
        %v699 = vlaneseq
        %v700 = vshrl.u32 %v699, 7
        %v701 = vsub.s32 0, %v700
        %v702 = vrot.slane %v697, %v701
        %v704 = vadd.f32 %v696, %v702
        %v705 = vpack.c.bf16 %v704, %v704
        %vm706 = vcmask 257024
        %707 = vst.msk [vmem:[%s446] sm:$0xf] %vm706, %v705
      $region60: #{transformer_forward.20} parent=55 // pred_fallthru
        _
      %p708 = scmp.lt.s32.totalorder %s24, 1
      %s709 = scalar_select %p708, %s24, 1
      %s710 = smul.addr %s709, 4
      %s711 = scalar_lea.vmem %s9, %s710
      // Predicated region
      $region61: #{transformer_forward.20} parent=55 // pred_check
        %p712 = pneg %p270
      $region62: #{transformer_forward.20} parent=55 // pred_check_branch
        %714 = sbr.rel (%p712) target = $region64
      $region63: #{transformer_forward.20} parent=55 // pred_region
        _
      $region64: #{transformer_forward.20} parent=55 // pred_fallthru
        _
    $region56: #{transformer_forward.20} parent=5 // pred_fallthru
      _
    %p715 = scmp.le.s32.totalorder 2, %s15
    // Predicated region
    $region65: #{transformer_forward.20} parent=5 // pred_check
      %p716 = pneg %p715
    $region66: #{transformer_forward.20} parent=5 // pred_check_branch
      %718 = sbr.rel (%p716) target = $region68
    $region67: #{transformer_forward.20} parent=5 // pred_region
      %s719 = ssub.s32 %s15, 2
      // Predicated region
      $region69: #{transformer_forward.20} parent=67 // pred_check
        %p720 = pneg %p276
      $region70: #{transformer_forward.20} parent=67 // pred_check_branch
        %722 = sbr.rel (%p720) target = $region72
      $region71: #{transformer_forward.20} parent=67 // pred_region
        %p723 = scmp.lt.s32.totalorder %s26, 1
        %s724 = scalar_select %p723, %s26, 1
        %s725 = smul.addr %s724, 4
        %s726 = scalar_lea.vmem %s9, %s725
      $region72: #{transformer_forward.20} parent=67 // pred_fallthru
        _
    $region68: #{transformer_forward.20} parent=5 // pred_fallthru
      _
  $region6: #{transformer_forward.20} parent=0 // loop_footer
    %s19 = sadd.s32 1, %s15
  $region7: #{transformer_forward.20} parent=0 // loop_footer_branch
    %14 = sbr.rel target = $region3
  $region8: #{transformer_forward.20} parent=0 // loop_exit
    _

// kernel: transformer_forward.28
$region0: #{transformer_forward.28}
  #allocation0 [shape = 'u32[]', space=smem, size = 0x4, offset = 0x4, fixed_abs, tag = 'smem constant byte address 0x4 - core index']
  #allocation1 [shape = 'u32[144,128]{1,0:T(1,128)}', space=vmem, size = 0x12000, scoped, tag = 'internal scratch']
  #allocation2 [shape = 'f32[16,64]{1,0:T(8,128)}', space=vmem, size = 0x2000, scoped, tag = 'scratch operand']
  %s0 = inlined_call_operand.vmem [shape: bf16[16,32], index: 0, kind: input, shape index: {}]
  %s1 = inlined_call_operand.vmem [shape: bf16[32,64], index: 1, kind: input, shape index: {}]
  %s2 = inlined_call_operand.vmem [shape: f32[1,64], index: 2, kind: input, shape index: {}]
  %s3 = inlined_call_operand.vmem [shape: bf16[16,64], index: 3, kind: output, shape index: {}]
  %s4 = sld [smem:[#allocation0]]
  $region30: #{transformer_forward.28} parent=0
    _
  %s6 = ssub.s32 1, %s4
  %s7 = scalar_select 0, %s6, %s4
  // Predicated region
  $region2: #{transformer_forward.28} parent=0 // pred_check
    _
  $region3: #{transformer_forward.28} parent=0 // pred_check_branch
    %9 = sbr.rel (0) target = $region5
  $region4: #{transformer_forward.28} parent=0 // pred_region
    _
  $region5: #{transformer_forward.28} parent=0 // pred_fallthru
    _
  // Predicated region
  $region6: #{transformer_forward.28} parent=0 // pred_check
    _
  $region7: #{transformer_forward.28} parent=0 // pred_check_branch
    %11 = sbr.rel (0) target = $region9
  $region8: #{transformer_forward.28} parent=0 // pred_region
    _
  $region9: #{transformer_forward.28} parent=0 // pred_fallthru
    _
  // Predicated region
  $region10: #{transformer_forward.28} parent=0 // pred_check
    _
  $region11: #{transformer_forward.28} parent=0 // pred_check_branch
    %13 = sbr.rel (0) target = $region13
  $region12: #{transformer_forward.28} parent=0 // pred_region
    _
  $region13: #{transformer_forward.28} parent=0 // pred_fallthru
    _
  %p15 = scmp.eq.s32.totalorder 0, 0
  // Predicated region
  $region14: #{transformer_forward.28} parent=0 // pred_check
    %p16 = pneg %p15
  $region15: #{transformer_forward.28} parent=0 // pred_check_branch
    %18 = sbr.rel (%p16) target = $region17
  $region16: #{transformer_forward.28} parent=0 // pred_region
    %vm19 = vcmask 523264
    %20 = vst.msk [vmem:[#allocation2] sm:$0xff] %vm19, 0.0
    %21 = vst.msk [vmem:[#allocation2 + $0x8] sm:$0xff] %vm19, 0.0
  $region17: #{transformer_forward.28} parent=0 // pred_fallthru
    _
  %v22 = vld [vmem:[#allocation2] sm:$0xff]
  %v23 = vld [vmem:[#allocation2 + $0x8] sm:$0xff]
  %v24 = vld [vmem:[%s0] sm:$0xf]
  %v25 = vld [vmem:[%s0 + $0x4] sm:$0xf]
  %v26 = vld [vmem:[%s1] sm:$0xf]
  %v27 = vld [vmem:[%s1 + $0x4] sm:$0xf]
  %v28 = vld [vmem:[%s1 + $0x8] sm:$0xf]
  %v29 = vld [vmem:[%s1 + $0xc] sm:$0xf]
  %v32 = vunpack.c.l.b16 %v24
  %v33 = vunpack.c.l.b16 %v25
  %v34 = vpack.c.b16 %v33, %v32
  %v39 = vunpack.c.l.b16 %v26
  %v40 = vunpack.c.l.b16 %v27
  %v41 = vunpack.c.l.b16 %v28
  %v42 = vunpack.c.l.b16 %v29
  %v43 = vpack.c.b16 %v40, %v39
  %v44 = vpack.c.b16 %v42, %v41
  %vm47 = vcmask 261120
  %v49 = vsel %vm47, %v34, 0
  %51 = vmatprep.subr.bf16.mxu0 0
  %52 = vmatpush1.bf16.msra.mxu0 0
  %53 = vmatprep.subr.bf16.mxu0 0
  %54 = vmatpush1.bf16.msra.mxu0 0
  %55 = vmatprep.subr.bf16.mxu0 0
  %56 = vmatpush1.bf16.msra.mxu0 0
  %57 = vmatprep.subr.bf16.mxu0 0
  %58 = vmatpush1.bf16.msra.mxu0 0
  %59 = vmatprep.subr.bf16.mxu0 0
  %60 = vmatpush1.bf16.msra.mxu0 0
  %61 = vmatprep.subr.bf16.mxu0 0
  %62 = vmatpush1.bf16.msra.mxu0 0
  %63 = vmatprep.subr.bf16.mxu0 0
  %64 = vmatpush1.bf16.msra.mxu0 %v44
  %65 = vmatprep.subr.bf16.mxu0 0
  %66 = vmatpush1.bf16.msra.mxu0 %v43
  %67 = vmatprep.subr.bf16.mxu0 0
  %68 = vmatpush2.bf16.msra.mxu0 0
  %69 = vmatprep.subr.bf16.mxu0 0
  %70 = vmatpush2.bf16.msra.mxu0 0
  %71 = vmatprep.subr.bf16.mxu0 0
  %72 = vmatpush2.bf16.msra.mxu0 0
  %73 = vmatprep.subr.bf16.mxu0 0
  %74 = vmatpush2.bf16.msra.mxu0 0
  %75 = vmatprep.subr.bf16.mxu0 0
  %76 = vmatpush2.bf16.msra.mxu0 0
  %77 = vmatprep.subr.bf16.mxu0 0
  %78 = vmatpush2.bf16.msra.mxu0 0
  %79 = vmatprep.subr.bf16.mxu0 0
  %80 = vmatpush2.bf16.msra.mxu0 0
  %81 = vmatprep.subr.bf16.mxu0 0
  %82 = vmatpush2.bf16.msra.mxu0 0
  %83 = vmatprep.mubr.bf16.mxu0 0
  %84 = vmatmul.mubr.bf16.gmra.mxu0 %v49
  %v85 = vpop.f32.mrf.mxu0
  %v86 = vadd.f32 0.0, %v85
  %v87 = vpop.f32.mrf.mxu0
  %v88 = vpop.f32.mrf.mxu0
  %v89 = vadd.f32 0.0, %v88
  %v90 = vpop.f32.mrf.mxu0
  %91 = vdwg.mxu0
  %v92 = vadd.f32 %v22, %v86
  %v93 = vadd.f32 %v23, %v89
  %vm94 = vcmask 523264
  %95 = vst.msk [vmem:[#allocation2] sm:$0xff] %vm94, %v92
  %96 = vst.msk [vmem:[#allocation2 + $0x8] sm:$0xff] %vm94, %v93
  // Predicated region
  $region18: #{transformer_forward.28} parent=0 // pred_check
    %p97 = pneg %p15
  $region19: #{transformer_forward.28} parent=0 // pred_check_branch
    %99 = sbr.rel (%p97) target = $region21
  $region20: #{transformer_forward.28} parent=0 // pred_region
    %v100 = vld [vmem:[#allocation2] sm:$0xff]
    %v101 = vld [vmem:[#allocation2 + $0x8] sm:$0xff]
    %v102 = vld [vmem:[%s2] sm:$0x1]
    %v104 = vlaneseq
    %v105 = vshrl.u32 %v104, 7
    %v106 = vsub.s32 0, %v105
    %v107 = vrot.slane %v102, %v106
    %v109 = vadd.f32 %v100, %v107
    %v110 = vadd.f32 %v101, %v107
    %v111 = vpack.c.bf16 %v110, %v109
    %v113 = vunpack.c.l.b16 %v111
    %v114 = vunpack.c.h.b16 %v111
    %v115 = vpack.c.b16 %v113, %v113
    %v116 = vpack.c.b16 %v114, %v114
    %vm119 = vcmask 519168
    %120 = vst.msk [vmem:[%s3] sm:$0xf] %vm119, %v115
    %121 = vst.msk [vmem:[%s3 + $0x4] sm:$0xf] %vm119, %v116
  $region21: #{transformer_forward.28} parent=0 // pred_fallthru
    _
  // Predicated region
  $region22: #{transformer_forward.28} parent=0 // pred_check
    _
  $region23: #{transformer_forward.28} parent=0 // pred_check_branch
    %123 = sbr.rel (0) target = $region25
  $region24: #{transformer_forward.28} parent=0 // pred_region
    _
  $region25: #{transformer_forward.28} parent=0 // pred_fallthru
    _
  // Predicated region
  $region26: #{transformer_forward.28} parent=0 // pred_check
    _
  $region27: #{transformer_forward.28} parent=0 // pred_check_branch
    %125 = sbr.rel (0) target = $region29
  $region28: #{transformer_forward.28} parent=0 // pred_region
    _
  $region29: #{transformer_forward.28} parent=0 // pred_fallthru
    _

// kernel: transformer_forward.21
$region0: #{transformer_forward.21}
  #allocation0 [shape = 'u32[]', space=smem, size = 0x4, offset = 0x4, fixed_abs, tag = 'smem constant byte address 0x4 - core index']
  #allocation1 [shape = 'u32[144,128]{1,0:T(1,128)}', space=vmem, size = 0x12000, scoped, tag = 'internal scratch']
  #allocation2 [shape = 'f32[16,32]{1,0:T(8,128)}', space=vmem, size = 0x2000, scoped, tag = 'scratch operand']
  %s0 = inlined_call_operand.vmem [shape: bf16[16,32], index: 0, kind: input, shape index: {}]
  %s1 = inlined_call_operand.vmem [shape: bf16[32,64], index: 1, kind: input, shape index: {}]
  %s2 = inlined_call_operand.vmem [shape: f32[1,64], index: 2, kind: input, shape index: {}]
  %s3 = inlined_call_operand.vmem [shape: bf16[64,32], index: 3, kind: input, shape index: {}]
  %s4 = inlined_call_operand.vmem [shape: f32[1,32], index: 4, kind: input, shape index: {}]
  %s5 = inlined_call_operand.vmem [shape: f32[1,32], index: 5, kind: input, shape index: {}]
  %s6 = inlined_call_operand.vmem [shape: f32[1,32], index: 6, kind: input, shape index: {}]
  %s7 = inlined_call_operand.vmem [shape: bf16[16,32], index: 7, kind: output, shape index: {}]
  %s8 = sld [smem:[#allocation0]]
  $region46: #{transformer_forward.21} parent=0
    _
  %s10 = ssub.s32 1, %s8
  %s11 = scalar_select 0, %s10, %s8
  // Predicated region
  $region2: #{transformer_forward.21} parent=0 // pred_check
    _
  $region3: #{transformer_forward.21} parent=0 // pred_check_branch
    %13 = sbr.rel (0) target = $region5
  $region4: #{transformer_forward.21} parent=0 // pred_region
    _
  $region5: #{transformer_forward.21} parent=0 // pred_fallthru
    _
  // Predicated region
  $region6: #{transformer_forward.21} parent=0 // pred_check
    _
  $region7: #{transformer_forward.21} parent=0 // pred_check_branch
    %15 = sbr.rel (0) target = $region9
  $region8: #{transformer_forward.21} parent=0 // pred_region
    _
  $region9: #{transformer_forward.21} parent=0 // pred_fallthru
    _
  // Predicated region
  $region10: #{transformer_forward.21} parent=0 // pred_check
    _
  $region11: #{transformer_forward.21} parent=0 // pred_check_branch
    %17 = sbr.rel (0) target = $region13
  $region12: #{transformer_forward.21} parent=0 // pred_region
    _
  $region13: #{transformer_forward.21} parent=0 // pred_fallthru
    _
  // Predicated region
  $region14: #{transformer_forward.21} parent=0 // pred_check
    _
  $region15: #{transformer_forward.21} parent=0 // pred_check_branch
    %19 = sbr.rel (0) target = $region17
  $region16: #{transformer_forward.21} parent=0 // pred_region
    _
  $region17: #{transformer_forward.21} parent=0 // pred_fallthru
    _
  // Predicated region
  $region18: #{transformer_forward.21} parent=0 // pred_check
    _
  $region19: #{transformer_forward.21} parent=0 // pred_check_branch
    %21 = sbr.rel (0) target = $region21
  $region20: #{transformer_forward.21} parent=0 // pred_region
    _
  $region21: #{transformer_forward.21} parent=0 // pred_fallthru
    _
  // Predicated region
  $region22: #{transformer_forward.21} parent=0 // pred_check
    _
  $region23: #{transformer_forward.21} parent=0 // pred_check_branch
    %23 = sbr.rel (0) target = $region25
  $region24: #{transformer_forward.21} parent=0 // pred_region
    _
  $region25: #{transformer_forward.21} parent=0 // pred_fallthru
    _
  // Predicated region
  $region26: #{transformer_forward.21} parent=0 // pred_check
    _
  $region27: #{transformer_forward.21} parent=0 // pred_check_branch
    %25 = sbr.rel (0) target = $region29
  $region28: #{transformer_forward.21} parent=0 // pred_region
    _
  $region29: #{transformer_forward.21} parent=0 // pred_fallthru
    _
  %p27 = scmp.eq.s32.totalorder 0, 0
  // Predicated region
  $region30: #{transformer_forward.21} parent=0 // pred_check
    %p28 = pneg %p27
  $region31: #{transformer_forward.21} parent=0 // pred_check_branch
    %30 = sbr.rel (%p28) target = $region33
  $region32: #{transformer_forward.21} parent=0 // pred_region
    %vm31 = vcmask 261120
    %32 = vst.msk [vmem:[#allocation2] sm:$0xff] %vm31, 0.0
    %33 = vst.msk [vmem:[#allocation2 + $0x8] sm:$0xff] %vm31, 0.0
  $region33: #{transformer_forward.21} parent=0 // pred_fallthru
    _
  %v34 = vld [vmem:[%s0] sm:$0xf]
  %v35 = vld [vmem:[%s0 + $0x4] sm:$0xf]
  %v36 = vld [vmem:[%s1] sm:$0xf]
  %v37 = vld [vmem:[%s1 + $0x4] sm:$0xf]
  %v38 = vld [vmem:[%s1 + $0x8] sm:$0xf]
  %v39 = vld [vmem:[%s1 + $0xc] sm:$0xf]
  %v40 = vld [vmem:[%s2] sm:$0x1]
  %v42 = vlaneseq
  %v43 = vshrl.u32 %v42, 7
  %v44 = vsub.s32 0, %v43
  %v45 = vrot.slane %v40, %v44
  %v49 = vunpack.c.l.b16 %v34
  %v50 = vunpack.c.l.b16 %v35
  %v51 = vpack.c.b16 %v50, %v49
  %v56 = vunpack.c.l.b16 %v36
  %v57 = vunpack.c.l.b16 %v37
  %v58 = vunpack.c.l.b16 %v38
  %v59 = vunpack.c.l.b16 %v39
  %v60 = vpack.c.b16 %v57, %v56
  %v61 = vpack.c.b16 %v59, %v58
  %vm64 = vcmask 261120
  %v66 = vsel %vm64, %v51, 0
  %68 = vmatprep.subr.bf16.mxu0 0
  %69 = vmatpush1.bf16.msra.mxu0 0
  %70 = vmatprep.subr.bf16.mxu0 0
  %71 = vmatpush1.bf16.msra.mxu0 0
  %72 = vmatprep.subr.bf16.mxu0 0
  %73 = vmatpush1.bf16.msra.mxu0 0
  %74 = vmatprep.subr.bf16.mxu0 0
  %75 = vmatpush1.bf16.msra.mxu0 0
  %76 = vmatprep.subr.bf16.mxu0 0
  %77 = vmatpush1.bf16.msra.mxu0 0
  %78 = vmatprep.subr.bf16.mxu0 0
  %79 = vmatpush1.bf16.msra.mxu0 0
  %80 = vmatprep.subr.bf16.mxu0 0
  %81 = vmatpush1.bf16.msra.mxu0 %v61
  %82 = vmatprep.subr.bf16.mxu0 0
  %83 = vmatpush1.bf16.msra.mxu0 %v60
  %84 = vmatprep.subr.bf16.mxu0 0
  %85 = vmatpush2.bf16.msra.mxu0 0
  %86 = vmatprep.subr.bf16.mxu0 0
  %87 = vmatpush2.bf16.msra.mxu0 0
  %88 = vmatprep.subr.bf16.mxu0 0
  %89 = vmatpush2.bf16.msra.mxu0 0
  %90 = vmatprep.subr.bf16.mxu0 0
  %91 = vmatpush2.bf16.msra.mxu0 0
  %92 = vmatprep.subr.bf16.mxu0 0
  %93 = vmatpush2.bf16.msra.mxu0 0
  %94 = vmatprep.subr.bf16.mxu0 0
  %95 = vmatpush2.bf16.msra.mxu0 0
  %96 = vmatprep.subr.bf16.mxu0 0
  %97 = vmatpush2.bf16.msra.mxu0 0
  %98 = vmatprep.subr.bf16.mxu0 0
  %99 = vmatpush2.bf16.msra.mxu0 0
  %100 = vmatprep.mubr.bf16.mxu0 0
  %101 = vmatmul.mubr.bf16.gmra.mxu0 %v66
  %v102 = vpop.f32.mrf.mxu0
  %v103 = vadd.f32 %v45, %v102
  %v104 = vpop.f32.mrf.mxu0
  %v105 = vpop.f32.mrf.mxu0
  %v106 = vadd.f32 %v45, %v105
  %v107 = vpop.f32.mrf.mxu0
  %108 = vdwg.mxu0
  %v109 = vmax.f32 %v103, 0.0
  %v110 = vmax.f32 %v106, 0.0
  %v111 = vld [vmem:[#allocation2] sm:$0xff]
  %v112 = vld [vmem:[#allocation2 + $0x8] sm:$0xff]
  %v113 = vpack.c.bf16 %v110, %v109
  %v114 = vld [vmem:[%s3] sm:$0xf]
  %v115 = vld [vmem:[%s3 + $0x4] sm:$0xf]
  %v116 = vld [vmem:[%s3 + $0x8] sm:$0xf]
  %v117 = vld [vmem:[%s3 + $0xc] sm:$0xf]
  %v118 = vld [vmem:[%s3 + $0x10] sm:$0xf]
  %v119 = vld [vmem:[%s3 + $0x14] sm:$0xf]
  %v120 = vld [vmem:[%s3 + $0x18] sm:$0xf]
  %v121 = vld [vmem:[%s3 + $0x1c] sm:$0xf]
  %v130 = vunpack.c.l.b16 %v114
  %v131 = vunpack.c.l.b16 %v115
  %v132 = vunpack.c.l.b16 %v116
  %v133 = vunpack.c.l.b16 %v117
  %v134 = vunpack.c.l.b16 %v118
  %v135 = vunpack.c.l.b16 %v119
  %v136 = vunpack.c.l.b16 %v120
  %v137 = vunpack.c.l.b16 %v121
  %v138 = vpack.c.b16 %v131, %v130
  %v139 = vpack.c.b16 %v133, %v132
  %v140 = vpack.c.b16 %v135, %v134
  %v141 = vpack.c.b16 %v137, %v136
  %vm146 = vcmask 523264
  %v148 = vsel %vm146, %v113, 0
  %150 = vmatprep.subr.bf16.mxu0 0
  %151 = vmatpush1.bf16.msra.mxu0 0
  %152 = vmatprep.subr.bf16.mxu0 0
  %153 = vmatpush1.bf16.msra.mxu0 0
  %154 = vmatprep.subr.bf16.mxu0 0
  %155 = vmatpush1.bf16.msra.mxu0 0
  %156 = vmatprep.subr.bf16.mxu0 0
  %157 = vmatpush1.bf16.msra.mxu0 0
  %158 = vmatprep.subr.bf16.mxu0 0
  %159 = vmatpush1.bf16.msra.mxu0 %v141
  %160 = vmatprep.subr.bf16.mxu0 0
  %161 = vmatpush1.bf16.msra.mxu0 %v140
  %162 = vmatprep.subr.bf16.mxu0 0
  %163 = vmatpush1.bf16.msra.mxu0 %v139
  %164 = vmatprep.subr.bf16.mxu0 0
  %165 = vmatpush1.bf16.msra.mxu0 %v138
  %166 = vmatprep.subr.bf16.mxu0 0
  %167 = vmatpush2.bf16.msra.mxu0 0
  %168 = vmatprep.subr.bf16.mxu0 0
  %169 = vmatpush2.bf16.msra.mxu0 0
  %170 = vmatprep.subr.bf16.mxu0 0
  %171 = vmatpush2.bf16.msra.mxu0 0
  %172 = vmatprep.subr.bf16.mxu0 0
  %173 = vmatpush2.bf16.msra.mxu0 0
  %174 = vmatprep.subr.bf16.mxu0 0
  %175 = vmatpush2.bf16.msra.mxu0 0
  %176 = vmatprep.subr.bf16.mxu0 0
  %177 = vmatpush2.bf16.msra.mxu0 0
  %178 = vmatprep.subr.bf16.mxu0 0
  %179 = vmatpush2.bf16.msra.mxu0 0
  %180 = vmatprep.subr.bf16.mxu0 0
  %181 = vmatpush2.bf16.msra.mxu0 0
  %182 = vmatprep.mubr.bf16.mxu0 0
  %183 = vmatmul.mubr.bf16.gmra.mxu0 %v148
  %v184 = vpop.f32.mrf.mxu0
  %v185 = vadd.f32 0.0, %v184
  %v186 = vpop.f32.mrf.mxu0
  %v187 = vpop.f32.mrf.mxu0
  %v188 = vadd.f32 0.0, %v187
  %v189 = vpop.f32.mrf.mxu0
  %190 = vdwg.mxu0
  %v191 = vadd.f32 %v111, %v185
  %v192 = vadd.f32 %v112, %v188
  %193 = vst.msk [vmem:[#allocation2] sm:$0xff] %vm64, %v191
  %194 = vst.msk [vmem:[#allocation2 + $0x8] sm:$0xff] %vm64, %v192
  // Predicated region
  $region34: #{transformer_forward.21} parent=0 // pred_check
    %p195 = pneg %p27
  $region35: #{transformer_forward.21} parent=0 // pred_check_branch
    %197 = sbr.rel (%p195) target = $region37
  $region36: #{transformer_forward.21} parent=0 // pred_region
    %v198 = vld [vmem:[#allocation2] sm:$0xff]
    %v199 = vld [vmem:[#allocation2 + $0x8] sm:$0xff]
    %v200 = vld [vmem:[%s4] sm:$0x1]
    %v202 = vlaneseq
    %v203 = vshrl.u32 %v202, 7
    %v204 = vsub.s32 0, %v203
    %v205 = vrot.slane %v200, %v204
    %v207 = vadd.f32 %v198, %v205
    %v208 = vadd.f32 %v199, %v205
    %v209 = vld [vmem:[%s0] sm:$0xf]
    %v210 = vld [vmem:[%s0 + $0x4] sm:$0xf]
    %v211 = vunpack.c.l.bf16 %v209
    %v212 = vunpack.c.l.bf16 %v210
    %v213 = vadd.f32 %v207, %v211
    %v214 = vadd.f32 %v208, %v212
    %v215 = vsel %vm64, %v213, 0.0
    %216 = vadd.xlane.f32.xlu0 %v215
    %v217 = vpop.xlane.xlu0 %216
    %v218 = vsel %vm64, %v214, 0.0
    %219 = vadd.xlane.f32.xlu0 %v218
    %v220 = vpop.xlane.xlu0 %219
    %v221 = vrcp.pop 32.0
    %v222 = vmul.f32 %v217, %v221
    %v223 = vmul.f32 %v220, %v221
    %v224 = vsub.f32 %v213, %v222
    %v225 = vsub.f32 %v214, %v223
    %v226 = vmul.f32 %v224, %v224
    %v227 = vmul.f32 %v225, %v225
    %v228 = vsel %vm64, %v226, 0.0
    %229 = vadd.xlane.f32.xlu0 %v228
    %v230 = vpop.xlane.xlu0 %229
    %v231 = vsel %vm64, %v227, 0.0
    %232 = vadd.xlane.f32.xlu0 %v231
    %v233 = vpop.xlane.xlu0 %232
    %v234 = vmul.f32 %v230, %v221
    %v235 = vmul.f32 %v233, %v221
    %v236 = vadd.f32 %v234, 1e-05
    %v237 = vadd.f32 %v235, 1e-05
    %v238 = vrsqrt.pop %v236
    %v239 = vrsqrt.pop %v237
    %v240 = vmul.f32 %v224, %v238
    %v241 = vmul.f32 %v225, %v239
    %v242 = vld [vmem:[%s5] sm:$0x1]
    %v244 = vlaneseq
    %v245 = vshrl.u32 %v244, 7
    %v246 = vsub.s32 0, %v245
    %v247 = vrot.slane %v242, %v246
    %v249 = vmul.f32 %v240, %v247
    %v250 = vmul.f32 %v241, %v247
    %v251 = vld [vmem:[%s6] sm:$0x1]
    %v253 = vlaneseq
    %v254 = vshrl.u32 %v253, 7
    %v255 = vsub.s32 0, %v254
    %v256 = vrot.slane %v251, %v255
    %v258 = vadd.f32 %v249, %v256
    %v259 = vadd.f32 %v250, %v256
    %v260 = vpack.c.bf16 %v259, %v258
    %v262 = vunpack.c.l.b16 %v260
    %v263 = vunpack.c.h.b16 %v260
    %v264 = vpack.c.b16 %v262, %v262
    %v265 = vpack.c.b16 %v263, %v263
    %vm268 = vcmask 257024
    %269 = vst.msk [vmem:[%s7] sm:$0xf] %vm268, %v264
    %270 = vst.msk [vmem:[%s7 + $0x4] sm:$0xf] %vm268, %v265
  $region37: #{transformer_forward.21} parent=0 // pred_fallthru
    _
  // Predicated region
  $region38: #{transformer_forward.21} parent=0 // pred_check
    _
  $region39: #{transformer_forward.21} parent=0 // pred_check_branch
    %272 = sbr.rel (0) target = $region41
  $region40: #{transformer_forward.21} parent=0 // pred_region
    _
  $region41: #{transformer_forward.21} parent=0 // pred_fallthru
    _
  // Predicated region
  $region42: #{transformer_forward.21} parent=0 // pred_check
    _
  $region43: #{transformer_forward.21} parent=0 // pred_check_branch
    %274 = sbr.rel (0) target = $region45
  $region44: #{transformer_forward.21} parent=0 // pred_region
    _
  $region45: #{transformer_forward.21} parent=0 // pred_fallthru
    _

// kernel: transformer_forward.37
$region0: #{transformer_forward.37}
  #allocation0 [shape = 'u32[]', space=smem, size = 0x4, offset = 0x4, fixed_abs, tag = 'smem constant byte address 0x4 - core index']
  #allocation1 [shape = 'u32[144,128]{1,0:T(1,128)}', space=vmem, size = 0x12000, scoped, tag = 'internal scratch']
  %s0 = inlined_call_operand.vmem [shape: bf16[16,32], index: 0, kind: input, shape index: {}]
  %s1 = inlined_call_operand.vmem [shape: bf16[32,128], index: 1, kind: input, shape index: {}]
  %s2 = inlined_call_operand.vmem [shape: f32[1,128], index: 2, kind: input, shape index: {}]
  %s3 = inlined_call_operand.hbm [shape: f32[16,128], index: 3, kind: output, shape index: {}]
  %s4 = sld [smem:[#allocation0]]
  $region30: #{transformer_forward.37} parent=0
    _
  %s6 = ssub.s32 1, %s4
  %s7 = scalar_select 0, %s6, %s4
  $region1: #{transformer_forward.37} parent=0
    #allocation2 [shape = 'u8[8192]{0}', space=vmem, size = 0x2000, scoped, tag = 'output window, operand 0, single buffered']
    #allocation3 [shape = 's32[1]{0}', space=sflag, size = 0x4, scoped, tag = 'scoped memory for transformer_forward.37']
    %8 = vsyncpa [#allocation3], 0
    // Predicated region
    $region2: #{transformer_forward.37} parent=1 // pred_check
      _
    $region3: #{transformer_forward.37} parent=1 // pred_check_branch
      %10 = sbr.rel (0) target = $region5
    $region4: #{transformer_forward.37} parent=1 // pred_region
      _
    $region5: #{transformer_forward.37} parent=1 // pred_fallthru
      _
    // Predicated region
    $region6: #{transformer_forward.37} parent=1 // pred_check
      _
    $region7: #{transformer_forward.37} parent=1 // pred_check_branch
      %12 = sbr.rel (0) target = $region9
    $region8: #{transformer_forward.37} parent=1 // pred_region
      _
    $region9: #{transformer_forward.37} parent=1 // pred_fallthru
      _
    // Predicated region
    $region10: #{transformer_forward.37} parent=1 // pred_check
      _
    $region11: #{transformer_forward.37} parent=1 // pred_check_branch
      %14 = sbr.rel (0) target = $region13
    $region12: #{transformer_forward.37} parent=1 // pred_region
      _
    $region13: #{transformer_forward.37} parent=1 // pred_fallthru
      _
    %p16 = scmp.eq.s32.totalorder 0, 0
    // Predicated region
    $region14: #{transformer_forward.37} parent=1 // pred_check
      %p17 = pneg %p16
    $region15: #{transformer_forward.37} parent=1 // pred_check_branch
      %19 = sbr.rel (%p17) target = $region17
    $region16: #{transformer_forward.37} parent=1 // pred_region
      %20 = vst [vmem:[#allocation2] sm:$0xff] 0.0
      %21 = vst [vmem:[#allocation2 + $0x8] sm:$0xff] 0.0
    $region17: #{transformer_forward.37} parent=1 // pred_fallthru
      _
    %v22 = vld [vmem:[#allocation2] sm:$0xff]
    %v23 = vld [vmem:[#allocation2 + $0x8] sm:$0xff]
    %v24 = vld [vmem:[%s0] sm:$0xf]
    %v25 = vld [vmem:[%s0 + $0x4] sm:$0xf]
    %v26 = vld [vmem:[%s1] sm:$0xf]
    %v27 = vld [vmem:[%s1 + $0x4] sm:$0xf]
    %v28 = vld [vmem:[%s1 + $0x8] sm:$0xf]
    %v29 = vld [vmem:[%s1 + $0xc] sm:$0xf]
    %v32 = vunpack.c.l.b16 %v24
    %v33 = vunpack.c.l.b16 %v25
    %v34 = vpack.c.b16 %v33, %v32
    %v39 = vunpack.c.l.b16 %v26
    %v40 = vunpack.c.l.b16 %v27
    %v41 = vunpack.c.l.b16 %v28
    %v42 = vunpack.c.l.b16 %v29
    %v43 = vpack.c.b16 %v40, %v39
    %v44 = vpack.c.b16 %v42, %v41
    %vm47 = vcmask 261120
    %v49 = vsel %vm47, %v34, 0
    %51 = vmatprep.subr.bf16.mxu0 0
    %52 = vmatpush1.bf16.msra.mxu0 0
    %53 = vmatprep.subr.bf16.mxu0 0
    %54 = vmatpush1.bf16.msra.mxu0 0
    %55 = vmatprep.subr.bf16.mxu0 0
    %56 = vmatpush1.bf16.msra.mxu0 0
    %57 = vmatprep.subr.bf16.mxu0 0
    %58 = vmatpush1.bf16.msra.mxu0 0
    %59 = vmatprep.subr.bf16.mxu0 0
    %60 = vmatpush1.bf16.msra.mxu0 0
    %61 = vmatprep.subr.bf16.mxu0 0
    %62 = vmatpush1.bf16.msra.mxu0 0
    %63 = vmatprep.subr.bf16.mxu0 0
    %64 = vmatpush1.bf16.msra.mxu0 %v44
    %65 = vmatprep.subr.bf16.mxu0 0
    %66 = vmatpush1.bf16.msra.mxu0 %v43
    %67 = vmatprep.subr.bf16.mxu0 0
    %68 = vmatpush2.bf16.msra.mxu0 0
    %69 = vmatprep.subr.bf16.mxu0 0
    %70 = vmatpush2.bf16.msra.mxu0 0
    %71 = vmatprep.subr.bf16.mxu0 0
    %72 = vmatpush2.bf16.msra.mxu0 0
    %73 = vmatprep.subr.bf16.mxu0 0
    %74 = vmatpush2.bf16.msra.mxu0 0
    %75 = vmatprep.subr.bf16.mxu0 0
    %76 = vmatpush2.bf16.msra.mxu0 0
    %77 = vmatprep.subr.bf16.mxu0 0
    %78 = vmatpush2.bf16.msra.mxu0 0
    %79 = vmatprep.subr.bf16.mxu0 0
    %80 = vmatpush2.bf16.msra.mxu0 0
    %81 = vmatprep.subr.bf16.mxu0 0
    %82 = vmatpush2.bf16.msra.mxu0 0
    %83 = vmatprep.mubr.bf16.mxu0 0
    %84 = vmatmul.mubr.bf16.gmra.mxu0 %v49
    %v85 = vpop.f32.mrf.mxu0
    %v86 = vadd.f32 0.0, %v85
    %v87 = vpop.f32.mrf.mxu0
    %v88 = vpop.f32.mrf.mxu0
    %v89 = vadd.f32 0.0, %v88
    %v90 = vpop.f32.mrf.mxu0
    %91 = vdwg.mxu0
    %v92 = vadd.f32 %v22, %v86
    %v93 = vadd.f32 %v23, %v89
    %94 = vst [vmem:[#allocation2] sm:$0xff] %v92
    %95 = vst [vmem:[#allocation2 + $0x8] sm:$0xff] %v93
    // Predicated region
    $region18: #{transformer_forward.37} parent=1 // pred_check
      %p96 = pneg %p16
    $region19: #{transformer_forward.37} parent=1 // pred_check_branch
      %98 = sbr.rel (%p96) target = $region21
    $region20: #{transformer_forward.37} parent=1 // pred_region
      %v99 = vld [vmem:[#allocation2] sm:$0xff]
      %v100 = vld [vmem:[#allocation2 + $0x8] sm:$0xff]
      %v101 = vld [vmem:[%s2] sm:$0x1]
      %v103 = vlaneseq
      %v104 = vshrl.u32 %v103, 7
      %v105 = vsub.s32 0, %v104
      %v106 = vrot.slane %v101, %v105
      %v108 = vadd.f32 %v99, %v106
      %v109 = vadd.f32 %v100, %v106
      %110 = vst [vmem:[#allocation2] sm:$0xff] %v108
      %111 = vst [vmem:[#allocation2 + $0x8] sm:$0xff] %v109
    $region21: #{transformer_forward.37} parent=1 // pred_fallthru
      _
    // Predicated region
    $region22: #{transformer_forward.37} parent=1 // pred_check
      _
    $region23: #{transformer_forward.37} parent=1 // pred_check_branch
      %113 = sbr.rel (0) target = $region25
    $region24: #{transformer_forward.37} parent=1 // pred_region
      %s115 = ssub.s32 256, 256
      %116 = vsyncadd [#allocation3], %s115
      %s117 = sshll.u32 [#allocation2], 4
      %s118 = int_to_ptr.vmem [resolvable:$true] %s117
      %123 = dma.vmem_to_hbm [thread:$0]  %s118, 256, %s3, [#allocation3], 128, 128, 8
    $region25: #{transformer_forward.37} parent=1 // pred_fallthru
      _
    // Predicated region
    $region26: #{transformer_forward.37} parent=1 // pred_check
      _
    $region27: #{transformer_forward.37} parent=1 // pred_check_branch
      %125 = sbr.rel (0) target = $region29
    $region28: #{transformer_forward.37} parent=1 // pred_region
      %126 = dma.done [#allocation3], 256
    $region29: #{transformer_forward.37} parent=1 // pred_fallthru
      _
    %127 = vsyncpa [#allocation3], 1

</llo_original>
